<compile_context>
chip_gen: v7x
topology: tpu7x:2x2x1
jax: 0.10.0
libtpu: 0.0.40
codegen_flags: <defaults>
</compile_context>

<pallas_src>
import math
import jax
import jax.numpy as jnp
from jax import lax
from jax.experimental import pallas as pl
from jax.experimental.pallas import tpu as pltpu


def make_divisible(x, divisor=8):
    return math.ceil(x / divisor) * divisor


def _rep_spec(arr):
    nd = arr.ndim
    return pl.BlockSpec(arr.shape, lambda i, nd=nd: (0,) * nd)


def _vmem_capacity_bytes():
    try:
        return int(pltpu.get_tpu_info().vmem_capacity_bytes)
    except Exception:
        return 64 << 20          # conservative (v7x per-TensorCore)


def _num_tensorcores():
    try:
        kind = jax.devices()[0].device_kind.lower()
        if "v7" in kind:
            return 2
    except Exception:
        pass
    return 1


def _pick_block_batch(B, HW, per_lane_bytes):
    budget = _vmem_capacity_bytes() // 3          # headroom: double buffers, weights
    lane_cap = max(HW, budget // max(per_lane_bytes, 1))
    lane_cap = min(lane_cap, 8192)                # diminishing returns past ~8k lanes

    def ok(bt):
        return ((bt * HW) % 128 == 0) or (bt == B)

    divisors = [d for d in range(1, B + 1) if B % d == 0 and ok(d)]
    if not divisors:
        return B
    fit = [d for d in divisors if d * HW <= lane_cap] or [divisors[0]]
    bt = max(fit)
    nc = _num_tensorcores()
    if nc > 1:                                    # v7x: keep >=2 (even) grid steps
        balanced = [d for d in fit if (B // d) >= nc and (B // d) % nc == 0]
        if balanced:
            bt = max(balanced)
    return bt


def prepare_wds_params(params):
    """One-time relayout of WDS weights into kernel format (hoisted out of the
    per-call path)."""
    f32, bf16 = jnp.float32, jnp.bfloat16
    C = params['wstem'].shape[2]
    d2 = int(params['dim2'])

    col = lambda b: jnp.asarray(b, f32).reshape(-1, 1)

    # fused stem (3x3) + v (1x1): per-dy (kh) blocks; rows =
    # [dx=-1 stem (C); dx=0 stem (C); dx=+1 stem (C); v (C, dy==0 block only)]
    ws = jnp.transpose(params['wstem'], (0, 1, 3, 2)).reshape(3, 3 * C, C)
    vrows = jnp.zeros((3, C, C), f32).at[1].set(params['wv'].reshape(C, C).T)
    w_stemv = jnp.concatenate([ws, vrows], axis=1).astype(bf16)      # (3, 4C, C)
    b_stemv = jnp.concatenate([jnp.zeros((C, 1), f32), col(params['bstem']),
                               jnp.zeros((C, 1), f32), col(params['bv'])], axis=0)

    # spatial_mix (7x7, 6->3): per-dy (kh) blocks; rows = 7 dx-blocks of 8
    # (cout padded 3->8), cols = cin padded 6->8
    wsm = jnp.transpose(params['wsm'], (0, 1, 3, 2))                 # (kh,kw,co,ci)
    wsm = jnp.pad(wsm, ((0, 0), (0, 0), (0, 5), (0, 2)))             # (7,7,8,8)
    w_sm = wsm.reshape(7, 56, 8).astype(bf16)
    b_sm = jnp.pad(col(params['bsm']), ((0, 5), (0, 0)))

    # depthwise 3x3 convs: per-tap (kh*3+kw) weight columns (f32, VPU path)
    w_d1 = jnp.transpose(params['wd1'], (0, 1, 3, 2)).reshape(9, d2, 1).astype(f32)
    w_d2 = jnp.transpose(params['wd2'], (0, 1, 3, 2)).reshape(9, d2, 1).astype(f32)

    w_proj = params['wproj'].reshape(C, C).T.astype(bf16)

    return dict(dim=C, dim2=d2,
                w_stemv=w_stemv, b_stemv=b_stemv,
                w_sm=w_sm, b_sm=b_sm,
                w_d1=w_d1, b_d1=col(params['bd1']),
                w_d2=w_d2, b_d2=col(params['bd2']),
                w_proj=w_proj, b_proj=col(params['bproj']))


def wds_pallas(x_nchw, prep, block_batch=None):
    """WDS forward.  x_nchw: (B, C, H, W) float32 (PyTorch layout)."""
    B, C, H, W = x_nchw.shape
    assert C == prep['dim']
    d2 = prep['dim2']
    c0 = C - d2
    HW = H * W
    N = B * HW
    f32 = jnp.float32

    # layout requirements (see perf-review correctness concerns)
    assert C % 8 == 0 and d2 % 8 == 0 and c0 % 8 == 0, \
        "channel splits must be sublane (8)-aligned"

    per_lane = 4 * (14 * C + 8 * d2 + 200)        # rough live f32 bytes per lane
    if block_batch is None:
        block_batch = _pick_block_batch(B, HW, per_lane)
    Bt = block_batch
    assert B % Bt == 0
    Nb = Bt * HW                                  # lanes per grid step
    assert (Nb % 128 == 0) or (Nb == N), "block lane count must be 128-aligned"

    # pixels on lanes, channels on sublanes
    xk = jnp.transpose(x_nchw, (1, 0, 2, 3)).reshape(C, N).astype(f32)

    # host-precomputed separable border masks (identical every grid step);
    # row k corresponds to dy/dx = k - 3.  They also zero the lanes pltpu.roll
    # wraps across image boundaries when Bt > 1.
    pix = jnp.arange(Nb, dtype=jnp.int32) % HW
    hh, ww = pix // W, pix % W
    row_mask = jnp.stack([(hh + d >= 0) & (hh + d < H) for d in range(-3, 4)]
                         + [jnp.zeros((Nb,), dtype=bool)]).astype(f32)   # (8, Nb)
    col_mask = jnp.stack([(ww + d >= 0) & (ww + d < W) for d in range(-3, 4)]
                         + [jnp.zeros((Nb,), dtype=bool)]).astype(f32)   # (8, Nb)

    def kernel(x_ref, rm_ref, cm_ref, wsv_ref, bsv_ref, wsm_ref, bsm_ref,
               wd1_ref, bd1_ref, wd2_ref, bd2_ref, wp_ref, bp_ref, out_ref):
        x = x_ref[...]                                             # (C, Nb) f32

        def sigmoid(t):
            return pl.reciprocal(1.0 + jnp.exp(-t), approx=True)

        def roll_lanes(a, off):
            # value of the pixel `off` lanes ahead lands on the current lane
            return pltpu.roll(a, shift=(-off) % Nb, axis=1)

        def rmask(dy):
            return rm_ref[dy + 3:dy + 4, :]

        def cmask(dx):
            return cm_ref[dx + 3:dx + 4, :]

        def row_shift(a, dy):
            # vertical shift by dy rows, zero-padded (image-boundary safe)
            if dy == 0:
                return a
            return rmask(dy) * roll_lanes(a, dy * W)

        # ---- fused stem (3x3) + v (1x1): 3 per-dy MXU dots, no im2col stack;
        #      dx = +/-1 contributions are lane-rolled AFTER the dot.
        sv = bsv_ref[...]                                          # (4C,1) bcast
        for k, dy in enumerate((-1, 0, 1)):
            xr = row_shift(x, dy).astype(jnp.bfloat16)
            sv = sv + jnp.dot(wsv_ref[k], xr,
                              preferred_element_type=jnp.float32)  # (4C, Nb)
        stem = (sv[C:2 * C]
                + cmask(-1) * roll_lanes(sv[0:C], -1)
                + cmask(1) * roll_lanes(sv[2 * C:3 * C], 1))       # (C, Nb)
        v = sv[3 * C:4 * C]                                        # (C, Nb)
        x0, x1 = stem[:c0], stem[c0:]

        # ---- chained depthwise 3x3 convs (groups = dim2), f32 elementwise ----
        def dwconv(inp, w_ref, b_ref):
            rows = [row_shift(inp, dy) for dy in (-1, 0, 1)]
            out = jnp.zeros((d2, Nb), jnp.float32) + b_ref[...]
            for dxi, dx in enumerate((-1, 0, 1)):
                acc = (rows[0] * w_ref[dxi] + rows[1] * w_ref[3 + dxi]
                       + rows[2] * w_ref[6 + dxi])
                if dx != 0:
                    acc = cmask(dx) * roll_lanes(acc, dx)
                out = out + acc
            return out

        o1 = dwconv(x1, wd1_ref, bd1_ref)
        o2 = dwconv(o1, wd2_ref, bd2_ref)
        outs = (x1, o1, o2)

        # ---- _global: per-branch channel mean / max -> (8, Nb) (2 pad rows) ----
        inv_d2 = 1.0 / d2
        stats = []
        for o in outs:
            stats.append(jnp.sum(o, axis=0, keepdims=True) * inv_d2)
            stats.append(jnp.max(o, axis=0, keepdims=True))
        stats.append(jnp.zeros((2, Nb), jnp.float32))
        gbs8 = jnp.concatenate(stats, axis=0)                      # (8, Nb)

        # ---- spatial_mix 7x7 (6->3): 7 per-dy dots; per-dx blocks of the
        #      result are lane-rolled + column-masked and accumulated.
        smcat = None
        for k, dy in enumerate(range(-3, 4)):
            gr = row_shift(gbs8, dy).astype(jnp.bfloat16)
            d = jnp.dot(wsm_ref[k], gr, preferred_element_type=jnp.float32)
            smcat = d if smcat is None else smcat + d              # (56, Nb)
        sm = bsm_ref[...] + smcat[24:32]                           # dx = 0 block
        for dx in (-3, -2, -1, 1, 2, 3):
            j = dx + 3
            sm = sm + cmask(dx) * roll_lanes(smcat[j * 8:(j + 1) * 8], dx)
        attn = sigmoid(sm)                                         # rows 0..2 used

        # ---- ctx, SiLU gate, projection, residual ----
        ctx = outs[0] * attn[0:1] + outs[1] * attn[1:2] + outs[2] * attn[2:3]
        cat = jnp.concatenate([x0, ctx], axis=0)                   # (C, Nb)
        y = v * (cat * sigmoid(cat))
        out = (x + jnp.dot(wp_ref[...], y.astype(jnp.bfloat16),
                           preferred_element_type=jnp.float32) + bp_ref[...])
        out_ref[...] = out.astype(out_ref.dtype)

    inputs = [xk, row_mask, col_mask, prep['w_stemv'], prep['b_stemv'],
              prep['w_sm'], prep['b_sm'], prep['w_d1'], prep['b_d1'],
              prep['w_d2'], prep['b_d2'], prep['w_proj'], prep['b_proj']]
    in_specs = [pl.BlockSpec((C, Nb), lambda i: (0, i))]
    in_specs += [_rep_spec(a) for a in inputs[1:]]

    vmem_limit = int(min(0.85 * _vmem_capacity_bytes(),
                         max(48 << 20, 3 * per_lane * Nb)))

    out_k = pl.pallas_call(
        kernel,
        out_shape=jax.ShapeDtypeStruct((C, N), x_nchw.dtype),
        grid_spec=pltpu.PrefetchScalarGridSpec(
            num_scalar_prefetch=0,
            grid=(N // Nb,),
            in_specs=in_specs,
            out_specs=pl.BlockSpec((C, Nb), lambda i: (0, i)),
        ),
        compiler_params=pltpu.CompilerParams(
            dimension_semantics=("parallel",),     # batch axis carries no state
            vmem_limit_bytes=vmem_limit),
    )(*inputs)

    return jnp.transpose(out_k.reshape(C, B, H, W), (1, 0, 2, 3))


# ------------------------ pure-JAX reference (NHWC) ------------------------
def _conv2d_ref(x, w, b, padding, groups=1):
    y = lax.conv_general_dilated(
        x, w, window_strides=(1, 1),
        padding=[(padding, padding), (padding, padding)],
        dimension_numbers=('NHWC', 'HWIO', 'NHWC'),
        feature_group_count=groups,
        precision=lax.Precision.HIGHEST)
    return y + b


def wds_reference(x, params):
    C = x.shape[-1]
    d2 = params['dim2']
    c0 = C - d2
    v = _conv2d_ref(x, params['wv'], params['bv'], 0)
    stem = _conv2d_ref(x, params['wstem'], params['bstem'], 1)
    x0, x1 = stem[..., :c0], stem[..., c0:]
    o1 = _conv2d_ref(x1, params['wd1'], params['bd1'], 1, groups=d2)
    o2 = _conv2d_ref(o1, params['wd2'], params['bd2'], 1, groups=d2)
    outs = [x1, o1, o2]
    gbs = jnp.concatenate(
        [jnp.concatenate([jnp.mean(o, axis=-1, keepdims=True),
                          jnp.max(o, axis=-1, keepdims=True)], axis=-1)
         for o in outs], axis=-1)
    attn = jax.nn.sigmoid(_conv2d_ref(gbs, params['wsm'], params['bsm'], 3))
    ctx = sum(outs[i] * attn[..., i:i + 1] for i in range(3))
    cat = jnp.concatenate([x0, ctx], axis=-1)
    y = v * (cat * jax.nn.sigmoid(cat))
    return x + _conv2d_ref(y, params['wproj'], params['bproj'], 0)


if __name__ == "__main__":
    B, C, H, W = 2, 16, 16, 16
    d2 = make_divisible(int(C * 0.5), 8)      # dim2 = 8

    key = jax.random.PRNGKey(0)
    ks = jax.random.split(key, 13)
    s = 0.1
    params = dict(
        dim2=d2,
        wv=jax.random.normal(ks[0], (1, 1, C, C), jnp.float32) * s,
        bv=jax.random.normal(ks[1], (C,), jnp.float32) * s,
        wstem=jax.random.normal(ks[2], (3, 3, C, C), jnp.float32) * s,
        bstem=jax.random.normal(ks[3], (C,), jnp.float32) * s,
        wd1=jax.random.normal(ks[4], (3, 3, 1, d2), jnp.float32) * s,
        bd1=jax.random.normal(ks[5], (d2,), jnp.float32) * s,
        wd2=jax.random.normal(ks[6], (3, 3, 1, d2), jnp.float32) * s,
        bd2=jax.random.normal(ks[7], (d2,), jnp.float32) * s,
        wsm=jax.random.normal(ks[8], (7, 7, 6, 3), jnp.float32) * s,
        bsm=jax.random.normal(ks[9], (3,), jnp.float32) * s,
        wproj=jax.random.normal(ks[10], (1, 1, C, C), jnp.float32) * s,
        bproj=jax.random.normal(ks[11], (C,), jnp.float32) * s,
    )

    x_nchw = jax.random.normal(ks[12], (B, C, H, W), jnp.float32)   # PyTorch layout

    prep = prepare_wds_params(params)            # one-time weight relayout
    out_nchw = jax.block_until_ready(wds_pallas(x_nchw, prep))

    x_nhwc = jnp.transpose(x_nchw, (0, 2, 3, 1))
    ref_nhwc = jax.block_until_ready(wds_reference(x_nhwc, params))
    out_nhwc = jnp.transpose(out_nchw, (0, 2, 3, 1))

    assert out_nchw.shape == (B, C, H, W)
    err = float(jnp.max(jnp.abs(out_nhwc - ref_nhwc)))
    # bf16 MXU operands (per perf review) + approx-EUP sigmoid cost a few 1e-3
    # of absolute error vs the f32 HIGHEST-precision reference.
    assert err < 2e-2, f"max abs error vs reference: {err}"
    print("KERNEL_OK")
</pallas_src>

<mosaic_0001>
module attributes {stable_mosaic.version = 11 : i64} {
  func.func @kernel(%arg0: i32, %arg1: memref<16x512xf32, #tpu.memory_space<vmem>>, %arg2: memref<8x512xf32, #tpu.memory_space<vmem>>, %arg3: memref<8x512xf32, #tpu.memory_space<vmem>>, %arg4: memref<3x64x16xbf16, #tpu.memory_space<vmem>>, %arg5: memref<64x1xf32, #tpu.memory_space<vmem>>, %arg6: memref<7x56x8xbf16, #tpu.memory_space<vmem>>, %arg7: memref<8x1xf32, #tpu.memory_space<vmem>>, %arg8: memref<9x8x1xf32, #tpu.memory_space<vmem>>, %arg9: memref<8x1xf32, #tpu.memory_space<vmem>>, %arg10: memref<9x8x1xf32, #tpu.memory_space<vmem>>, %arg11: memref<8x1xf32, #tpu.memory_space<vmem>>, %arg12: memref<16x16xbf16, #tpu.memory_space<vmem>>, %arg13: memref<16x1xf32, #tpu.memory_space<vmem>>, %arg14: memref<16x512xf32, #tpu.memory_space<vmem>>) attributes {dimension_semantics = [#tpu.dimension_semantics<parallel>], iteration_bounds = array<i64: 1>, scalar_prefetch = 0 : i64, scratch_operands = 0 : i64, tpu.core_type = #tpu.core_type<tc>, window_params = [{transform_indices = @transform_0, window_bounds = array<i64: 16, 512>}, {pipeline_mode = #tpu.pipeline_mode<synchronous>, transform_indices = @transform_1, window_bounds = array<i64: 8, 512>}, {pipeline_mode = #tpu.pipeline_mode<synchronous>, transform_indices = @transform_2, window_bounds = array<i64: 8, 512>}, {pipeline_mode = #tpu.pipeline_mode<synchronous>, transform_indices = @transform_3, window_bounds = array<i64: 3, 64, 16>}, {pipeline_mode = #tpu.pipeline_mode<synchronous>, transform_indices = @transform_4, window_bounds = array<i64: 64, 1>}, {pipeline_mode = #tpu.pipeline_mode<synchronous>, transform_indices = @transform_5, window_bounds = array<i64: 7, 56, 8>}, {pipeline_mode = #tpu.pipeline_mode<synchronous>, transform_indices = @transform_6, window_bounds = array<i64: 8, 1>}, {pipeline_mode = #tpu.pipeline_mode<synchronous>, transform_indices = @transform_7, window_bounds = array<i64: 9, 8, 1>}, {pipeline_mode = #tpu.pipeline_mode<synchronous>, transform_indices = @transform_8, window_bounds = array<i64: 8, 1>}, {pipeline_mode = #tpu.pipeline_mode<synchronous>, transform_indices = @transform_9, window_bounds = array<i64: 9, 8, 1>}, {pipeline_mode = #tpu.pipeline_mode<synchronous>, transform_indices = @transform_10, window_bounds = array<i64: 8, 1>}, {pipeline_mode = #tpu.pipeline_mode<synchronous>, transform_indices = @transform_11, window_bounds = array<i64: 16, 16>}, {pipeline_mode = #tpu.pipeline_mode<synchronous>, transform_indices = @transform_12, window_bounds = array<i64: 16, 1>}, {transform_indices = @transform_13, window_bounds = array<i64: 16, 512>}]} {
    %c0 = arith.constant 0 : index
    %c0_0 = arith.constant 0 : index
    %0 = vector.load %arg1[%c0, %c0_0] : memref<16x512xf32, #tpu.memory_space<vmem>>, vector<16x512xf32>
    %c0_1 = arith.constant 0 : index
    %c0_2 = arith.constant 0 : index
    %1 = vector.load %arg5[%c0_1, %c0_2] : memref<64x1xf32, #tpu.memory_space<vmem>>, vector<64x1xf32>
    %c2 = arith.constant 2 : index
    %c0_3 = arith.constant 0 : index
    %2 = vector.load %arg2[%c2, %c0_3] : memref<8x512xf32, #tpu.memory_space<vmem>>, vector<1x512xf32>
    %c16_i32 = arith.constant 16 : i32
    %3 = tpu.dynamic_rotate %0 by %c16_i32 dim 1 : vector<16x512xf32>, i32 -> vector<16x512xf32>
    %4 = vector.broadcast %2 : vector<1x512xf32> to vector<16x512xf32>
    %5 = arith.mulf %4, %3 : vector<16x512xf32>
    %6 = arith.truncf %5 : vector<16x512xf32> to vector<16x512xbf16>
    %c0_4 = arith.constant 0 : index
    %c0_5 = arith.constant 0 : index
    %c0_6 = arith.constant 0 : index
    %7 = vector.load %arg4[%c0_4, %c0_5, %c0_6] : memref<3x64x16xbf16, #tpu.memory_space<vmem>>, vector<1x64x16xbf16>
    %8 = vector.shape_cast %7 : vector<1x64x16xbf16> to vector<64x16xbf16>
    %cst = arith.constant dense<0.000000e+00> : vector<64x512xf32>
    %9 = tpu.matmul %8, %6, %cst {dimension_numbers = #tpu.dot_dimension_numbers<[1], [0], [0], [1], [0, 0, 1, 1], [], []>} : vector<64x16xbf16>, vector<16x512xbf16>, vector<64x512xf32> -> vector<64x512xf32>
    %10 = vector.broadcast %1 : vector<64x1xf32> to vector<64x512xf32>
    %11 = arith.addf %10, %9 : vector<64x512xf32>
    %12 = arith.truncf %0 : vector<16x512xf32> to vector<16x512xbf16>
    %c1 = arith.constant 1 : index
    %c0_7 = arith.constant 0 : index
    %c0_8 = arith.constant 0 : index
    %13 = vector.load %arg4[%c1, %c0_7, %c0_8] : memref<3x64x16xbf16, #tpu.memory_space<vmem>>, vector<1x64x16xbf16>
    %14 = vector.shape_cast %13 : vector<1x64x16xbf16> to vector<64x16xbf16>
    %cst_9 = arith.constant dense<0.000000e+00> : vector<64x512xf32>
    %15 = tpu.matmul %14, %12, %cst_9 {dimension_numbers = #tpu.dot_dimension_numbers<[1], [0], [0], [1], [0, 0, 1, 1], [], []>} : vector<64x16xbf16>, vector<16x512xbf16>, vector<64x512xf32> -> vector<64x512xf32>
    %16 = arith.addf %11, %15 : vector<64x512xf32>
    %c4 = arith.constant 4 : index
    %c0_10 = arith.constant 0 : index
    %17 = vector.load %arg2[%c4, %c0_10] : memref<8x512xf32, #tpu.memory_space<vmem>>, vector<1x512xf32>
    %c496_i32 = arith.constant 496 : i32
    %18 = tpu.dynamic_rotate %0 by %c496_i32 dim 1 : vector<16x512xf32>, i32 -> vector<16x512xf32>
    %19 = vector.broadcast %17 : vector<1x512xf32> to vector<16x512xf32>
    %20 = arith.mulf %19, %18 : vector<16x512xf32>
    %21 = arith.truncf %20 : vector<16x512xf32> to vector<16x512xbf16>
    %c2_11 = arith.constant 2 : index
    %c0_12 = arith.constant 0 : index
    %c0_13 = arith.constant 0 : index
    %22 = vector.load %arg4[%c2_11, %c0_12, %c0_13] : memref<3x64x16xbf16, #tpu.memory_space<vmem>>, vector<1x64x16xbf16>
    %23 = vector.shape_cast %22 : vector<1x64x16xbf16> to vector<64x16xbf16>
    %cst_14 = arith.constant dense<0.000000e+00> : vector<64x512xf32>
    %24 = tpu.matmul %23, %21, %cst_14 {dimension_numbers = #tpu.dot_dimension_numbers<[1], [0], [0], [1], [0, 0, 1, 1], [], []>} : vector<64x16xbf16>, vector<16x512xbf16>, vector<64x512xf32> -> vector<64x512xf32>
    %25 = arith.addf %16, %24 : vector<64x512xf32>
    %26 = vector.extract_strided_slice %25 {offsets = [16, 0], sizes = [16, 512], strides = [1, 1]} : vector<64x512xf32> to vector<16x512xf32>
    %c2_15 = arith.constant 2 : index
    %c0_16 = arith.constant 0 : index
    %27 = vector.load %arg3[%c2_15, %c0_16] : memref<8x512xf32, #tpu.memory_space<vmem>>, vector<1x512xf32>
    %28 = vector.extract_strided_slice %25 {offsets = [0, 0], sizes = [16, 512], strides = [1, 1]} : vector<64x512xf32> to vector<16x512xf32>
    %c1_i32 = arith.constant 1 : i32
    %29 = tpu.dynamic_rotate %28 by %c1_i32 dim 1 : vector<16x512xf32>, i32 -> vector<16x512xf32>
    %30 = vector.broadcast %27 : vector<1x512xf32> to vector<16x512xf32>
    %31 = arith.mulf %30, %29 : vector<16x512xf32>
    %32 = arith.addf %26, %31 : vector<16x512xf32>
    %c4_17 = arith.constant 4 : index
    %c0_18 = arith.constant 0 : index
    %33 = vector.load %arg3[%c4_17, %c0_18] : memref<8x512xf32, #tpu.memory_space<vmem>>, vector<1x512xf32>
    %34 = vector.extract_strided_slice %25 {offsets = [32, 0], sizes = [16, 512], strides = [1, 1]} : vector<64x512xf32> to vector<16x512xf32>
    %c511_i32 = arith.constant 511 : i32
    %35 = tpu.dynamic_rotate %34 by %c511_i32 dim 1 : vector<16x512xf32>, i32 -> vector<16x512xf32>
    %36 = vector.broadcast %33 : vector<1x512xf32> to vector<16x512xf32>
    %37 = arith.mulf %36, %35 : vector<16x512xf32>
    %38 = arith.addf %32, %37 : vector<16x512xf32>
    %39 = vector.extract_strided_slice %25 {offsets = [48, 0], sizes = [16, 512], strides = [1, 1]} : vector<64x512xf32> to vector<16x512xf32>
    %40 = vector.extract_strided_slice %38 {offsets = [0, 0], sizes = [8, 512], strides = [1, 1]} : vector<16x512xf32> to vector<8x512xf32>
    %41 = vector.extract_strided_slice %38 {offsets = [8, 0], sizes = [8, 512], strides = [1, 1]} : vector<16x512xf32> to vector<8x512xf32>
    %c2_19 = arith.constant 2 : index
    %c0_20 = arith.constant 0 : index
    %42 = vector.load %arg2[%c2_19, %c0_20] : memref<8x512xf32, #tpu.memory_space<vmem>>, vector<1x512xf32>
    %c16_i32_21 = arith.constant 16 : i32
    %43 = tpu.dynamic_rotate %41 by %c16_i32_21 dim 1 : vector<8x512xf32>, i32 -> vector<8x512xf32>
    %44 = vector.broadcast %42 : vector<1x512xf32> to vector<8x512xf32>
    %45 = arith.mulf %44, %43 : vector<8x512xf32>
    %c4_22 = arith.constant 4 : index
    %c0_23 = arith.constant 0 : index
    %46 = vector.load %arg2[%c4_22, %c0_23] : memref<8x512xf32, #tpu.memory_space<vmem>>, vector<1x512xf32>
    %c496_i32_24 = arith.constant 496 : i32
    %47 = tpu.dynamic_rotate %41 by %c496_i32_24 dim 1 : vector<8x512xf32>, i32 -> vector<8x512xf32>
    %48 = vector.broadcast %46 : vector<1x512xf32> to vector<8x512xf32>
    %49 = arith.mulf %48, %47 : vector<8x512xf32>
    %cst_25 = arith.constant 0.000000e+00 : f32
    %50 = vector.broadcast %cst_25 : f32 to vector<8x512xf32>
    %c0_26 = arith.constant 0 : index
    %c0_27 = arith.constant 0 : index
    %51 = vector.load %arg9[%c0_26, %c0_27] : memref<8x1xf32, #tpu.memory_space<vmem>>, vector<8x1xf32>
    %52 = vector.broadcast %51 : vector<8x1xf32> to vector<8x512xf32>
    %53 = arith.addf %50, %52 : vector<8x512xf32>
    %c0_28 = arith.constant 0 : index
    %c0_29 = arith.constant 0 : index
    %c0_30 = arith.constant 0 : index
    %54 = vector.load %arg8[%c0_28, %c0_29, %c0_30] : memref<9x8x1xf32, #tpu.memory_space<vmem>>, vector<1x8x1xf32>
    %55 = vector.shape_cast %54 : vector<1x8x1xf32> to vector<8x1xf32>
    %56 = vector.broadcast %55 : vector<8x1xf32> to vector<8x512xf32>
    %57 = arith.mulf %45, %56 : vector<8x512xf32>
    %c3 = arith.constant 3 : index
    %c0_31 = arith.constant 0 : index
    %c0_32 = arith.constant 0 : index
    %58 = vector.load %arg8[%c3, %c0_31, %c0_32] : memref<9x8x1xf32, #tpu.memory_space<vmem>>, vector<1x8x1xf32>
    %59 = vector.shape_cast %58 : vector<1x8x1xf32> to vector<8x1xf32>
    %60 = vector.broadcast %59 : vector<8x1xf32> to vector<8x512xf32>
    %61 = arith.mulf %41, %60 : vector<8x512xf32>
    %62 = arith.addf %57, %61 : vector<8x512xf32>
    %c6 = arith.constant 6 : index
    %c0_33 = arith.constant 0 : index
    %c0_34 = arith.constant 0 : index
    %63 = vector.load %arg8[%c6, %c0_33, %c0_34] : memref<9x8x1xf32, #tpu.memory_space<vmem>>, vector<1x8x1xf32>
    %64 = vector.shape_cast %63 : vector<1x8x1xf32> to vector<8x1xf32>
    %65 = vector.broadcast %64 : vector<8x1xf32> to vector<8x512xf32>
    %66 = arith.mulf %49, %65 : vector<8x512xf32>
    %67 = arith.addf %62, %66 : vector<8x512xf32>
    %c2_35 = arith.constant 2 : index
    %c0_36 = arith.constant 0 : index
    %68 = vector.load %arg3[%c2_35, %c0_36] : memref<8x512xf32, #tpu.memory_space<vmem>>, vector<1x512xf32>
    %c1_i32_37 = arith.constant 1 : i32
    %69 = tpu.dynamic_rotate %67 by %c1_i32_37 dim 1 : vector<8x512xf32>, i32 -> vector<8x512xf32>
    %70 = vector.broadcast %68 : vector<1x512xf32> to vector<8x512xf32>
    %71 = arith.mulf %70, %69 : vector<8x512xf32>
    %72 = arith.addf %53, %71 : vector<8x512xf32>
    %c1_38 = arith.constant 1 : index
    %c0_39 = arith.constant 0 : index
    %c0_40 = arith.constant 0 : index
    %73 = vector.load %arg8[%c1_38, %c0_39, %c0_40] : memref<9x8x1xf32, #tpu.memory_space<vmem>>, vector<1x8x1xf32>
    %74 = vector.shape_cast %73 : vector<1x8x1xf32> to vector<8x1xf32>
    %75 = vector.broadcast %74 : vector<8x1xf32> to vector<8x512xf32>
    %76 = arith.mulf %45, %75 : vector<8x512xf32>
    %c4_41 = arith.constant 4 : index
    %c0_42 = arith.constant 0 : index
    %c0_43 = arith.constant 0 : index
    %77 = vector.load %arg8[%c4_41, %c0_42, %c0_43] : memref<9x8x1xf32, #tpu.memory_space<vmem>>, vector<1x8x1xf32>
    %78 = vector.shape_cast %77 : vector<1x8x1xf32> to vector<8x1xf32>
    %79 = vector.broadcast %78 : vector<8x1xf32> to vector<8x512xf32>
    %80 = arith.mulf %41, %79 : vector<8x512xf32>
    %81 = arith.addf %76, %80 : vector<8x512xf32>
    %c7 = arith.constant 7 : index
    %c0_44 = arith.constant 0 : index
    %c0_45 = arith.constant 0 : index
    %82 = vector.load %arg8[%c7, %c0_44, %c0_45] : memref<9x8x1xf32, #tpu.memory_space<vmem>>, vector<1x8x1xf32>
    %83 = vector.shape_cast %82 : vector<1x8x1xf32> to vector<8x1xf32>
    %84 = vector.broadcast %83 : vector<8x1xf32> to vector<8x512xf32>
    %85 = arith.mulf %49, %84 : vector<8x512xf32>
    %86 = arith.addf %81, %85 : vector<8x512xf32>
    %87 = arith.addf %72, %86 : vector<8x512xf32>
    %c2_46 = arith.constant 2 : index
    %c0_47 = arith.constant 0 : index
    %c0_48 = arith.constant 0 : index
    %88 = vector.load %arg8[%c2_46, %c0_47, %c0_48] : memref<9x8x1xf32, #tpu.memory_space<vmem>>, vector<1x8x1xf32>
    %89 = vector.shape_cast %88 : vector<1x8x1xf32> to vector<8x1xf32>
    %90 = vector.broadcast %89 : vector<8x1xf32> to vector<8x512xf32>
    %91 = arith.mulf %45, %90 : vector<8x512xf32>
    %c5 = arith.constant 5 : index
    %c0_49 = arith.constant 0 : index
    %c0_50 = arith.constant 0 : index
    %92 = vector.load %arg8[%c5, %c0_49, %c0_50] : memref<9x8x1xf32, #tpu.memory_space<vmem>>, vector<1x8x1xf32>
    %93 = vector.shape_cast %92 : vector<1x8x1xf32> to vector<8x1xf32>
    %94 = vector.broadcast %93 : vector<8x1xf32> to vector<8x512xf32>
    %95 = arith.mulf %41, %94 : vector<8x512xf32>
    %96 = arith.addf %91, %95 : vector<8x512xf32>
    %c8 = arith.constant 8 : index
    %c0_51 = arith.constant 0 : index
    %c0_52 = arith.constant 0 : index
    %97 = vector.load %arg8[%c8, %c0_51, %c0_52] : memref<9x8x1xf32, #tpu.memory_space<vmem>>, vector<1x8x1xf32>
    %98 = vector.shape_cast %97 : vector<1x8x1xf32> to vector<8x1xf32>
    %99 = vector.broadcast %98 : vector<8x1xf32> to vector<8x512xf32>
    %100 = arith.mulf %49, %99 : vector<8x512xf32>
    %101 = arith.addf %96, %100 : vector<8x512xf32>
    %c4_53 = arith.constant 4 : index
    %c0_54 = arith.constant 0 : index
    %102 = vector.load %arg3[%c4_53, %c0_54] : memref<8x512xf32, #tpu.memory_space<vmem>>, vector<1x512xf32>
    %c511_i32_55 = arith.constant 511 : i32
    %103 = tpu.dynamic_rotate %101 by %c511_i32_55 dim 1 : vector<8x512xf32>, i32 -> vector<8x512xf32>
    %104 = vector.broadcast %102 : vector<1x512xf32> to vector<8x512xf32>
    %105 = arith.mulf %104, %103 : vector<8x512xf32>
    %106 = arith.addf %87, %105 : vector<8x512xf32>
    %c2_56 = arith.constant 2 : index
    %c0_57 = arith.constant 0 : index
    %107 = vector.load %arg2[%c2_56, %c0_57] : memref<8x512xf32, #tpu.memory_space<vmem>>, vector<1x512xf32>
    %c16_i32_58 = arith.constant 16 : i32
    %108 = tpu.dynamic_rotate %106 by %c16_i32_58 dim 1 : vector<8x512xf32>, i32 -> vector<8x512xf32>
    %109 = vector.broadcast %107 : vector<1x512xf32> to vector<8x512xf32>
    %110 = arith.mulf %109, %108 : vector<8x512xf32>
    %c4_59 = arith.constant 4 : index
    %c0_60 = arith.constant 0 : index
    %111 = vector.load %arg2[%c4_59, %c0_60] : memref<8x512xf32, #tpu.memory_space<vmem>>, vector<1x512xf32>
    %c496_i32_61 = arith.constant 496 : i32
    %112 = tpu.dynamic_rotate %106 by %c496_i32_61 dim 1 : vector<8x512xf32>, i32 -> vector<8x512xf32>
    %113 = vector.broadcast %111 : vector<1x512xf32> to vector<8x512xf32>
    %114 = arith.mulf %113, %112 : vector<8x512xf32>
    %cst_62 = arith.constant 0.000000e+00 : f32
    %115 = vector.broadcast %cst_62 : f32 to vector<8x512xf32>
    %c0_63 = arith.constant 0 : index
    %c0_64 = arith.constant 0 : index
    %116 = vector.load %arg11[%c0_63, %c0_64] : memref<8x1xf32, #tpu.memory_space<vmem>>, vector<8x1xf32>
    %117 = vector.broadcast %116 : vector<8x1xf32> to vector<8x512xf32>
    %118 = arith.addf %115, %117 : vector<8x512xf32>
    %c0_65 = arith.constant 0 : index
    %c0_66 = arith.constant 0 : index
    %c0_67 = arith.constant 0 : index
    %119 = vector.load %arg10[%c0_65, %c0_66, %c0_67] : memref<9x8x1xf32, #tpu.memory_space<vmem>>, vector<1x8x1xf32>
    %120 = vector.shape_cast %119 : vector<1x8x1xf32> to vector<8x1xf32>
    %121 = vector.broadcast %120 : vector<8x1xf32> to vector<8x512xf32>
    %122 = arith.mulf %110, %121 : vector<8x512xf32>
    %c3_68 = arith.constant 3 : index
    %c0_69 = arith.constant 0 : index
    %c0_70 = arith.constant 0 : index
    %123 = vector.load %arg10[%c3_68, %c0_69, %c0_70] : memref<9x8x1xf32, #tpu.memory_space<vmem>>, vector<1x8x1xf32>
    %124 = vector.shape_cast %123 : vector<1x8x1xf32> to vector<8x1xf32>
    %125 = vector.broadcast %124 : vector<8x1xf32> to vector<8x512xf32>
    %126 = arith.mulf %106, %125 : vector<8x512xf32>
    %127 = arith.addf %122, %126 : vector<8x512xf32>
    %c6_71 = arith.constant 6 : index
    %c0_72 = arith.constant 0 : index
    %c0_73 = arith.constant 0 : index
    %128 = vector.load %arg10[%c6_71, %c0_72, %c0_73] : memref<9x8x1xf32, #tpu.memory_space<vmem>>, vector<1x8x1xf32>
    %129 = vector.shape_cast %128 : vector<1x8x1xf32> to vector<8x1xf32>
    %130 = vector.broadcast %129 : vector<8x1xf32> to vector<8x512xf32>
    %131 = arith.mulf %114, %130 : vector<8x512xf32>
    %132 = arith.addf %127, %131 : vector<8x512xf32>
    %c2_74 = arith.constant 2 : index
    %c0_75 = arith.constant 0 : index
    %133 = vector.load %arg3[%c2_74, %c0_75] : memref<8x512xf32, #tpu.memory_space<vmem>>, vector<1x512xf32>
    %c1_i32_76 = arith.constant 1 : i32
    %134 = tpu.dynamic_rotate %132 by %c1_i32_76 dim 1 : vector<8x512xf32>, i32 -> vector<8x512xf32>
    %135 = vector.broadcast %133 : vector<1x512xf32> to vector<8x512xf32>
    %136 = arith.mulf %135, %134 : vector<8x512xf32>
    %137 = arith.addf %118, %136 : vector<8x512xf32>
    %c1_77 = arith.constant 1 : index
    %c0_78 = arith.constant 0 : index
    %c0_79 = arith.constant 0 : index
    %138 = vector.load %arg10[%c1_77, %c0_78, %c0_79] : memref<9x8x1xf32, #tpu.memory_space<vmem>>, vector<1x8x1xf32>
    %139 = vector.shape_cast %138 : vector<1x8x1xf32> to vector<8x1xf32>
    %140 = vector.broadcast %139 : vector<8x1xf32> to vector<8x512xf32>
    %141 = arith.mulf %110, %140 : vector<8x512xf32>
    %c4_80 = arith.constant 4 : index
    %c0_81 = arith.constant 0 : index
    %c0_82 = arith.constant 0 : index
    %142 = vector.load %arg10[%c4_80, %c0_81, %c0_82] : memref<9x8x1xf32, #tpu.memory_space<vmem>>, vector<1x8x1xf32>
    %143 = vector.shape_cast %142 : vector<1x8x1xf32> to vector<8x1xf32>
    %144 = vector.broadcast %143 : vector<8x1xf32> to vector<8x512xf32>
    %145 = arith.mulf %106, %144 : vector<8x512xf32>
    %146 = arith.addf %141, %145 : vector<8x512xf32>
    %c7_83 = arith.constant 7 : index
    %c0_84 = arith.constant 0 : index
    %c0_85 = arith.constant 0 : index
    %147 = vector.load %arg10[%c7_83, %c0_84, %c0_85] : memref<9x8x1xf32, #tpu.memory_space<vmem>>, vector<1x8x1xf32>
    %148 = vector.shape_cast %147 : vector<1x8x1xf32> to vector<8x1xf32>
    %149 = vector.broadcast %148 : vector<8x1xf32> to vector<8x512xf32>
    %150 = arith.mulf %114, %149 : vector<8x512xf32>
    %151 = arith.addf %146, %150 : vector<8x512xf32>
    %152 = arith.addf %137, %151 : vector<8x512xf32>
    %c2_86 = arith.constant 2 : index
    %c0_87 = arith.constant 0 : index
    %c0_88 = arith.constant 0 : index
    %153 = vector.load %arg10[%c2_86, %c0_87, %c0_88] : memref<9x8x1xf32, #tpu.memory_space<vmem>>, vector<1x8x1xf32>
    %154 = vector.shape_cast %153 : vector<1x8x1xf32> to vector<8x1xf32>
    %155 = vector.broadcast %154 : vector<8x1xf32> to vector<8x512xf32>
    %156 = arith.mulf %110, %155 : vector<8x512xf32>
    %c5_89 = arith.constant 5 : index
    %c0_90 = arith.constant 0 : index
    %c0_91 = arith.constant 0 : index
    %157 = vector.load %arg10[%c5_89, %c0_90, %c0_91] : memref<9x8x1xf32, #tpu.memory_space<vmem>>, vector<1x8x1xf32>
    %158 = vector.shape_cast %157 : vector<1x8x1xf32> to vector<8x1xf32>
    %159 = vector.broadcast %158 : vector<8x1xf32> to vector<8x512xf32>
    %160 = arith.mulf %106, %159 : vector<8x512xf32>
    %161 = arith.addf %156, %160 : vector<8x512xf32>
    %c8_92 = arith.constant 8 : index
    %c0_93 = arith.constant 0 : index
    %c0_94 = arith.constant 0 : index
    %162 = vector.load %arg10[%c8_92, %c0_93, %c0_94] : memref<9x8x1xf32, #tpu.memory_space<vmem>>, vector<1x8x1xf32>
    %163 = vector.shape_cast %162 : vector<1x8x1xf32> to vector<8x1xf32>
    %164 = vector.broadcast %163 : vector<8x1xf32> to vector<8x512xf32>
    %165 = arith.mulf %114, %164 : vector<8x512xf32>
    %166 = arith.addf %161, %165 : vector<8x512xf32>
    %c4_95 = arith.constant 4 : index
    %c0_96 = arith.constant 0 : index
    %167 = vector.load %arg3[%c4_95, %c0_96] : memref<8x512xf32, #tpu.memory_space<vmem>>, vector<1x512xf32>
    %c511_i32_97 = arith.constant 511 : i32
    %168 = tpu.dynamic_rotate %166 by %c511_i32_97 dim 1 : vector<8x512xf32>, i32 -> vector<8x512xf32>
    %169 = vector.broadcast %167 : vector<1x512xf32> to vector<8x512xf32>
    %170 = arith.mulf %169, %168 : vector<8x512xf32>
    %171 = arith.addf %152, %170 : vector<8x512xf32>
    %cst_98 = arith.constant dense<0.000000e+00> : vector<512xf32>
    %172 = vector.multi_reduction <add>, %41, %cst_98 [0] : vector<8x512xf32> to vector<512xf32>
    %173 = vector.shape_cast %172 : vector<512xf32> to vector<1x512xf32>
    %cst_99 = arith.constant 1.250000e-01 : f32
    %174 = vector.broadcast %cst_99 : f32 to vector<1x512xf32>
    %175 = arith.mulf %173, %174 : vector<1x512xf32>
    %cst_100 = arith.constant dense<0xFF800000> : vector<512xf32>
    %176 = vector.multi_reduction <maximumf>, %41, %cst_100 [0] : vector<8x512xf32> to vector<512xf32>
    %177 = vector.shape_cast %176 : vector<512xf32> to vector<1x512xf32>
    %cst_101 = arith.constant dense<0.000000e+00> : vector<512xf32>
    %178 = vector.multi_reduction <add>, %106, %cst_101 [0] : vector<8x512xf32> to vector<512xf32>
    %179 = vector.shape_cast %178 : vector<512xf32> to vector<1x512xf32>
    %cst_102 = arith.constant 1.250000e-01 : f32
    %180 = vector.broadcast %cst_102 : f32 to vector<1x512xf32>
    %181 = arith.mulf %179, %180 : vector<1x512xf32>
    %cst_103 = arith.constant dense<0xFF800000> : vector<512xf32>
    %182 = vector.multi_reduction <maximumf>, %106, %cst_103 [0] : vector<8x512xf32> to vector<512xf32>
    %183 = vector.shape_cast %182 : vector<512xf32> to vector<1x512xf32>
    %cst_104 = arith.constant dense<0.000000e+00> : vector<512xf32>
    %184 = vector.multi_reduction <add>, %171, %cst_104 [0] : vector<8x512xf32> to vector<512xf32>
    %185 = vector.shape_cast %184 : vector<512xf32> to vector<1x512xf32>
    %cst_105 = arith.constant 1.250000e-01 : f32
    %186 = vector.broadcast %cst_105 : f32 to vector<1x512xf32>
    %187 = arith.mulf %185, %186 : vector<1x512xf32>
    %cst_106 = arith.constant dense<0xFF800000> : vector<512xf32>
    %188 = vector.multi_reduction <maximumf>, %171, %cst_106 [0] : vector<8x512xf32> to vector<512xf32>
    %189 = vector.shape_cast %188 : vector<512xf32> to vector<1x512xf32>
    %cst_107 = arith.constant 0.000000e+00 : f32
    %190 = vector.broadcast %cst_107 : f32 to vector<2x512xf32>
    %191 = tpu.concatenate %175, %177, %181, %183, %187, %189, %190 in 0 : vector<1x512xf32>, vector<1x512xf32>, vector<1x512xf32>, vector<1x512xf32>, vector<1x512xf32>, vector<1x512xf32>, vector<2x512xf32> -> vector<8x512xf32>
    %c0_108 = arith.constant 0 : index
    %c0_109 = arith.constant 0 : index
    %192 = vector.load %arg2[%c0_108, %c0_109] : memref<8x512xf32, #tpu.memory_space<vmem>>, vector<1x512xf32>
    %c48_i32 = arith.constant 48 : i32
    %193 = tpu.dynamic_rotate %191 by %c48_i32 dim 1 : vector<8x512xf32>, i32 -> vector<8x512xf32>
    %194 = vector.broadcast %192 : vector<1x512xf32> to vector<8x512xf32>
    %195 = arith.mulf %194, %193 : vector<8x512xf32>
    %196 = arith.truncf %195 : vector<8x512xf32> to vector<8x512xbf16>
    %c0_110 = arith.constant 0 : index
    %c0_111 = arith.constant 0 : index
    %c0_112 = arith.constant 0 : index
    %197 = vector.load %arg6[%c0_110, %c0_111, %c0_112] : memref<7x56x8xbf16, #tpu.memory_space<vmem>>, vector<1x56x8xbf16>
    %198 = vector.shape_cast %197 : vector<1x56x8xbf16> to vector<56x8xbf16>
    %cst_113 = arith.constant dense<0.000000e+00> : vector<56x512xf32>
    %199 = tpu.matmul %198, %196, %cst_113 {dimension_numbers = #tpu.dot_dimension_numbers<[1], [0], [0], [1], [0, 0, 1, 1], [], []>} : vector<56x8xbf16>, vector<8x512xbf16>, vector<56x512xf32> -> vector<56x512xf32>
    %c1_114 = arith.constant 1 : index
    %c0_115 = arith.constant 0 : index
    %200 = vector.load %arg2[%c1_114, %c0_115] : memref<8x512xf32, #tpu.memory_space<vmem>>, vector<1x512xf32>
    %c32_i32 = arith.constant 32 : i32
    %201 = tpu.dynamic_rotate %191 by %c32_i32 dim 1 : vector<8x512xf32>, i32 -> vector<8x512xf32>
    %202 = vector.broadcast %200 : vector<1x512xf32> to vector<8x512xf32>
    %203 = arith.mulf %202, %201 : vector<8x512xf32>
    %204 = arith.truncf %203 : vector<8x512xf32> to vector<8x512xbf16>
    %c1_116 = arith.constant 1 : index
    %c0_117 = arith.constant 0 : index
    %c0_118 = arith.constant 0 : index
    %205 = vector.load %arg6[%c1_116, %c0_117, %c0_118] : memref<7x56x8xbf16, #tpu.memory_space<vmem>>, vector<1x56x8xbf16>
    %206 = vector.shape_cast %205 : vector<1x56x8xbf16> to vector<56x8xbf16>
    %cst_119 = arith.constant dense<0.000000e+00> : vector<56x512xf32>
    %207 = tpu.matmul %206, %204, %cst_119 {dimension_numbers = #tpu.dot_dimension_numbers<[1], [0], [0], [1], [0, 0, 1, 1], [], []>} : vector<56x8xbf16>, vector<8x512xbf16>, vector<56x512xf32> -> vector<56x512xf32>
    %208 = arith.addf %199, %207 : vector<56x512xf32>
    %c2_120 = arith.constant 2 : index
    %c0_121 = arith.constant 0 : index
    %209 = vector.load %arg2[%c2_120, %c0_121] : memref<8x512xf32, #tpu.memory_space<vmem>>, vector<1x512xf32>
    %c16_i32_122 = arith.constant 16 : i32
    %210 = tpu.dynamic_rotate %191 by %c16_i32_122 dim 1 : vector<8x512xf32>, i32 -> vector<8x512xf32>
    %211 = vector.broadcast %209 : vector<1x512xf32> to vector<8x512xf32>
    %212 = arith.mulf %211, %210 : vector<8x512xf32>
    %213 = arith.truncf %212 : vector<8x512xf32> to vector<8x512xbf16>
    %c2_123 = arith.constant 2 : index
    %c0_124 = arith.constant 0 : index
    %c0_125 = arith.constant 0 : index
    %214 = vector.load %arg6[%c2_123, %c0_124, %c0_125] : memref<7x56x8xbf16, #tpu.memory_space<vmem>>, vector<1x56x8xbf16>
    %215 = vector.shape_cast %214 : vector<1x56x8xbf16> to vector<56x8xbf16>
    %cst_126 = arith.constant dense<0.000000e+00> : vector<56x512xf32>
    %216 = tpu.matmul %215, %213, %cst_126 {dimension_numbers = #tpu.dot_dimension_numbers<[1], [0], [0], [1], [0, 0, 1, 1], [], []>} : vector<56x8xbf16>, vector<8x512xbf16>, vector<56x512xf32> -> vector<56x512xf32>
    %217 = arith.addf %208, %216 : vector<56x512xf32>
    %218 = arith.truncf %191 : vector<8x512xf32> to vector<8x512xbf16>
    %c3_127 = arith.constant 3 : index
    %c0_128 = arith.constant 0 : index
    %c0_129 = arith.constant 0 : index
    %219 = vector.load %arg6[%c3_127, %c0_128, %c0_129] : memref<7x56x8xbf16, #tpu.memory_space<vmem>>, vector<1x56x8xbf16>
    %220 = vector.shape_cast %219 : vector<1x56x8xbf16> to vector<56x8xbf16>
    %cst_130 = arith.constant dense<0.000000e+00> : vector<56x512xf32>
    %221 = tpu.matmul %220, %218, %cst_130 {dimension_numbers = #tpu.dot_dimension_numbers<[1], [0], [0], [1], [0, 0, 1, 1], [], []>} : vector<56x8xbf16>, vector<8x512xbf16>, vector<56x512xf32> -> vector<56x512xf32>
    %222 = arith.addf %217, %221 : vector<56x512xf32>
    %c4_131 = arith.constant 4 : index
    %c0_132 = arith.constant 0 : index
    %223 = vector.load %arg2[%c4_131, %c0_132] : memref<8x512xf32, #tpu.memory_space<vmem>>, vector<1x512xf32>
    %c496_i32_133 = arith.constant 496 : i32
    %224 = tpu.dynamic_rotate %191 by %c496_i32_133 dim 1 : vector<8x512xf32>, i32 -> vector<8x512xf32>
    %225 = vector.broadcast %223 : vector<1x512xf32> to vector<8x512xf32>
    %226 = arith.mulf %225, %224 : vector<8x512xf32>
    %227 = arith.truncf %226 : vector<8x512xf32> to vector<8x512xbf16>
    %c4_134 = arith.constant 4 : index
    %c0_135 = arith.constant 0 : index
    %c0_136 = arith.constant 0 : index
    %228 = vector.load %arg6[%c4_134, %c0_135, %c0_136] : memref<7x56x8xbf16, #tpu.memory_space<vmem>>, vector<1x56x8xbf16>
    %229 = vector.shape_cast %228 : vector<1x56x8xbf16> to vector<56x8xbf16>
    %cst_137 = arith.constant dense<0.000000e+00> : vector<56x512xf32>
    %230 = tpu.matmul %229, %227, %cst_137 {dimension_numbers = #tpu.dot_dimension_numbers<[1], [0], [0], [1], [0, 0, 1, 1], [], []>} : vector<56x8xbf16>, vector<8x512xbf16>, vector<56x512xf32> -> vector<56x512xf32>
    %231 = arith.addf %222, %230 : vector<56x512xf32>
    %c5_138 = arith.constant 5 : index
    %c0_139 = arith.constant 0 : index
    %232 = vector.load %arg2[%c5_138, %c0_139] : memref<8x512xf32, #tpu.memory_space<vmem>>, vector<1x512xf32>
    %c480_i32 = arith.constant 480 : i32
    %233 = tpu.dynamic_rotate %191 by %c480_i32 dim 1 : vector<8x512xf32>, i32 -> vector<8x512xf32>
    %234 = vector.broadcast %232 : vector<1x512xf32> to vector<8x512xf32>
    %235 = arith.mulf %234, %233 : vector<8x512xf32>
    %236 = arith.truncf %235 : vector<8x512xf32> to vector<8x512xbf16>
    %c5_140 = arith.constant 5 : index
    %c0_141 = arith.constant 0 : index
    %c0_142 = arith.constant 0 : index
    %237 = vector.load %arg6[%c5_140, %c0_141, %c0_142] : memref<7x56x8xbf16, #tpu.memory_space<vmem>>, vector<1x56x8xbf16>
    %238 = vector.shape_cast %237 : vector<1x56x8xbf16> to vector<56x8xbf16>
    %cst_143 = arith.constant dense<0.000000e+00> : vector<56x512xf32>
    %239 = tpu.matmul %238, %236, %cst_143 {dimension_numbers = #tpu.dot_dimension_numbers<[1], [0], [0], [1], [0, 0, 1, 1], [], []>} : vector<56x8xbf16>, vector<8x512xbf16>, vector<56x512xf32> -> vector<56x512xf32>
    %240 = arith.addf %231, %239 : vector<56x512xf32>
    %c6_144 = arith.constant 6 : index
    %c0_145 = arith.constant 0 : index
    %241 = vector.load %arg2[%c6_144, %c0_145] : memref<8x512xf32, #tpu.memory_space<vmem>>, vector<1x512xf32>
    %c464_i32 = arith.constant 464 : i32
    %242 = tpu.dynamic_rotate %191 by %c464_i32 dim 1 : vector<8x512xf32>, i32 -> vector<8x512xf32>
    %243 = vector.broadcast %241 : vector<1x512xf32> to vector<8x512xf32>
    %244 = arith.mulf %243, %242 : vector<8x512xf32>
    %245 = arith.truncf %244 : vector<8x512xf32> to vector<8x512xbf16>
    %c6_146 = arith.constant 6 : index
    %c0_147 = arith.constant 0 : index
    %c0_148 = arith.constant 0 : index
    %246 = vector.load %arg6[%c6_146, %c0_147, %c0_148] : memref<7x56x8xbf16, #tpu.memory_space<vmem>>, vector<1x56x8xbf16>
    %247 = vector.shape_cast %246 : vector<1x56x8xbf16> to vector<56x8xbf16>
    %cst_149 = arith.constant dense<0.000000e+00> : vector<56x512xf32>
    %248 = tpu.matmul %247, %245, %cst_149 {dimension_numbers = #tpu.dot_dimension_numbers<[1], [0], [0], [1], [0, 0, 1, 1], [], []>} : vector<56x8xbf16>, vector<8x512xbf16>, vector<56x512xf32> -> vector<56x512xf32>
    %249 = arith.addf %240, %248 : vector<56x512xf32>
    %c0_150 = arith.constant 0 : index
    %c0_151 = arith.constant 0 : index
    %250 = vector.load %arg7[%c0_150, %c0_151] : memref<8x1xf32, #tpu.memory_space<vmem>>, vector<8x1xf32>
    %251 = vector.extract_strided_slice %249 {offsets = [24, 0], sizes = [8, 512], strides = [1, 1]} : vector<56x512xf32> to vector<8x512xf32>
    %252 = vector.broadcast %250 : vector<8x1xf32> to vector<8x512xf32>
    %253 = arith.addf %252, %251 : vector<8x512xf32>
    %c0_152 = arith.constant 0 : index
    %c0_153 = arith.constant 0 : index
    %254 = vector.load %arg3[%c0_152, %c0_153] : memref<8x512xf32, #tpu.memory_space<vmem>>, vector<1x512xf32>
    %255 = vector.extract_strided_slice %249 {offsets = [0, 0], sizes = [8, 512], strides = [1, 1]} : vector<56x512xf32> to vector<8x512xf32>
    %c3_i32 = arith.constant 3 : i32
    %256 = tpu.dynamic_rotate %255 by %c3_i32 dim 1 : vector<8x512xf32>, i32 -> vector<8x512xf32>
    %257 = vector.broadcast %254 : vector<1x512xf32> to vector<8x512xf32>
    %258 = arith.mulf %257, %256 : vector<8x512xf32>
    %259 = arith.addf %253, %258 : vector<8x512xf32>
    %c1_154 = arith.constant 1 : index
    %c0_155 = arith.constant 0 : index
    %260 = vector.load %arg3[%c1_154, %c0_155] : memref<8x512xf32, #tpu.memory_space<vmem>>, vector<1x512xf32>
    %261 = vector.extract_strided_slice %249 {offsets = [8, 0], sizes = [8, 512], strides = [1, 1]} : vector<56x512xf32> to vector<8x512xf32>
    %c2_i32 = arith.constant 2 : i32
    %262 = tpu.dynamic_rotate %261 by %c2_i32 dim 1 : vector<8x512xf32>, i32 -> vector<8x512xf32>
    %263 = vector.broadcast %260 : vector<1x512xf32> to vector<8x512xf32>
    %264 = arith.mulf %263, %262 : vector<8x512xf32>
    %265 = arith.addf %259, %264 : vector<8x512xf32>
    %c2_156 = arith.constant 2 : index
    %c0_157 = arith.constant 0 : index
    %266 = vector.load %arg3[%c2_156, %c0_157] : memref<8x512xf32, #tpu.memory_space<vmem>>, vector<1x512xf32>
    %267 = vector.extract_strided_slice %249 {offsets = [16, 0], sizes = [8, 512], strides = [1, 1]} : vector<56x512xf32> to vector<8x512xf32>
    %c1_i32_158 = arith.constant 1 : i32
    %268 = tpu.dynamic_rotate %267 by %c1_i32_158 dim 1 : vector<8x512xf32>, i32 -> vector<8x512xf32>
    %269 = vector.broadcast %266 : vector<1x512xf32> to vector<8x512xf32>
    %270 = arith.mulf %269, %268 : vector<8x512xf32>
    %271 = arith.addf %265, %270 : vector<8x512xf32>
    %c4_159 = arith.constant 4 : index
    %c0_160 = arith.constant 0 : index
    %272 = vector.load %arg3[%c4_159, %c0_160] : memref<8x512xf32, #tpu.memory_space<vmem>>, vector<1x512xf32>
    %273 = vector.extract_strided_slice %249 {offsets = [32, 0], sizes = [8, 512], strides = [1, 1]} : vector<56x512xf32> to vector<8x512xf32>
    %c511_i32_161 = arith.constant 511 : i32
    %274 = tpu.dynamic_rotate %273 by %c511_i32_161 dim 1 : vector<8x512xf32>, i32 -> vector<8x512xf32>
    %275 = vector.broadcast %272 : vector<1x512xf32> to vector<8x512xf32>
    %276 = arith.mulf %275, %274 : vector<8x512xf32>
    %277 = arith.addf %271, %276 : vector<8x512xf32>
    %c5_162 = arith.constant 5 : index
    %c0_163 = arith.constant 0 : index
    %278 = vector.load %arg3[%c5_162, %c0_163] : memref<8x512xf32, #tpu.memory_space<vmem>>, vector<1x512xf32>
    %279 = vector.extract_strided_slice %249 {offsets = [40, 0], sizes = [8, 512], strides = [1, 1]} : vector<56x512xf32> to vector<8x512xf32>
    %c510_i32 = arith.constant 510 : i32
    %280 = tpu.dynamic_rotate %279 by %c510_i32 dim 1 : vector<8x512xf32>, i32 -> vector<8x512xf32>
    %281 = vector.broadcast %278 : vector<1x512xf32> to vector<8x512xf32>
    %282 = arith.mulf %281, %280 : vector<8x512xf32>
    %283 = arith.addf %277, %282 : vector<8x512xf32>
    %c6_164 = arith.constant 6 : index
    %c0_165 = arith.constant 0 : index
    %284 = vector.load %arg3[%c6_164, %c0_165] : memref<8x512xf32, #tpu.memory_space<vmem>>, vector<1x512xf32>
    %285 = vector.extract_strided_slice %249 {offsets = [48, 0], sizes = [8, 512], strides = [1, 1]} : vector<56x512xf32> to vector<8x512xf32>
    %c509_i32 = arith.constant 509 : i32
    %286 = tpu.dynamic_rotate %285 by %c509_i32 dim 1 : vector<8x512xf32>, i32 -> vector<8x512xf32>
    %287 = vector.broadcast %284 : vector<1x512xf32> to vector<8x512xf32>
    %288 = arith.mulf %287, %286 : vector<8x512xf32>
    %289 = arith.addf %283, %288 : vector<8x512xf32>
    %cst_166 = arith.constant 0.000000e+00 : f32
    %290 = vector.broadcast %cst_166 : f32 to vector<8x512xf32>
    %291 = arith.subf %290, %289 : vector<8x512xf32>
    %292 = math.exp %291 : vector<8x512xf32>
    %cst_167 = arith.constant 1.000000e+00 : f32
    %293 = vector.broadcast %cst_167 : f32 to vector<8x512xf32>
    %294 = arith.addf %293, %292 : vector<8x512xf32>
    %295 = tpu.reciprocal %294 {approx = true} : vector<8x512xf32> -> vector<8x512xf32>
    %296 = vector.extract_strided_slice %295 {offsets = [0, 0], sizes = [1, 512], strides = [1, 1]} : vector<8x512xf32> to vector<1x512xf32>
    %297 = vector.broadcast %296 : vector<1x512xf32> to vector<8x512xf32>
    %298 = arith.mulf %41, %297 : vector<8x512xf32>
    %299 = vector.extract_strided_slice %295 {offsets = [1, 0], sizes = [1, 512], strides = [1, 1]} : vector<8x512xf32> to vector<1x512xf32>
    %300 = vector.broadcast %299 : vector<1x512xf32> to vector<8x512xf32>
    %301 = arith.mulf %106, %300 : vector<8x512xf32>
    %302 = arith.addf %298, %301 : vector<8x512xf32>
    %303 = vector.extract_strided_slice %295 {offsets = [2, 0], sizes = [1, 512], strides = [1, 1]} : vector<8x512xf32> to vector<1x512xf32>
    %304 = vector.broadcast %303 : vector<1x512xf32> to vector<8x512xf32>
    %305 = arith.mulf %171, %304 : vector<8x512xf32>
    %306 = arith.addf %302, %305 : vector<8x512xf32>
    %307 = tpu.concatenate %40, %306 in 0 : vector<8x512xf32>, vector<8x512xf32> -> vector<16x512xf32>
    %cst_168 = arith.constant 0.000000e+00 : f32
    %308 = vector.broadcast %cst_168 : f32 to vector<16x512xf32>
    %309 = arith.subf %308, %307 : vector<16x512xf32>
    %310 = math.exp %309 : vector<16x512xf32>
    %cst_169 = arith.constant 1.000000e+00 : f32
    %311 = vector.broadcast %cst_169 : f32 to vector<16x512xf32>
    %312 = arith.addf %311, %310 : vector<16x512xf32>
    %313 = tpu.reciprocal %312 {approx = true} : vector<16x512xf32> -> vector<16x512xf32>
    %314 = arith.mulf %307, %313 : vector<16x512xf32>
    %315 = arith.mulf %39, %314 : vector<16x512xf32>
    %c0_170 = arith.constant 0 : index
    %c0_171 = arith.constant 0 : index
    %316 = vector.load %arg12[%c0_170, %c0_171] : memref<16x16xbf16, #tpu.memory_space<vmem>>, vector<16x16xbf16>
    %317 = arith.truncf %315 : vector<16x512xf32> to vector<16x512xbf16>
    %cst_172 = arith.constant dense<0.000000e+00> : vector<16x512xf32>
    %318 = tpu.matmul %316, %317, %cst_172 {dimension_numbers = #tpu.dot_dimension_numbers<[1], [0], [0], [1], [0, 0, 1, 1], [], []>} : vector<16x16xbf16>, vector<16x512xbf16>, vector<16x512xf32> -> vector<16x512xf32>
    %319 = arith.addf %0, %318 : vector<16x512xf32>
    %c0_173 = arith.constant 0 : index
    %c0_174 = arith.constant 0 : index
    %320 = vector.load %arg13[%c0_173, %c0_174] : memref<16x1xf32, #tpu.memory_space<vmem>>, vector<16x1xf32>
    %321 = vector.broadcast %320 : vector<16x1xf32> to vector<16x512xf32>
    %322 = arith.addf %319, %321 : vector<16x512xf32>
    %c0_175 = arith.constant 0 : index
    %c0_176 = arith.constant 0 : index
    %323 = vector.load %arg14[%c0_175, %c0_176] : memref<16x512xf32, #tpu.memory_space<vmem>>, vector<16x512xf32>
    tpu.vector_store %arg14[%c0_175, %c0_176], %322 {strides = array<i32>} : memref<16x512xf32, #tpu.memory_space<vmem>>, vector<16x512xf32>,
    return
  }
  func.func @transform_0(%arg0: i32) -> (i32, i32) {
    %c0_i32 = arith.constant 0 : i32
    %c0_i32_0 = arith.constant 0 : i32
    return %c0_i32, %arg0 : i32, i32
  }
  func.func @transform_1(%arg0: i32) -> (i32, i32) {
    %c0_i32 = arith.constant 0 : i32
    %c0_i32_0 = arith.constant 0 : i32
    %c0_i32_1 = arith.constant 0 : i32
    return %c0_i32, %c0_i32_0 : i32, i32
  }
  func.func @transform_2(%arg0: i32) -> (i32, i32) {
    %c0_i32 = arith.constant 0 : i32
    %c0_i32_0 = arith.constant 0 : i32
    %c0_i32_1 = arith.constant 0 : i32
    return %c0_i32, %c0_i32_0 : i32, i32
  }
  func.func @transform_3(%arg0: i32) -> (i32, i32, i32) {
    %c0_i32 = arith.constant 0 : i32
    %c0_i32_0 = arith.constant 0 : i32
    %c0_i32_1 = arith.constant 0 : i32
    %c0_i32_2 = arith.constant 0 : i32
    return %c0_i32, %c0_i32_0, %c0_i32_1 : i32, i32, i32
  }
  func.func @transform_4(%arg0: i32) -> (i32, i32) {
    %c0_i32 = arith.constant 0 : i32
    %c0_i32_0 = arith.constant 0 : i32
    %c0_i32_1 = arith.constant 0 : i32
    return %c0_i32, %c0_i32_0 : i32, i32
  }
  func.func @transform_5(%arg0: i32) -> (i32, i32, i32) {
    %c0_i32 = arith.constant 0 : i32
    %c0_i32_0 = arith.constant 0 : i32
    %c0_i32_1 = arith.constant 0 : i32
    %c0_i32_2 = arith.constant 0 : i32
    return %c0_i32, %c0_i32_0, %c0_i32_1 : i32, i32, i32
  }
  func.func @transform_6(%arg0: i32) -> (i32, i32) {
    %c0_i32 = arith.constant 0 : i32
    %c0_i32_0 = arith.constant 0 : i32
    %c0_i32_1 = arith.constant 0 : i32
    return %c0_i32, %c0_i32_0 : i32, i32
  }
  func.func @transform_7(%arg0: i32) -> (i32, i32, i32) {
    %c0_i32 = arith.constant 0 : i32
    %c0_i32_0 = arith.constant 0 : i32
    %c0_i32_1 = arith.constant 0 : i32
    %c0_i32_2 = arith.constant 0 : i32
    return %c0_i32, %c0_i32_0, %c0_i32_1 : i32, i32, i32
  }
  func.func @transform_8(%arg0: i32) -> (i32, i32) {
    %c0_i32 = arith.constant 0 : i32
    %c0_i32_0 = arith.constant 0 : i32
    %c0_i32_1 = arith.constant 0 : i32
    return %c0_i32, %c0_i32_0 : i32, i32
  }
  func.func @transform_9(%arg0: i32) -> (i32, i32, i32) {
    %c0_i32 = arith.constant 0 : i32
    %c0_i32_0 = arith.constant 0 : i32
    %c0_i32_1 = arith.constant 0 : i32
    %c0_i32_2 = arith.constant 0 : i32
    return %c0_i32, %c0_i32_0, %c0_i32_1 : i32, i32, i32
  }
  func.func @transform_10(%arg0: i32) -> (i32, i32) {
    %c0_i32 = arith.constant 0 : i32
    %c0_i32_0 = arith.constant 0 : i32
    %c0_i32_1 = arith.constant 0 : i32
    return %c0_i32, %c0_i32_0 : i32, i32
  }
  func.func @transform_11(%arg0: i32) -> (i32, i32) {
    %c0_i32 = arith.constant 0 : i32
    %c0_i32_0 = arith.constant 0 : i32
    %c0_i32_1 = arith.constant 0 : i32
    return %c0_i32, %c0_i32_0 : i32, i32
  }
  func.func @transform_12(%arg0: i32) -> (i32, i32) {
    %c0_i32 = arith.constant 0 : i32
    %c0_i32_0 = arith.constant 0 : i32
    %c0_i32_1 = arith.constant 0 : i32
    return %c0_i32, %c0_i32_0 : i32, i32
  }
  func.func @transform_13(%arg0: i32) -> (i32, i32) {
    %c0_i32 = arith.constant 0 : i32
    %c0_i32_0 = arith.constant 0 : i32
    return %c0_i32, %arg0 : i32, i32
  }
}

</mosaic_0001>

<llo_original>
// kernel: tpu_custom_call.1
$region0: #{tpu_custom_call.1}
  #allocation0 [shape = 'u32[]', space=smem, size = 0x4, offset = 0x4, fixed_abs, tag = 'smem constant byte address 0x4 - core index']
  #allocation1 [shape = 'u32[144,128]{1,0:T(1,128)}', space=vmem, size = 0x12000, scoped, tag = 'internal scratch']
  %s0 = inlined_call_operand.vmem [shape: f32[16,512], index: 0, kind: input, shape index: {}]
  %s1 = inlined_call_operand.vmem [shape: f32[8,512], index: 1, kind: input, shape index: {}]
  %s2 = inlined_call_operand.vmem [shape: f32[8,512], index: 2, kind: input, shape index: {}]
  %s3 = inlined_call_operand.vmem [shape: bf16[3,64,16], index: 3, kind: input, shape index: {}]
  %s4 = inlined_call_operand.vmem [shape: f32[64,1], index: 4, kind: input, shape index: {}]
  %s5 = inlined_call_operand.vmem [shape: bf16[7,56,8], index: 5, kind: input, shape index: {}]
  %s6 = inlined_call_operand.vmem [shape: f32[8,1], index: 6, kind: input, shape index: {}]
  %s7 = inlined_call_operand.vmem [shape: f32[9,8,1], index: 7, kind: input, shape index: {}]
  %s8 = inlined_call_operand.vmem [shape: f32[8,1], index: 8, kind: input, shape index: {}]
  %s9 = inlined_call_operand.vmem [shape: f32[9,8,1], index: 9, kind: input, shape index: {}]
  %s10 = inlined_call_operand.vmem [shape: f32[8,1], index: 10, kind: input, shape index: {}]
  %s11 = inlined_call_operand.vmem [shape: bf16[16,16], index: 11, kind: input, shape index: {}]
  %s12 = inlined_call_operand.vmem [shape: f32[16,1], index: 12, kind: input, shape index: {}]
  %s13 = inlined_call_operand.hbm [shape: f32[16,512], index: 13, kind: output, shape index: {}]
  %s14 = sld [smem:[#allocation0]]
  $region62: #{tpu_custom_call.1} parent=0
    _
  %s16 = ssub.s32 1, %s14
  %s17 = scalar_select 0, %s16, %s14
  $region1: #{tpu_custom_call.1} parent=0
    #allocation2 [shape = 'u8[32768]{0}', space=vmem, size = 0x8000, scoped, tag = 'output window, operand 0, single buffered']
    #allocation3 [shape = 's32[1]{0}', space=sflag, size = 0x4, scoped, tag = 'scoped memory for tpu_custom_call.1']
    %18 = vsyncpa [#allocation3], 0
    // Predicated region
    $region2: #{tpu_custom_call.1} parent=1 // pred_check
      _
    $region3: #{tpu_custom_call.1} parent=1 // pred_check_branch
      %20 = sbr.rel (0) target = $region5
    $region4: #{tpu_custom_call.1} parent=1 // pred_region
      _
    $region5: #{tpu_custom_call.1} parent=1 // pred_fallthru
      _
    // Predicated region
    $region6: #{tpu_custom_call.1} parent=1 // pred_check
      _
    $region7: #{tpu_custom_call.1} parent=1 // pred_check_branch
      %22 = sbr.rel (0) target = $region9
    $region8: #{tpu_custom_call.1} parent=1 // pred_region
      _
    $region9: #{tpu_custom_call.1} parent=1 // pred_fallthru
      _
    // Predicated region
    $region10: #{tpu_custom_call.1} parent=1 // pred_check
      _
    $region11: #{tpu_custom_call.1} parent=1 // pred_check_branch
      %24 = sbr.rel (0) target = $region13
    $region12: #{tpu_custom_call.1} parent=1 // pred_region
      _
    $region13: #{tpu_custom_call.1} parent=1 // pred_fallthru
      _
    // Predicated region
    $region14: #{tpu_custom_call.1} parent=1 // pred_check
      _
    $region15: #{tpu_custom_call.1} parent=1 // pred_check_branch
      %26 = sbr.rel (0) target = $region17
    $region16: #{tpu_custom_call.1} parent=1 // pred_region
      _
    $region17: #{tpu_custom_call.1} parent=1 // pred_fallthru
      _
    // Predicated region
    $region18: #{tpu_custom_call.1} parent=1 // pred_check
      _
    $region19: #{tpu_custom_call.1} parent=1 // pred_check_branch
      %28 = sbr.rel (0) target = $region21
    $region20: #{tpu_custom_call.1} parent=1 // pred_region
      _
    $region21: #{tpu_custom_call.1} parent=1 // pred_fallthru
      _
    // Predicated region
    $region22: #{tpu_custom_call.1} parent=1 // pred_check
      _
    $region23: #{tpu_custom_call.1} parent=1 // pred_check_branch
      %30 = sbr.rel (0) target = $region25
    $region24: #{tpu_custom_call.1} parent=1 // pred_region
      _
    $region25: #{tpu_custom_call.1} parent=1 // pred_fallthru
      _
    // Predicated region
    $region26: #{tpu_custom_call.1} parent=1 // pred_check
      _
    $region27: #{tpu_custom_call.1} parent=1 // pred_check_branch
      %32 = sbr.rel (0) target = $region29
    $region28: #{tpu_custom_call.1} parent=1 // pred_region
      _
    $region29: #{tpu_custom_call.1} parent=1 // pred_fallthru
      _
    // Predicated region
    $region30: #{tpu_custom_call.1} parent=1 // pred_check
      _
    $region31: #{tpu_custom_call.1} parent=1 // pred_check_branch
      %34 = sbr.rel (0) target = $region33
    $region32: #{tpu_custom_call.1} parent=1 // pred_region
      _
    $region33: #{tpu_custom_call.1} parent=1 // pred_fallthru
      _
    // Predicated region
    $region34: #{tpu_custom_call.1} parent=1 // pred_check
      _
    $region35: #{tpu_custom_call.1} parent=1 // pred_check_branch
      %36 = sbr.rel (0) target = $region37
    $region36: #{tpu_custom_call.1} parent=1 // pred_region
      _
    $region37: #{tpu_custom_call.1} parent=1 // pred_fallthru
      _
    // Predicated region
    $region38: #{tpu_custom_call.1} parent=1 // pred_check
      _
    $region39: #{tpu_custom_call.1} parent=1 // pred_check_branch
      %38 = sbr.rel (0) target = $region41
    $region40: #{tpu_custom_call.1} parent=1 // pred_region
      _
    $region41: #{tpu_custom_call.1} parent=1 // pred_fallthru
      _
    // Predicated region
    $region42: #{tpu_custom_call.1} parent=1 // pred_check
      _
    $region43: #{tpu_custom_call.1} parent=1 // pred_check_branch
      %40 = sbr.rel (0) target = $region45
    $region44: #{tpu_custom_call.1} parent=1 // pred_region
      _
    $region45: #{tpu_custom_call.1} parent=1 // pred_fallthru
      _
    // Predicated region
    $region46: #{tpu_custom_call.1} parent=1 // pred_check
      _
    $region47: #{tpu_custom_call.1} parent=1 // pred_check_branch
      %42 = sbr.rel (0) target = $region49
    $region48: #{tpu_custom_call.1} parent=1 // pred_region
      _
    $region49: #{tpu_custom_call.1} parent=1 // pred_fallthru
      _
    // Predicated region
    $region50: #{tpu_custom_call.1} parent=1 // pred_check
      _
    $region51: #{tpu_custom_call.1} parent=1 // pred_check_branch
      %44 = sbr.rel (0) target = $region53
    $region52: #{tpu_custom_call.1} parent=1 // pred_region
      _
    $region53: #{tpu_custom_call.1} parent=1 // pred_fallthru
      _
    %v46 = vld [vmem:[%s0] sm:$0xff]
    %v47 = vld [vmem:[%s0 + $0x8] sm:$0xff]
    %v48 = vld [vmem:[%s0 + $0x10] sm:$0xff]
    %v49 = vld [vmem:[%s0 + $0x18] sm:$0xff]
    %v50 = vld [vmem:[%s0 + $0x20] sm:$0xff]
    %v51 = vld [vmem:[%s0 + $0x28] sm:$0xff]
    %v52 = vld [vmem:[%s0 + $0x30] sm:$0xff]
    %v53 = vld [vmem:[%s0 + $0x38] sm:$0xff]
    %v54 = vld [vmem:[%s4] sm:$0xff]
    %v55 = vld [vmem:[%s4 + $0x8] sm:$0xff]
    %v56 = vld [vmem:[%s4 + $0x10] sm:$0xff]
    %v57 = vld [vmem:[%s4 + $0x18] sm:$0xff]
    %v58 = vld [vmem:[%s4 + $0x20] sm:$0xff]
    %v59 = vld [vmem:[%s4 + $0x28] sm:$0xff]
    %v60 = vld [vmem:[%s4 + $0x30] sm:$0xff]
    %v61 = vld [vmem:[%s4 + $0x38] sm:$0xff]
    %s62 = scalar_lea.vmem %s1, 2
    %v63 = vld [vmem:[%s62] ss:$8 sm:$0xf]
    %64 = vrot.lane.b32.xlu0 %v46, 16
    %v65 = vpop.permute.xlu0 %64
    %66 = vrot.lane.b32.xlu0 %v50, 16
    %v67 = vpop.permute.xlu0 %66
    %68 = vrot.lane.b32.xlu0 %v47, 16
    %v69 = vpop.permute.xlu0 %68
    %70 = vrot.lane.b32.xlu0 %v51, 16
    %v71 = vpop.permute.xlu0 %70
    %72 = vrot.lane.b32.xlu0 %v48, 16
    %v73 = vpop.permute.xlu0 %72
    %74 = vrot.lane.b32.xlu0 %v52, 16
    %v75 = vpop.permute.xlu0 %74
    %76 = vrot.lane.b32.xlu0 %v49, 16
    %v77 = vpop.permute.xlu0 %76
    %78 = vrot.lane.b32.xlu0 %v53, 16
    %v79 = vpop.permute.xlu0 %78
    %v80 = vlaneseq
    %v81 = vand.u32 %v80, 127
    %vm82 = vcmp.lt.s32.totalorder %v81, 16
    %v83 = vsel %vm82, %v73, %v77
    %v84 = vsel %vm82, %v75, %v79
    %v85 = vsel %vm82, %v69, %v73
    %v86 = vsel %vm82, %v71, %v75
    %v87 = vsel %vm82, %v65, %v69
    %v88 = vsel %vm82, %v67, %v71
    %v89 = vsel %vm82, %v77, %v65
    %v90 = vsel %vm82, %v79, %v67
    %v92 = vlaneseq
    %v93 = vshrl.u32 %v92, 7
    %v94 = vsub.s32 0, %v93
    %v95 = vrot.slane %v63, %v94
    %v96 = vlaneseq
    %v97 = vshrl.u32 %v96, 7
    %v98 = vsub.s32 1, %v97
    %v99 = vrot.slane %v63, %v98
    %v100 = vlaneseq
    %v101 = vshrl.u32 %v100, 7
    %v102 = vsub.s32 2, %v101
    %v103 = vrot.slane %v63, %v102
    %v104 = vlaneseq
    %v105 = vshrl.u32 %v104, 7
    %v106 = vsub.s32 3, %v105
    %v107 = vrot.slane %v63, %v106
    %v112 = vmul.f32 %v95, %v89
    %v113 = vmul.f32 %v99, %v87
    %v114 = vmul.f32 %v103, %v85
    %v115 = vmul.f32 %v107, %v83
    %v116 = vmul.f32 %v95, %v90
    %v117 = vmul.f32 %v99, %v88
    %v118 = vmul.f32 %v103, %v86
    %v119 = vmul.f32 %v107, %v84
    %v120 = vpack.c.bf16 %v116, %v112
    %v121 = vpack.c.bf16 %v117, %v113
    %v122 = vpack.c.bf16 %v118, %v114
    %v123 = vpack.c.bf16 %v119, %v115
    %v124 = vld [vmem:[%s3] sm:$0xf]
    %v125 = vld [vmem:[%s3 + $0x4] sm:$0xf]
    %v126 = vld [vmem:[%s3 + $0x8] sm:$0xf]
    %v127 = vld [vmem:[%s3 + $0xc] sm:$0xf]
    %v128 = vld [vmem:[%s3 + $0x10] sm:$0xf]
    %v129 = vld [vmem:[%s3 + $0x14] sm:$0xf]
    %v130 = vld [vmem:[%s3 + $0x18] sm:$0xf]
    %v131 = vld [vmem:[%s3 + $0x1c] sm:$0xf]
    %v140 = vunpack.c.l.b16 %v124
    %v141 = vunpack.c.l.b16 %v125
    %v142 = vunpack.c.l.b16 %v126
    %v143 = vunpack.c.l.b16 %v127
    %v144 = vunpack.c.l.b16 %v128
    %v145 = vunpack.c.l.b16 %v129
    %v146 = vunpack.c.l.b16 %v130
    %v147 = vunpack.c.l.b16 %v131
    %v148 = vpack.c.b16 %v141, %v140
    %v149 = vpack.c.b16 %v143, %v142
    %v150 = vpack.c.b16 %v145, %v144
    %v151 = vpack.c.b16 %v147, %v146
    %vm152 = vcmask 130048
    %v154 = vsel %vm152, %v148, 0
    %v157 = vsel %vm152, %v149, 0
    %v160 = vsel %vm152, %v150, 0
    %v163 = vsel %vm152, %v151, 0
    %165 = vmatprep.subr.bf16.mxu0 %v121
    %166 = vmatpush1.bf16.msra.mxu0 %v120
    %167 = vmatprep.subr.bf16.mxu0 0
    %168 = vmatpush1.bf16.msra.mxu0 0
    %169 = vmatprep.subr.bf16.mxu0 0
    %170 = vmatpush1.bf16.msra.mxu0 0
    %171 = vmatprep.subr.bf16.mxu0 0
    %172 = vmatpush1.bf16.msra.mxu0 0
    %173 = vmatprep.subr.bf16.mxu0 0
    %174 = vmatpush1.bf16.msra.mxu0 0
    %175 = vmatprep.subr.bf16.mxu0 0
    %176 = vmatpush1.bf16.msra.mxu0 0
    %177 = vmatprep.subr.bf16.mxu0 0
    %178 = vmatpush1.bf16.msra.mxu0 0
    %179 = vmatprep.subr.bf16.mxu0 0
    %180 = vmatpush1.bf16.msra.mxu0 0
    %181 = vmatprep.subr.bf16.mxu0 0
    %182 = vmatpush1.bf16.msra.mxu0 0
    %183 = vmatprep.subr.bf16.mxu0 0
    %184 = vmatpush1.bf16.msra.mxu0 0
    %185 = vmatprep.subr.bf16.mxu0 0
    %186 = vmatpush1.bf16.msra.mxu0 0
    %187 = vmatprep.subr.bf16.mxu0 0
    %188 = vmatpush1.bf16.msra.mxu0 0
    %189 = vmatprep.subr.bf16.mxu0 0
    %190 = vmatpush1.bf16.msra.mxu0 0
    %191 = vmatprep.subr.bf16.mxu0 0
    %192 = vmatpush1.bf16.msra.mxu0 0
    %193 = vmatprep.subr.bf16.mxu0 0
    %194 = vmatpush1.bf16.msra.mxu0 0
    %195 = vmatprep.subr.bf16.mxu0 0
    %196 = vmatpush1.bf16.msra.mxu0 0
    %197 = vmatprep.mubr.bf16.mxu0 0
    %198 = vmatmul.mubr.bf16.gmra.mrb[0].mxu0 %v154
    %v199 = vpop.f32.mrb[0].mxu0
    %v200 = vadd.f32 0.0, %v199
    %v201 = vpop.f32.mrb[0].mxu0
    %v202 = vadd.f32 0.0, %v201
    %v203 = vpop.f32.mrb[0].mxu0
    %v204 = vadd.f32 0.0, %v203
    %v205 = vpop.f32.mrb[0].mxu0
    %v206 = vadd.f32 0.0, %v205
    %207 = vmatprep.mubr.bf16.mxu0 0
    %208 = vmatmul.mubr.bf16.gmra.mrb[0].mxu0 %v157
    %v209 = vpop.f32.mrb[0].mxu0
    %v210 = vadd.f32 0.0, %v209
    %v211 = vpop.f32.mrb[0].mxu0
    %v212 = vadd.f32 0.0, %v211
    %v213 = vpop.f32.mrb[0].mxu0
    %v214 = vadd.f32 0.0, %v213
    %v215 = vpop.f32.mrb[0].mxu0
    %v216 = vadd.f32 0.0, %v215
    %217 = vmatprep.mubr.bf16.mxu0 0
    %218 = vmatmul.mubr.bf16.gmra.mrb[0].mxu0 %v160
    %v219 = vpop.f32.mrb[0].mxu0
    %v220 = vadd.f32 0.0, %v219
    %v221 = vpop.f32.mrb[0].mxu0
    %v222 = vadd.f32 0.0, %v221
    %v223 = vpop.f32.mrb[0].mxu0
    %v224 = vadd.f32 0.0, %v223
    %v225 = vpop.f32.mrb[0].mxu0
    %v226 = vadd.f32 0.0, %v225
    %227 = vmatprep.mubr.bf16.mxu0 0
    %228 = vmatmul.mubr.bf16.gmra.mrb[0].mxu0 %v163
    %v229 = vpop.f32.mrb[0].mxu0
    %v230 = vadd.f32 0.0, %v229
    %v231 = vpop.f32.mrb[0].mxu0
    %v232 = vadd.f32 0.0, %v231
    %v233 = vpop.f32.mrb[0].mxu0
    %v234 = vadd.f32 0.0, %v233
    %v235 = vpop.f32.mrb[0].mxu0
    %v236 = vadd.f32 0.0, %v235
    %237 = vdwg.mxu0
    %238 = vmatprep.subr.bf16.mxu0 %v123
    %239 = vmatpush1.bf16.msra.mxu0 %v122
    %240 = vmatprep.subr.bf16.mxu0 0
    %241 = vmatpush1.bf16.msra.mxu0 0
    %242 = vmatprep.subr.bf16.mxu0 0
    %243 = vmatpush1.bf16.msra.mxu0 0
    %244 = vmatprep.subr.bf16.mxu0 0
    %245 = vmatpush1.bf16.msra.mxu0 0
    %246 = vmatprep.subr.bf16.mxu0 0
    %247 = vmatpush1.bf16.msra.mxu0 0
    %248 = vmatprep.subr.bf16.mxu0 0
    %249 = vmatpush1.bf16.msra.mxu0 0
    %250 = vmatprep.subr.bf16.mxu0 0
    %251 = vmatpush1.bf16.msra.mxu0 0
    %252 = vmatprep.subr.bf16.mxu0 0
    %253 = vmatpush1.bf16.msra.mxu0 0
    %254 = vmatprep.subr.bf16.mxu0 0
    %255 = vmatpush1.bf16.msra.mxu0 0
    %256 = vmatprep.subr.bf16.mxu0 0
    %257 = vmatpush1.bf16.msra.mxu0 0
    %258 = vmatprep.subr.bf16.mxu0 0
    %259 = vmatpush1.bf16.msra.mxu0 0
    %260 = vmatprep.subr.bf16.mxu0 0
    %261 = vmatpush1.bf16.msra.mxu0 0
    %262 = vmatprep.subr.bf16.mxu0 0
    %263 = vmatpush1.bf16.msra.mxu0 0
    %264 = vmatprep.subr.bf16.mxu0 0
    %265 = vmatpush1.bf16.msra.mxu0 0
    %266 = vmatprep.subr.bf16.mxu0 0
    %267 = vmatpush1.bf16.msra.mxu0 0
    %268 = vmatprep.subr.bf16.mxu0 0
    %269 = vmatpush1.bf16.msra.mxu0 0
    %270 = vmatprep.mubr.bf16.mxu0 0
    %271 = vmatmul.mubr.bf16.gmra.mrb[0].mxu0 %v154
    %v272 = vpop.f32.mrb[0].mxu0
    %v273 = vadd.f32 0.0, %v272
    %v274 = vpop.f32.mrb[0].mxu0
    %v275 = vadd.f32 0.0, %v274
    %v276 = vpop.f32.mrb[0].mxu0
    %v277 = vadd.f32 0.0, %v276
    %v278 = vpop.f32.mrb[0].mxu0
    %v279 = vadd.f32 0.0, %v278
    %280 = vmatprep.mubr.bf16.mxu0 0
    %281 = vmatmul.mubr.bf16.gmra.mrb[0].mxu0 %v157
    %v282 = vpop.f32.mrb[0].mxu0
    %v283 = vadd.f32 0.0, %v282
    %v284 = vpop.f32.mrb[0].mxu0
    %v285 = vadd.f32 0.0, %v284
    %v286 = vpop.f32.mrb[0].mxu0
    %v287 = vadd.f32 0.0, %v286
    %v288 = vpop.f32.mrb[0].mxu0
    %v289 = vadd.f32 0.0, %v288
    %290 = vmatprep.mubr.bf16.mxu0 0
    %291 = vmatmul.mubr.bf16.gmra.mrb[0].mxu0 %v160
    %v292 = vpop.f32.mrb[0].mxu0
    %v293 = vadd.f32 0.0, %v292
    %v294 = vpop.f32.mrb[0].mxu0
    %v295 = vadd.f32 0.0, %v294
    %v296 = vpop.f32.mrb[0].mxu0
    %v297 = vadd.f32 0.0, %v296
    %v298 = vpop.f32.mrb[0].mxu0
    %v299 = vadd.f32 0.0, %v298
    %300 = vmatprep.mubr.bf16.mxu0 0
    %301 = vmatmul.mubr.bf16.gmra.mrb[0].mxu0 %v163
    %v302 = vpop.f32.mrb[0].mxu0
    %v303 = vadd.f32 0.0, %v302
    %v304 = vpop.f32.mrb[0].mxu0
    %v305 = vadd.f32 0.0, %v304
    %v306 = vpop.f32.mrb[0].mxu0
    %v307 = vadd.f32 0.0, %v306
    %v308 = vpop.f32.mrb[0].mxu0
    %v309 = vadd.f32 0.0, %v308
    %310 = vdwg.mxu0
    %312 = vset.pattern.permute.xlu0 0
    %313 = vperm.xlu0 %312, %v54
    %v314 = vpop.permute.xlu0 %313
    %317 = vset.pattern.permute.xlu0 0
    %318 = vperm.xlu0 %317, %v55
    %v319 = vpop.permute.xlu0 %318
    %322 = vset.pattern.permute.xlu0 0
    %323 = vperm.xlu0 %322, %v56
    %v324 = vpop.permute.xlu0 %323
    %327 = vset.pattern.permute.xlu0 0
    %328 = vperm.xlu0 %327, %v57
    %v329 = vpop.permute.xlu0 %328
    %332 = vset.pattern.permute.xlu0 0
    %333 = vperm.xlu0 %332, %v58
    %v334 = vpop.permute.xlu0 %333
    %337 = vset.pattern.permute.xlu0 0
    %338 = vperm.xlu0 %337, %v59
    %v339 = vpop.permute.xlu0 %338
    %342 = vset.pattern.permute.xlu0 0
    %343 = vperm.xlu0 %342, %v60
    %v344 = vpop.permute.xlu0 %343
    %347 = vset.pattern.permute.xlu0 0
    %348 = vperm.xlu0 %347, %v61
    %v349 = vpop.permute.xlu0 %348
    %v351 = vadd.f32 %v314, %v200
    %v352 = vadd.f32 %v314, %v202
    %v353 = vadd.f32 %v314, %v273
    %v354 = vadd.f32 %v314, %v275
    %v355 = vadd.f32 %v319, %v204
    %v356 = vadd.f32 %v319, %v206
    %v357 = vadd.f32 %v319, %v277
    %v358 = vadd.f32 %v319, %v279
    %v359 = vadd.f32 %v324, %v210
    %v360 = vadd.f32 %v324, %v212
    %v361 = vadd.f32 %v324, %v283
    %v362 = vadd.f32 %v324, %v285
    %v363 = vadd.f32 %v329, %v214
    %v364 = vadd.f32 %v329, %v216
    %v365 = vadd.f32 %v329, %v287
    %v366 = vadd.f32 %v329, %v289
    %v367 = vadd.f32 %v334, %v220
    %v368 = vadd.f32 %v334, %v222
    %v369 = vadd.f32 %v334, %v293
    %v370 = vadd.f32 %v334, %v295
    %v371 = vadd.f32 %v339, %v224
    %v372 = vadd.f32 %v339, %v226
    %v373 = vadd.f32 %v339, %v297
    %v374 = vadd.f32 %v339, %v299
    %v375 = vadd.f32 %v344, %v230
    %v376 = vadd.f32 %v344, %v232
    %v377 = vadd.f32 %v344, %v303
    %v378 = vadd.f32 %v344, %v305
    %v379 = vadd.f32 %v349, %v234
    %v380 = vadd.f32 %v349, %v236
    %v381 = vadd.f32 %v349, %v307
    %v382 = vadd.f32 %v349, %v309
    %v383 = vpack.c.bf16 %v50, %v46
    %v384 = vpack.c.bf16 %v51, %v47
    %v385 = vpack.c.bf16 %v52, %v48
    %v386 = vpack.c.bf16 %v53, %v49
    %s387 = scalar_lea.vmem %s3, 32
    %v388 = vld [vmem:[%s387] sm:$0xf]
    %v389 = vld [vmem:[%s387 + $0x4] sm:$0xf]
    %v390 = vld [vmem:[%s387 + $0x8] sm:$0xf]
    %v391 = vld [vmem:[%s387 + $0xc] sm:$0xf]
    %v392 = vld [vmem:[%s387 + $0x10] sm:$0xf]
    %v393 = vld [vmem:[%s387 + $0x14] sm:$0xf]
    %v394 = vld [vmem:[%s387 + $0x18] sm:$0xf]
    %v395 = vld [vmem:[%s387 + $0x1c] sm:$0xf]
    %v404 = vunpack.c.l.b16 %v388
    %v405 = vunpack.c.l.b16 %v389
    %v406 = vunpack.c.l.b16 %v390
    %v407 = vunpack.c.l.b16 %v391
    %v408 = vunpack.c.l.b16 %v392
    %v409 = vunpack.c.l.b16 %v393
    %v410 = vunpack.c.l.b16 %v394
    %v411 = vunpack.c.l.b16 %v395
    %v412 = vpack.c.b16 %v405, %v404
    %v413 = vpack.c.b16 %v407, %v406
    %v414 = vpack.c.b16 %v409, %v408
    %v415 = vpack.c.b16 %v411, %v410
    %v417 = vsel %vm152, %v412, 0
    %v420 = vsel %vm152, %v413, 0
    %v423 = vsel %vm152, %v414, 0
    %v426 = vsel %vm152, %v415, 0
    %428 = vmatprep.subr.bf16.mxu0 %v384
    %429 = vmatpush1.bf16.msra.mxu0 %v383
    %430 = vmatprep.subr.bf16.mxu0 0
    %431 = vmatpush1.bf16.msra.mxu0 0
    %432 = vmatprep.subr.bf16.mxu0 0
    %433 = vmatpush1.bf16.msra.mxu0 0
    %434 = vmatprep.subr.bf16.mxu0 0
    %435 = vmatpush1.bf16.msra.mxu0 0
    %436 = vmatprep.subr.bf16.mxu0 0
    %437 = vmatpush1.bf16.msra.mxu0 0
    %438 = vmatprep.subr.bf16.mxu0 0
    %439 = vmatpush1.bf16.msra.mxu0 0
    %440 = vmatprep.subr.bf16.mxu0 0
    %441 = vmatpush1.bf16.msra.mxu0 0
    %442 = vmatprep.subr.bf16.mxu0 0
    %443 = vmatpush1.bf16.msra.mxu0 0
    %444 = vmatprep.subr.bf16.mxu0 0
    %445 = vmatpush1.bf16.msra.mxu0 0
    %446 = vmatprep.subr.bf16.mxu0 0
    %447 = vmatpush1.bf16.msra.mxu0 0
    %448 = vmatprep.subr.bf16.mxu0 0
    %449 = vmatpush1.bf16.msra.mxu0 0
    %450 = vmatprep.subr.bf16.mxu0 0
    %451 = vmatpush1.bf16.msra.mxu0 0
    %452 = vmatprep.subr.bf16.mxu0 0
    %453 = vmatpush1.bf16.msra.mxu0 0
    %454 = vmatprep.subr.bf16.mxu0 0
    %455 = vmatpush1.bf16.msra.mxu0 0
    %456 = vmatprep.subr.bf16.mxu0 0
    %457 = vmatpush1.bf16.msra.mxu0 0
    %458 = vmatprep.subr.bf16.mxu0 0
    %459 = vmatpush1.bf16.msra.mxu0 0
    %460 = vmatprep.mubr.bf16.mxu0 0
    %461 = vmatmul.mubr.bf16.gmra.mrb[0].mxu0 %v417
    %v462 = vpop.f32.mrb[0].mxu0
    %v463 = vadd.f32 0.0, %v462
    %v464 = vpop.f32.mrb[0].mxu0
    %v465 = vadd.f32 0.0, %v464
    %v466 = vpop.f32.mrb[0].mxu0
    %v467 = vadd.f32 0.0, %v466
    %v468 = vpop.f32.mrb[0].mxu0
    %v469 = vadd.f32 0.0, %v468
    %470 = vmatprep.mubr.bf16.mxu0 0
    %471 = vmatmul.mubr.bf16.gmra.mrb[0].mxu0 %v420
    %v472 = vpop.f32.mrb[0].mxu0
    %v473 = vadd.f32 0.0, %v472
    %v474 = vpop.f32.mrb[0].mxu0
    %v475 = vadd.f32 0.0, %v474
    %v476 = vpop.f32.mrb[0].mxu0
    %v477 = vadd.f32 0.0, %v476
    %v478 = vpop.f32.mrb[0].mxu0
    %v479 = vadd.f32 0.0, %v478
    %480 = vmatprep.mubr.bf16.mxu0 0
    %481 = vmatmul.mubr.bf16.gmra.mrb[0].mxu0 %v423
    %v482 = vpop.f32.mrb[0].mxu0
    %v483 = vadd.f32 0.0, %v482
    %v484 = vpop.f32.mrb[0].mxu0
    %v485 = vadd.f32 0.0, %v484
    %v486 = vpop.f32.mrb[0].mxu0
    %v487 = vadd.f32 0.0, %v486
    %v488 = vpop.f32.mrb[0].mxu0
    %v489 = vadd.f32 0.0, %v488
    %490 = vmatprep.mubr.bf16.mxu0 0
    %491 = vmatmul.mubr.bf16.gmra.mrb[0].mxu0 %v426
    %v492 = vpop.f32.mrb[0].mxu0
    %v493 = vadd.f32 0.0, %v492
    %v494 = vpop.f32.mrb[0].mxu0
    %v495 = vadd.f32 0.0, %v494
    %v496 = vpop.f32.mrb[0].mxu0
    %v497 = vadd.f32 0.0, %v496
    %v498 = vpop.f32.mrb[0].mxu0
    %v499 = vadd.f32 0.0, %v498
    %500 = vdwg.mxu0
    %501 = vmatprep.subr.bf16.mxu0 %v386
    %502 = vmatpush1.bf16.msra.mxu0 %v385
    %503 = vmatprep.subr.bf16.mxu0 0
    %504 = vmatpush1.bf16.msra.mxu0 0
    %505 = vmatprep.subr.bf16.mxu0 0
    %506 = vmatpush1.bf16.msra.mxu0 0
    %507 = vmatprep.subr.bf16.mxu0 0
    %508 = vmatpush1.bf16.msra.mxu0 0
    %509 = vmatprep.subr.bf16.mxu0 0
    %510 = vmatpush1.bf16.msra.mxu0 0
    %511 = vmatprep.subr.bf16.mxu0 0
    %512 = vmatpush1.bf16.msra.mxu0 0
    %513 = vmatprep.subr.bf16.mxu0 0
    %514 = vmatpush1.bf16.msra.mxu0 0
    %515 = vmatprep.subr.bf16.mxu0 0
    %516 = vmatpush1.bf16.msra.mxu0 0
    %517 = vmatprep.subr.bf16.mxu0 0
    %518 = vmatpush1.bf16.msra.mxu0 0
    %519 = vmatprep.subr.bf16.mxu0 0
    %520 = vmatpush1.bf16.msra.mxu0 0
    %521 = vmatprep.subr.bf16.mxu0 0
    %522 = vmatpush1.bf16.msra.mxu0 0
    %523 = vmatprep.subr.bf16.mxu0 0
    %524 = vmatpush1.bf16.msra.mxu0 0
    %525 = vmatprep.subr.bf16.mxu0 0
    %526 = vmatpush1.bf16.msra.mxu0 0
    %527 = vmatprep.subr.bf16.mxu0 0
    %528 = vmatpush1.bf16.msra.mxu0 0
    %529 = vmatprep.subr.bf16.mxu0 0
    %530 = vmatpush1.bf16.msra.mxu0 0
    %531 = vmatprep.subr.bf16.mxu0 0
    %532 = vmatpush1.bf16.msra.mxu0 0
    %533 = vmatprep.mubr.bf16.mxu0 0
    %534 = vmatmul.mubr.bf16.gmra.mrb[0].mxu0 %v417
    %v535 = vpop.f32.mrb[0].mxu0
    %v536 = vadd.f32 0.0, %v535
    %v537 = vpop.f32.mrb[0].mxu0
    %v538 = vadd.f32 0.0, %v537
    %v539 = vpop.f32.mrb[0].mxu0
    %v540 = vadd.f32 0.0, %v539
    %v541 = vpop.f32.mrb[0].mxu0
    %v542 = vadd.f32 0.0, %v541
    %543 = vmatprep.mubr.bf16.mxu0 0
    %544 = vmatmul.mubr.bf16.gmra.mrb[0].mxu0 %v420
    %v545 = vpop.f32.mrb[0].mxu0
    %v546 = vadd.f32 0.0, %v545
    %v547 = vpop.f32.mrb[0].mxu0
    %v548 = vadd.f32 0.0, %v547
    %v549 = vpop.f32.mrb[0].mxu0
    %v550 = vadd.f32 0.0, %v549
    %v551 = vpop.f32.mrb[0].mxu0
    %v552 = vadd.f32 0.0, %v551
    %553 = vmatprep.mubr.bf16.mxu0 0
    %554 = vmatmul.mubr.bf16.gmra.mrb[0].mxu0 %v423
    %v555 = vpop.f32.mrb[0].mxu0
    %v556 = vadd.f32 0.0, %v555
    %v557 = vpop.f32.mrb[0].mxu0
    %v558 = vadd.f32 0.0, %v557
    %v559 = vpop.f32.mrb[0].mxu0
    %v560 = vadd.f32 0.0, %v559
    %v561 = vpop.f32.mrb[0].mxu0
    %v562 = vadd.f32 0.0, %v561
    %563 = vmatprep.mubr.bf16.mxu0 0
    %564 = vmatmul.mubr.bf16.gmra.mrb[0].mxu0 %v426
    %v565 = vpop.f32.mrb[0].mxu0
    %v566 = vadd.f32 0.0, %v565
    %v567 = vpop.f32.mrb[0].mxu0
    %v568 = vadd.f32 0.0, %v567
    %v569 = vpop.f32.mrb[0].mxu0
    %v570 = vadd.f32 0.0, %v569
    %v571 = vpop.f32.mrb[0].mxu0
    %v572 = vadd.f32 0.0, %v571
    %573 = vdwg.mxu0
    %v574 = vadd.f32 %v351, %v463
    %v575 = vadd.f32 %v352, %v465
    %v576 = vadd.f32 %v353, %v536
    %v577 = vadd.f32 %v354, %v538
    %v578 = vadd.f32 %v355, %v467
    %v579 = vadd.f32 %v356, %v469
    %v580 = vadd.f32 %v357, %v540
    %v581 = vadd.f32 %v358, %v542
    %v582 = vadd.f32 %v359, %v473
    %v583 = vadd.f32 %v360, %v475
    %v584 = vadd.f32 %v361, %v546
    %v585 = vadd.f32 %v362, %v548
    %v586 = vadd.f32 %v363, %v477
    %v587 = vadd.f32 %v364, %v479
    %v588 = vadd.f32 %v365, %v550
    %v589 = vadd.f32 %v366, %v552
    %v590 = vadd.f32 %v367, %v483
    %v591 = vadd.f32 %v368, %v485
    %v592 = vadd.f32 %v369, %v556
    %v593 = vadd.f32 %v370, %v558
    %v594 = vadd.f32 %v371, %v487
    %v595 = vadd.f32 %v372, %v489
    %v596 = vadd.f32 %v373, %v560
    %v597 = vadd.f32 %v374, %v562
    %v598 = vadd.f32 %v375, %v493
    %v599 = vadd.f32 %v376, %v495
    %v600 = vadd.f32 %v377, %v566
    %v601 = vadd.f32 %v378, %v568
    %v602 = vadd.f32 %v379, %v497
    %v603 = vadd.f32 %v380, %v499
    %v604 = vadd.f32 %v381, %v570
    %v605 = vadd.f32 %v382, %v572
    %s606 = scalar_lea.vmem %s1, 4
    %v607 = vld [vmem:[%s606] ss:$8 sm:$0xf]
    %608 = vrot.lane.b32.xlu0 %v46, 112
    %v609 = vpop.permute.xlu0 %608
    %610 = vrot.lane.b32.xlu0 %v50, 112
    %v611 = vpop.permute.xlu0 %610
    %612 = vrot.lane.b32.xlu0 %v47, 112
    %v613 = vpop.permute.xlu0 %612
    %614 = vrot.lane.b32.xlu0 %v51, 112
    %v615 = vpop.permute.xlu0 %614
    %616 = vrot.lane.b32.xlu0 %v48, 112
    %v617 = vpop.permute.xlu0 %616
    %618 = vrot.lane.b32.xlu0 %v52, 112
    %v619 = vpop.permute.xlu0 %618
    %620 = vrot.lane.b32.xlu0 %v49, 112
    %v621 = vpop.permute.xlu0 %620
    %622 = vrot.lane.b32.xlu0 %v53, 112
    %v623 = vpop.permute.xlu0 %622
    %vm624 = vcmp.lt.s32.totalorder %v81, 112
    %v625 = vsel %vm624, %v617, %v621
    %v626 = vsel %vm624, %v619, %v623
    %v627 = vsel %vm624, %v613, %v617
    %v628 = vsel %vm624, %v615, %v619
    %v629 = vsel %vm624, %v609, %v613
    %v630 = vsel %vm624, %v611, %v615
    %v631 = vsel %vm624, %v621, %v609
    %v632 = vsel %vm624, %v623, %v611
    %v634 = vlaneseq
    %v635 = vshrl.u32 %v634, 7
    %v636 = vsub.s32 0, %v635
    %v637 = vrot.slane %v607, %v636
    %v638 = vlaneseq
    %v639 = vshrl.u32 %v638, 7
    %v640 = vsub.s32 1, %v639
    %v641 = vrot.slane %v607, %v640
    %v642 = vlaneseq
    %v643 = vshrl.u32 %v642, 7
    %v644 = vsub.s32 2, %v643
    %v645 = vrot.slane %v607, %v644
    %v646 = vlaneseq
    %v647 = vshrl.u32 %v646, 7
    %v648 = vsub.s32 3, %v647
    %v649 = vrot.slane %v607, %v648
    %v654 = vmul.f32 %v637, %v629
    %v655 = vmul.f32 %v641, %v627
    %v656 = vmul.f32 %v645, %v625
    %v657 = vmul.f32 %v649, %v631
    %v658 = vmul.f32 %v637, %v630
    %v659 = vmul.f32 %v641, %v628
    %v660 = vmul.f32 %v645, %v626
    %v661 = vmul.f32 %v649, %v632
    %v662 = vpack.c.bf16 %v658, %v654
    %v663 = vpack.c.bf16 %v659, %v655
    %v664 = vpack.c.bf16 %v660, %v656
    %v665 = vpack.c.bf16 %v661, %v657
    %s666 = scalar_lea.vmem %s3, 64
    %v667 = vld [vmem:[%s666] sm:$0xf]
    %v668 = vld [vmem:[%s666 + $0x4] sm:$0xf]
    %v669 = vld [vmem:[%s666 + $0x8] sm:$0xf]
    %v670 = vld [vmem:[%s666 + $0xc] sm:$0xf]
    %v671 = vld [vmem:[%s666 + $0x10] sm:$0xf]
    %v672 = vld [vmem:[%s666 + $0x14] sm:$0xf]
    %v673 = vld [vmem:[%s666 + $0x18] sm:$0xf]
    %v674 = vld [vmem:[%s666 + $0x1c] sm:$0xf]
    %v683 = vunpack.c.l.b16 %v667
    %v684 = vunpack.c.l.b16 %v668
    %v685 = vunpack.c.l.b16 %v669
    %v686 = vunpack.c.l.b16 %v670
    %v687 = vunpack.c.l.b16 %v671
    %v688 = vunpack.c.l.b16 %v672
    %v689 = vunpack.c.l.b16 %v673
    %v690 = vunpack.c.l.b16 %v674
    %v691 = vpack.c.b16 %v684, %v683
    %v692 = vpack.c.b16 %v686, %v685
    %v693 = vpack.c.b16 %v688, %v687
    %v694 = vpack.c.b16 %v690, %v689
    %v696 = vsel %vm152, %v691, 0
    %v699 = vsel %vm152, %v692, 0
    %v702 = vsel %vm152, %v693, 0
    %v705 = vsel %vm152, %v694, 0
    %707 = vmatprep.subr.bf16.mxu0 %v663
    %708 = vmatpush1.bf16.msra.mxu0 %v662
    %709 = vmatprep.subr.bf16.mxu0 0
    %710 = vmatpush1.bf16.msra.mxu0 0
    %711 = vmatprep.subr.bf16.mxu0 0
    %712 = vmatpush1.bf16.msra.mxu0 0
    %713 = vmatprep.subr.bf16.mxu0 0
    %714 = vmatpush1.bf16.msra.mxu0 0
    %715 = vmatprep.subr.bf16.mxu0 0
    %716 = vmatpush1.bf16.msra.mxu0 0
    %717 = vmatprep.subr.bf16.mxu0 0
    %718 = vmatpush1.bf16.msra.mxu0 0
    %719 = vmatprep.subr.bf16.mxu0 0
    %720 = vmatpush1.bf16.msra.mxu0 0
    %721 = vmatprep.subr.bf16.mxu0 0
    %722 = vmatpush1.bf16.msra.mxu0 0
    %723 = vmatprep.subr.bf16.mxu0 0
    %724 = vmatpush1.bf16.msra.mxu0 0
    %725 = vmatprep.subr.bf16.mxu0 0
    %726 = vmatpush1.bf16.msra.mxu0 0
    %727 = vmatprep.subr.bf16.mxu0 0
    %728 = vmatpush1.bf16.msra.mxu0 0
    %729 = vmatprep.subr.bf16.mxu0 0
    %730 = vmatpush1.bf16.msra.mxu0 0
    %731 = vmatprep.subr.bf16.mxu0 0
    %732 = vmatpush1.bf16.msra.mxu0 0
    %733 = vmatprep.subr.bf16.mxu0 0
    %734 = vmatpush1.bf16.msra.mxu0 0
    %735 = vmatprep.subr.bf16.mxu0 0
    %736 = vmatpush1.bf16.msra.mxu0 0
    %737 = vmatprep.subr.bf16.mxu0 0
    %738 = vmatpush1.bf16.msra.mxu0 0
    %739 = vmatprep.mubr.bf16.mxu0 0
    %740 = vmatmul.mubr.bf16.gmra.mrb[0].mxu0 %v696
    %v741 = vpop.f32.mrb[0].mxu0
    %v742 = vadd.f32 0.0, %v741
    %v743 = vpop.f32.mrb[0].mxu0
    %v744 = vadd.f32 0.0, %v743
    %v745 = vpop.f32.mrb[0].mxu0
    %v746 = vadd.f32 0.0, %v745
    %v747 = vpop.f32.mrb[0].mxu0
    %v748 = vadd.f32 0.0, %v747
    %749 = vmatprep.mubr.bf16.mxu0 0
    %750 = vmatmul.mubr.bf16.gmra.mrb[0].mxu0 %v699
    %v751 = vpop.f32.mrb[0].mxu0
    %v752 = vadd.f32 0.0, %v751
    %v753 = vpop.f32.mrb[0].mxu0
    %v754 = vadd.f32 0.0, %v753
    %v755 = vpop.f32.mrb[0].mxu0
    %v756 = vadd.f32 0.0, %v755
    %v757 = vpop.f32.mrb[0].mxu0
    %v758 = vadd.f32 0.0, %v757
    %759 = vmatprep.mubr.bf16.mxu0 0
    %760 = vmatmul.mubr.bf16.gmra.mrb[0].mxu0 %v702
    %v761 = vpop.f32.mrb[0].mxu0
    %v762 = vadd.f32 0.0, %v761
    %v763 = vpop.f32.mrb[0].mxu0
    %v764 = vadd.f32 0.0, %v763
    %v765 = vpop.f32.mrb[0].mxu0
    %v766 = vadd.f32 0.0, %v765
    %v767 = vpop.f32.mrb[0].mxu0
    %v768 = vadd.f32 0.0, %v767
    %769 = vmatprep.mubr.bf16.mxu0 0
    %770 = vmatmul.mubr.bf16.gmra.mrb[0].mxu0 %v705
    %v771 = vpop.f32.mrb[0].mxu0
    %v772 = vadd.f32 0.0, %v771
    %v773 = vpop.f32.mrb[0].mxu0
    %v774 = vadd.f32 0.0, %v773
    %v775 = vpop.f32.mrb[0].mxu0
    %v776 = vadd.f32 0.0, %v775
    %v777 = vpop.f32.mrb[0].mxu0
    %v778 = vadd.f32 0.0, %v777
    %779 = vdwg.mxu0
    %780 = vmatprep.subr.bf16.mxu0 %v665
    %781 = vmatpush1.bf16.msra.mxu0 %v664
    %782 = vmatprep.subr.bf16.mxu0 0
    %783 = vmatpush1.bf16.msra.mxu0 0
    %784 = vmatprep.subr.bf16.mxu0 0
    %785 = vmatpush1.bf16.msra.mxu0 0
    %786 = vmatprep.subr.bf16.mxu0 0
    %787 = vmatpush1.bf16.msra.mxu0 0
    %788 = vmatprep.subr.bf16.mxu0 0
    %789 = vmatpush1.bf16.msra.mxu0 0
    %790 = vmatprep.subr.bf16.mxu0 0
    %791 = vmatpush1.bf16.msra.mxu0 0
    %792 = vmatprep.subr.bf16.mxu0 0
    %793 = vmatpush1.bf16.msra.mxu0 0
    %794 = vmatprep.subr.bf16.mxu0 0
    %795 = vmatpush1.bf16.msra.mxu0 0
    %796 = vmatprep.subr.bf16.mxu0 0
    %797 = vmatpush1.bf16.msra.mxu0 0
    %798 = vmatprep.subr.bf16.mxu0 0
    %799 = vmatpush1.bf16.msra.mxu0 0
    %800 = vmatprep.subr.bf16.mxu0 0
    %801 = vmatpush1.bf16.msra.mxu0 0
    %802 = vmatprep.subr.bf16.mxu0 0
    %803 = vmatpush1.bf16.msra.mxu0 0
    %804 = vmatprep.subr.bf16.mxu0 0
    %805 = vmatpush1.bf16.msra.mxu0 0
    %806 = vmatprep.subr.bf16.mxu0 0
    %807 = vmatpush1.bf16.msra.mxu0 0
    %808 = vmatprep.subr.bf16.mxu0 0
    %809 = vmatpush1.bf16.msra.mxu0 0
    %810 = vmatprep.subr.bf16.mxu0 0
    %811 = vmatpush1.bf16.msra.mxu0 0
    %812 = vmatprep.mubr.bf16.mxu0 0
    %813 = vmatmul.mubr.bf16.gmra.mrb[0].mxu0 %v696
    %v814 = vpop.f32.mrb[0].mxu0
    %v815 = vadd.f32 0.0, %v814
    %v816 = vpop.f32.mrb[0].mxu0
    %v817 = vadd.f32 0.0, %v816
    %v818 = vpop.f32.mrb[0].mxu0
    %v819 = vadd.f32 0.0, %v818
    %v820 = vpop.f32.mrb[0].mxu0
    %v821 = vadd.f32 0.0, %v820
    %822 = vmatprep.mubr.bf16.mxu0 0
    %823 = vmatmul.mubr.bf16.gmra.mrb[0].mxu0 %v699
    %v824 = vpop.f32.mrb[0].mxu0
    %v825 = vadd.f32 0.0, %v824
    %v826 = vpop.f32.mrb[0].mxu0
    %v827 = vadd.f32 0.0, %v826
    %v828 = vpop.f32.mrb[0].mxu0
    %v829 = vadd.f32 0.0, %v828
    %v830 = vpop.f32.mrb[0].mxu0
    %v831 = vadd.f32 0.0, %v830
    %832 = vmatprep.mubr.bf16.mxu0 0
    %833 = vmatmul.mubr.bf16.gmra.mrb[0].mxu0 %v702
    %v834 = vpop.f32.mrb[0].mxu0
    %v835 = vadd.f32 0.0, %v834
    %v836 = vpop.f32.mrb[0].mxu0
    %v837 = vadd.f32 0.0, %v836
    %v838 = vpop.f32.mrb[0].mxu0
    %v839 = vadd.f32 0.0, %v838
    %v840 = vpop.f32.mrb[0].mxu0
    %v841 = vadd.f32 0.0, %v840
    %842 = vmatprep.mubr.bf16.mxu0 0
    %843 = vmatmul.mubr.bf16.gmra.mrb[0].mxu0 %v705
    %v844 = vpop.f32.mrb[0].mxu0
    %v845 = vadd.f32 0.0, %v844
    %v846 = vpop.f32.mrb[0].mxu0
    %v847 = vadd.f32 0.0, %v846
    %v848 = vpop.f32.mrb[0].mxu0
    %v849 = vadd.f32 0.0, %v848
    %v850 = vpop.f32.mrb[0].mxu0
    %v851 = vadd.f32 0.0, %v850
    %852 = vdwg.mxu0
    %v853 = vadd.f32 %v574, %v742
    %v854 = vadd.f32 %v575, %v744
    %v855 = vadd.f32 %v576, %v815
    %v856 = vadd.f32 %v577, %v817
    %v857 = vadd.f32 %v578, %v746
    %v858 = vadd.f32 %v579, %v748
    %v859 = vadd.f32 %v580, %v819
    %v860 = vadd.f32 %v581, %v821
    %v861 = vadd.f32 %v582, %v752
    %v862 = vadd.f32 %v583, %v754
    %v863 = vadd.f32 %v584, %v825
    %v864 = vadd.f32 %v585, %v827
    %v865 = vadd.f32 %v586, %v756
    %v866 = vadd.f32 %v587, %v758
    %v867 = vadd.f32 %v588, %v829
    %v868 = vadd.f32 %v589, %v831
    %v869 = vadd.f32 %v590, %v762
    %v870 = vadd.f32 %v591, %v764
    %v871 = vadd.f32 %v592, %v835
    %v872 = vadd.f32 %v593, %v837
    %v873 = vadd.f32 %v594, %v766
    %v874 = vadd.f32 %v595, %v768
    %v875 = vadd.f32 %v596, %v839
    %v876 = vadd.f32 %v597, %v841
    %v877 = vadd.f32 %v598, %v772
    %v878 = vadd.f32 %v599, %v774
    %v879 = vadd.f32 %v600, %v845
    %v880 = vadd.f32 %v601, %v847
    %v881 = vadd.f32 %v602, %v776
    %v882 = vadd.f32 %v603, %v778
    %v883 = vadd.f32 %v604, %v849
    %v884 = vadd.f32 %v605, %v851
    %s885 = scalar_lea.vmem %s2, 2
    %v886 = vld [vmem:[%s885] ss:$8 sm:$0xf]
    %887 = vrot.lane.b32.xlu0 %v853, 1
    %v888 = vpop.permute.xlu0 %887
    %889 = vrot.lane.b32.xlu0 %v857, 1
    %v890 = vpop.permute.xlu0 %889
    %891 = vrot.lane.b32.xlu0 %v854, 1
    %v892 = vpop.permute.xlu0 %891
    %893 = vrot.lane.b32.xlu0 %v858, 1
    %v894 = vpop.permute.xlu0 %893
    %895 = vrot.lane.b32.xlu0 %v855, 1
    %v896 = vpop.permute.xlu0 %895
    %897 = vrot.lane.b32.xlu0 %v859, 1
    %v898 = vpop.permute.xlu0 %897
    %899 = vrot.lane.b32.xlu0 %v856, 1
    %v900 = vpop.permute.xlu0 %899
    %901 = vrot.lane.b32.xlu0 %v860, 1
    %v902 = vpop.permute.xlu0 %901
    %vm903 = vcmp.lt.s32.totalorder %v81, 1
    %v904 = vsel %vm903, %v896, %v900
    %v905 = vsel %vm903, %v898, %v902
    %v906 = vsel %vm903, %v892, %v896
    %v907 = vsel %vm903, %v894, %v898
    %v908 = vsel %vm903, %v888, %v892
    %v909 = vsel %vm903, %v890, %v894
    %v910 = vsel %vm903, %v900, %v888
    %v911 = vsel %vm903, %v902, %v890
    %v913 = vlaneseq
    %v914 = vshrl.u32 %v913, 7
    %v915 = vsub.s32 0, %v914
    %v916 = vrot.slane %v886, %v915
    %v917 = vlaneseq
    %v918 = vshrl.u32 %v917, 7
    %v919 = vsub.s32 1, %v918
    %v920 = vrot.slane %v886, %v919
    %v921 = vlaneseq
    %v922 = vshrl.u32 %v921, 7
    %v923 = vsub.s32 2, %v922
    %v924 = vrot.slane %v886, %v923
    %v925 = vlaneseq
    %v926 = vshrl.u32 %v925, 7
    %v927 = vsub.s32 3, %v926
    %v928 = vrot.slane %v886, %v927
    %v933 = vmul.f32 %v916, %v910
    %v934 = vmul.f32 %v920, %v908
    %v935 = vmul.f32 %v924, %v906
    %v936 = vmul.f32 %v928, %v904
    %v937 = vmul.f32 %v916, %v911
    %v938 = vmul.f32 %v920, %v909
    %v939 = vmul.f32 %v924, %v907
    %v940 = vmul.f32 %v928, %v905
    %v941 = vadd.f32 %v861, %v933
    %v942 = vadd.f32 %v862, %v934
    %v943 = vadd.f32 %v863, %v935
    %v944 = vadd.f32 %v864, %v936
    %v945 = vadd.f32 %v865, %v937
    %v946 = vadd.f32 %v866, %v938
    %v947 = vadd.f32 %v867, %v939
    %v948 = vadd.f32 %v868, %v940
    %s949 = scalar_lea.vmem %s2, 4
    %v950 = vld [vmem:[%s949] ss:$8 sm:$0xf]
    %951 = vrot.lane.b32.xlu0 %v869, 127
    %v952 = vpop.permute.xlu0 %951
    %953 = vrot.lane.b32.xlu0 %v873, 127
    %v954 = vpop.permute.xlu0 %953
    %955 = vrot.lane.b32.xlu0 %v870, 127
    %v956 = vpop.permute.xlu0 %955
    %957 = vrot.lane.b32.xlu0 %v874, 127
    %v958 = vpop.permute.xlu0 %957
    %959 = vrot.lane.b32.xlu0 %v871, 127
    %v960 = vpop.permute.xlu0 %959
    %961 = vrot.lane.b32.xlu0 %v875, 127
    %v962 = vpop.permute.xlu0 %961
    %963 = vrot.lane.b32.xlu0 %v872, 127
    %v964 = vpop.permute.xlu0 %963
    %965 = vrot.lane.b32.xlu0 %v876, 127
    %v966 = vpop.permute.xlu0 %965
    %vm967 = vcmp.lt.s32.totalorder %v81, 127
    %v968 = vsel %vm967, %v960, %v964
    %v969 = vsel %vm967, %v962, %v966
    %v970 = vsel %vm967, %v956, %v960
    %v971 = vsel %vm967, %v958, %v962
    %v972 = vsel %vm967, %v952, %v956
    %v973 = vsel %vm967, %v954, %v958
    %v974 = vsel %vm967, %v964, %v952
    %v975 = vsel %vm967, %v966, %v954
    %v977 = vlaneseq
    %v978 = vshrl.u32 %v977, 7
    %v979 = vsub.s32 0, %v978
    %v980 = vrot.slane %v950, %v979
    %v981 = vlaneseq
    %v982 = vshrl.u32 %v981, 7
    %v983 = vsub.s32 1, %v982
    %v984 = vrot.slane %v950, %v983
    %v985 = vlaneseq
    %v986 = vshrl.u32 %v985, 7
    %v987 = vsub.s32 2, %v986
    %v988 = vrot.slane %v950, %v987
    %v989 = vlaneseq
    %v990 = vshrl.u32 %v989, 7
    %v991 = vsub.s32 3, %v990
    %v992 = vrot.slane %v950, %v991
    %v997 = vmul.f32 %v980, %v972
    %v998 = vmul.f32 %v984, %v970
    %v999 = vmul.f32 %v988, %v968
    %v1000 = vmul.f32 %v992, %v974
    %v1001 = vmul.f32 %v980, %v973
    %v1002 = vmul.f32 %v984, %v971
    %v1003 = vmul.f32 %v988, %v969
    %v1004 = vmul.f32 %v992, %v975
    %v1005 = vadd.f32 %v941, %v997
    %v1006 = vadd.f32 %v942, %v998
    %v1007 = vadd.f32 %v943, %v999
    %v1008 = vadd.f32 %v944, %v1000
    %v1009 = vadd.f32 %v945, %v1001
    %v1010 = vadd.f32 %v946, %v1002
    %v1011 = vadd.f32 %v947, %v1003
    %v1012 = vadd.f32 %v948, %v1004
    %1013 = vrot.lane.b32.xlu0 %v1009, 16
    %v1014 = vpop.permute.xlu0 %1013
    %1015 = vrot.lane.b32.xlu0 %v1010, 16
    %v1016 = vpop.permute.xlu0 %1015
    %1017 = vrot.lane.b32.xlu0 %v1011, 16
    %v1018 = vpop.permute.xlu0 %1017
    %1019 = vrot.lane.b32.xlu0 %v1012, 16
    %v1020 = vpop.permute.xlu0 %1019
    %v1021 = vsel %vm82, %v1018, %v1020
    %v1022 = vsel %vm82, %v1016, %v1018
    %v1023 = vsel %vm82, %v1014, %v1016
    %v1024 = vsel %vm82, %v1020, %v1014
    %v1025 = vmul.f32 %v95, %v1024
    %v1026 = vmul.f32 %v99, %v1023
    %v1027 = vmul.f32 %v103, %v1022
    %v1028 = vmul.f32 %v107, %v1021
    %1029 = vrot.lane.b32.xlu0 %v1009, 112
    %v1030 = vpop.permute.xlu0 %1029
    %1031 = vrot.lane.b32.xlu0 %v1010, 112
    %v1032 = vpop.permute.xlu0 %1031
    %1033 = vrot.lane.b32.xlu0 %v1011, 112
    %v1034 = vpop.permute.xlu0 %1033
    %1035 = vrot.lane.b32.xlu0 %v1012, 112
    %v1036 = vpop.permute.xlu0 %1035
    %v1037 = vsel %vm624, %v1034, %v1036
    %v1038 = vsel %vm624, %v1032, %v1034
    %v1039 = vsel %vm624, %v1030, %v1032
    %v1040 = vsel %vm624, %v1036, %v1030
    %v1041 = vmul.f32 %v637, %v1039
    %v1042 = vmul.f32 %v641, %v1038
    %v1043 = vmul.f32 %v645, %v1037
    %v1044 = vmul.f32 %v649, %v1040
    %v1045 = vld [vmem:[%s8] sm:$0xff]
    %1047 = vset.pattern.permute.xlu0 0
    %1048 = vperm.xlu0 %1047, %v1045
    %v1049 = vpop.permute.xlu0 %1048
    %v1051 = vadd.f32 %v1049, 0.0
    %v1052 = vld [vmem:[%s7] sm:$0xff]
    %1054 = vset.pattern.permute.xlu0 0
    %1055 = vperm.xlu0 %1054, %v1052
    %v1056 = vpop.permute.xlu0 %1055
    %v1058 = vmul.f32 %v1025, %v1056
    %v1059 = vmul.f32 %v1026, %v1056
    %v1060 = vmul.f32 %v1027, %v1056
    %v1061 = vmul.f32 %v1028, %v1056
    %s1062 = scalar_lea.vmem %s7, 24
    %v1063 = vld [vmem:[%s1062] sm:$0xff]
    %1065 = vset.pattern.permute.xlu0 0
    %1066 = vperm.xlu0 %1065, %v1063
    %v1067 = vpop.permute.xlu0 %1066
    %v1069 = vmul.f32 %v1009, %v1067
    %v1070 = vmul.f32 %v1010, %v1067
    %v1071 = vmul.f32 %v1011, %v1067
    %v1072 = vmul.f32 %v1012, %v1067
    %v1073 = vadd.f32 %v1058, %v1069
    %v1074 = vadd.f32 %v1059, %v1070
    %v1075 = vadd.f32 %v1060, %v1071
    %v1076 = vadd.f32 %v1061, %v1072
    %s1077 = scalar_lea.vmem %s7, 48
    %v1078 = vld [vmem:[%s1077] sm:$0xff]
    %1080 = vset.pattern.permute.xlu0 0
    %1081 = vperm.xlu0 %1080, %v1078
    %v1082 = vpop.permute.xlu0 %1081
    %v1084 = vmul.f32 %v1041, %v1082
    %v1085 = vmul.f32 %v1042, %v1082
    %v1086 = vmul.f32 %v1043, %v1082
    %v1087 = vmul.f32 %v1044, %v1082
    %v1088 = vadd.f32 %v1073, %v1084
    %v1089 = vadd.f32 %v1074, %v1085
    %v1090 = vadd.f32 %v1075, %v1086
    %v1091 = vadd.f32 %v1076, %v1087
    %1092 = vrot.lane.b32.xlu0 %v1088, 1
    %v1093 = vpop.permute.xlu0 %1092
    %1094 = vrot.lane.b32.xlu0 %v1089, 1
    %v1095 = vpop.permute.xlu0 %1094
    %1096 = vrot.lane.b32.xlu0 %v1090, 1
    %v1097 = vpop.permute.xlu0 %1096
    %1098 = vrot.lane.b32.xlu0 %v1091, 1
    %v1099 = vpop.permute.xlu0 %1098
    %v1100 = vsel %vm903, %v1097, %v1099
    %v1101 = vsel %vm903, %v1095, %v1097
    %v1102 = vsel %vm903, %v1093, %v1095
    %v1103 = vsel %vm903, %v1099, %v1093
    %v1104 = vmul.f32 %v916, %v1103
    %v1105 = vmul.f32 %v920, %v1102
    %v1106 = vmul.f32 %v924, %v1101
    %v1107 = vmul.f32 %v928, %v1100
    %v1108 = vadd.f32 %v1051, %v1104
    %v1109 = vadd.f32 %v1051, %v1105
    %v1110 = vadd.f32 %v1051, %v1106
    %v1111 = vadd.f32 %v1051, %v1107
    %s1112 = scalar_lea.vmem %s7, 8
    %v1113 = vld [vmem:[%s1112] sm:$0xff]
    %1115 = vset.pattern.permute.xlu0 0
    %1116 = vperm.xlu0 %1115, %v1113
    %v1117 = vpop.permute.xlu0 %1116
    %v1119 = vmul.f32 %v1025, %v1117
    %v1120 = vmul.f32 %v1026, %v1117
    %v1121 = vmul.f32 %v1027, %v1117
    %v1122 = vmul.f32 %v1028, %v1117
    %s1123 = scalar_lea.vmem %s7, 32
    %v1124 = vld [vmem:[%s1123] sm:$0xff]
    %1126 = vset.pattern.permute.xlu0 0
    %1127 = vperm.xlu0 %1126, %v1124
    %v1128 = vpop.permute.xlu0 %1127
    %v1130 = vmul.f32 %v1009, %v1128
    %v1131 = vmul.f32 %v1010, %v1128
    %v1132 = vmul.f32 %v1011, %v1128
    %v1133 = vmul.f32 %v1012, %v1128
    %v1134 = vadd.f32 %v1119, %v1130
    %v1135 = vadd.f32 %v1120, %v1131
    %v1136 = vadd.f32 %v1121, %v1132
    %v1137 = vadd.f32 %v1122, %v1133
    %s1138 = scalar_lea.vmem %s7, 56
    %v1139 = vld [vmem:[%s1138] sm:$0xff]
    %1141 = vset.pattern.permute.xlu0 0
    %1142 = vperm.xlu0 %1141, %v1139
    %v1143 = vpop.permute.xlu0 %1142
    %v1145 = vmul.f32 %v1041, %v1143
    %v1146 = vmul.f32 %v1042, %v1143
    %v1147 = vmul.f32 %v1043, %v1143
    %v1148 = vmul.f32 %v1044, %v1143
    %v1149 = vadd.f32 %v1134, %v1145
    %v1150 = vadd.f32 %v1135, %v1146
    %v1151 = vadd.f32 %v1136, %v1147
    %v1152 = vadd.f32 %v1137, %v1148
    %v1153 = vadd.f32 %v1108, %v1149
    %v1154 = vadd.f32 %v1109, %v1150
    %v1155 = vadd.f32 %v1110, %v1151
    %v1156 = vadd.f32 %v1111, %v1152
    %s1157 = scalar_lea.vmem %s7, 16
    %v1158 = vld [vmem:[%s1157] sm:$0xff]
    %1160 = vset.pattern.permute.xlu0 0
    %1161 = vperm.xlu0 %1160, %v1158
    %v1162 = vpop.permute.xlu0 %1161
    %v1164 = vmul.f32 %v1025, %v1162
    %v1165 = vmul.f32 %v1026, %v1162
    %v1166 = vmul.f32 %v1027, %v1162
    %v1167 = vmul.f32 %v1028, %v1162
    %s1168 = scalar_lea.vmem %s7, 40
    %v1169 = vld [vmem:[%s1168] sm:$0xff]
    %1171 = vset.pattern.permute.xlu0 0
    %1172 = vperm.xlu0 %1171, %v1169
    %v1173 = vpop.permute.xlu0 %1172
    %v1175 = vmul.f32 %v1009, %v1173
    %v1176 = vmul.f32 %v1010, %v1173
    %v1177 = vmul.f32 %v1011, %v1173
    %v1178 = vmul.f32 %v1012, %v1173
    %v1179 = vadd.f32 %v1164, %v1175
    %v1180 = vadd.f32 %v1165, %v1176
    %v1181 = vadd.f32 %v1166, %v1177
    %v1182 = vadd.f32 %v1167, %v1178
    %s1183 = scalar_lea.vmem %s7, 64
    %v1184 = vld [vmem:[%s1183] sm:$0xff]
    %1186 = vset.pattern.permute.xlu0 0
    %1187 = vperm.xlu0 %1186, %v1184
    %v1188 = vpop.permute.xlu0 %1187
    %v1190 = vmul.f32 %v1041, %v1188
    %v1191 = vmul.f32 %v1042, %v1188
    %v1192 = vmul.f32 %v1043, %v1188
    %v1193 = vmul.f32 %v1044, %v1188
    %v1194 = vadd.f32 %v1179, %v1190
    %v1195 = vadd.f32 %v1180, %v1191
    %v1196 = vadd.f32 %v1181, %v1192
    %v1197 = vadd.f32 %v1182, %v1193
    %1198 = vrot.lane.b32.xlu0 %v1194, 127
    %v1199 = vpop.permute.xlu0 %1198
    %1200 = vrot.lane.b32.xlu0 %v1195, 127
    %v1201 = vpop.permute.xlu0 %1200
    %1202 = vrot.lane.b32.xlu0 %v1196, 127
    %v1203 = vpop.permute.xlu0 %1202
    %1204 = vrot.lane.b32.xlu0 %v1197, 127
    %v1205 = vpop.permute.xlu0 %1204
    %v1206 = vsel %vm967, %v1203, %v1205
    %v1207 = vsel %vm967, %v1201, %v1203
    %v1208 = vsel %vm967, %v1199, %v1201
    %v1209 = vsel %vm967, %v1205, %v1199
    %v1210 = vmul.f32 %v980, %v1208
    %v1211 = vmul.f32 %v984, %v1207
    %v1212 = vmul.f32 %v988, %v1206
    %v1213 = vmul.f32 %v992, %v1209
    %v1214 = vadd.f32 %v1153, %v1210
    %v1215 = vadd.f32 %v1154, %v1211
    %v1216 = vadd.f32 %v1155, %v1212
    %v1217 = vadd.f32 %v1156, %v1213
    %1218 = vrot.lane.b32.xlu0 %v1214, 16
    %v1219 = vpop.permute.xlu0 %1218
    %1220 = vrot.lane.b32.xlu0 %v1215, 16
    %v1221 = vpop.permute.xlu0 %1220
    %1222 = vrot.lane.b32.xlu0 %v1216, 16
    %v1223 = vpop.permute.xlu0 %1222
    %1224 = vrot.lane.b32.xlu0 %v1217, 16
    %v1225 = vpop.permute.xlu0 %1224
    %v1226 = vsel %vm82, %v1223, %v1225
    %v1227 = vsel %vm82, %v1221, %v1223
    %v1228 = vsel %vm82, %v1219, %v1221
    %v1229 = vsel %vm82, %v1225, %v1219
    %v1230 = vmul.f32 %v95, %v1229
    %v1231 = vmul.f32 %v99, %v1228
    %v1232 = vmul.f32 %v103, %v1227
    %v1233 = vmul.f32 %v107, %v1226
    %1234 = vrot.lane.b32.xlu0 %v1214, 112
    %v1235 = vpop.permute.xlu0 %1234
    %1236 = vrot.lane.b32.xlu0 %v1215, 112
    %v1237 = vpop.permute.xlu0 %1236
    %1238 = vrot.lane.b32.xlu0 %v1216, 112
    %v1239 = vpop.permute.xlu0 %1238
    %1240 = vrot.lane.b32.xlu0 %v1217, 112
    %v1241 = vpop.permute.xlu0 %1240
    %v1242 = vsel %vm624, %v1239, %v1241
    %v1243 = vsel %vm624, %v1237, %v1239
    %v1244 = vsel %vm624, %v1235, %v1237
    %v1245 = vsel %vm624, %v1241, %v1235
    %v1246 = vmul.f32 %v637, %v1244
    %v1247 = vmul.f32 %v641, %v1243
    %v1248 = vmul.f32 %v645, %v1242
    %v1249 = vmul.f32 %v649, %v1245
    %v1250 = vld [vmem:[%s10] sm:$0xff]
    %1252 = vset.pattern.permute.xlu0 0
    %1253 = vperm.xlu0 %1252, %v1250
    %v1254 = vpop.permute.xlu0 %1253
    %v1256 = vadd.f32 %v1254, 0.0
    %v1257 = vld [vmem:[%s9] sm:$0xff]
    %1259 = vset.pattern.permute.xlu0 0
    %1260 = vperm.xlu0 %1259, %v1257
    %v1261 = vpop.permute.xlu0 %1260
    %v1263 = vmul.f32 %v1230, %v1261
    %v1264 = vmul.f32 %v1231, %v1261
    %v1265 = vmul.f32 %v1232, %v1261
    %v1266 = vmul.f32 %v1233, %v1261
    %s1267 = scalar_lea.vmem %s9, 24
    %v1268 = vld [vmem:[%s1267] sm:$0xff]
    %1270 = vset.pattern.permute.xlu0 0
    %1271 = vperm.xlu0 %1270, %v1268
    %v1272 = vpop.permute.xlu0 %1271
    %v1274 = vmul.f32 %v1214, %v1272
    %v1275 = vmul.f32 %v1215, %v1272
    %v1276 = vmul.f32 %v1216, %v1272
    %v1277 = vmul.f32 %v1217, %v1272
    %v1278 = vadd.f32 %v1263, %v1274
    %v1279 = vadd.f32 %v1264, %v1275
    %v1280 = vadd.f32 %v1265, %v1276
    %v1281 = vadd.f32 %v1266, %v1277
    %s1282 = scalar_lea.vmem %s9, 48
    %v1283 = vld [vmem:[%s1282] sm:$0xff]
    %1285 = vset.pattern.permute.xlu0 0
    %1286 = vperm.xlu0 %1285, %v1283
    %v1287 = vpop.permute.xlu0 %1286
    %v1289 = vmul.f32 %v1246, %v1287
    %v1290 = vmul.f32 %v1247, %v1287
    %v1291 = vmul.f32 %v1248, %v1287
    %v1292 = vmul.f32 %v1249, %v1287
    %v1293 = vadd.f32 %v1278, %v1289
    %v1294 = vadd.f32 %v1279, %v1290
    %v1295 = vadd.f32 %v1280, %v1291
    %v1296 = vadd.f32 %v1281, %v1292
    %1297 = vrot.lane.b32.xlu0 %v1293, 1
    %v1298 = vpop.permute.xlu0 %1297
    %1299 = vrot.lane.b32.xlu0 %v1294, 1
    %v1300 = vpop.permute.xlu0 %1299
    %1301 = vrot.lane.b32.xlu0 %v1295, 1
    %v1302 = vpop.permute.xlu0 %1301
    %1303 = vrot.lane.b32.xlu0 %v1296, 1
    %v1304 = vpop.permute.xlu0 %1303
    %v1305 = vsel %vm903, %v1302, %v1304
    %v1306 = vsel %vm903, %v1300, %v1302
    %v1307 = vsel %vm903, %v1298, %v1300
    %v1308 = vsel %vm903, %v1304, %v1298
    %v1309 = vmul.f32 %v916, %v1308
    %v1310 = vmul.f32 %v920, %v1307
    %v1311 = vmul.f32 %v924, %v1306
    %v1312 = vmul.f32 %v928, %v1305
    %v1313 = vadd.f32 %v1256, %v1309
    %v1314 = vadd.f32 %v1256, %v1310
    %v1315 = vadd.f32 %v1256, %v1311
    %v1316 = vadd.f32 %v1256, %v1312
    %s1317 = scalar_lea.vmem %s9, 8
    %v1318 = vld [vmem:[%s1317] sm:$0xff]
    %1320 = vset.pattern.permute.xlu0 0
    %1321 = vperm.xlu0 %1320, %v1318
    %v1322 = vpop.permute.xlu0 %1321
    %v1324 = vmul.f32 %v1230, %v1322
    %v1325 = vmul.f32 %v1231, %v1322
    %v1326 = vmul.f32 %v1232, %v1322
    %v1327 = vmul.f32 %v1233, %v1322
    %s1328 = scalar_lea.vmem %s9, 32
    %v1329 = vld [vmem:[%s1328] sm:$0xff]
    %1331 = vset.pattern.permute.xlu0 0
    %1332 = vperm.xlu0 %1331, %v1329
    %v1333 = vpop.permute.xlu0 %1332
    %v1335 = vmul.f32 %v1214, %v1333
    %v1336 = vmul.f32 %v1215, %v1333
    %v1337 = vmul.f32 %v1216, %v1333
    %v1338 = vmul.f32 %v1217, %v1333
    %v1339 = vadd.f32 %v1324, %v1335
    %v1340 = vadd.f32 %v1325, %v1336
    %v1341 = vadd.f32 %v1326, %v1337
    %v1342 = vadd.f32 %v1327, %v1338
    %s1343 = scalar_lea.vmem %s9, 56
    %v1344 = vld [vmem:[%s1343] sm:$0xff]
    %1346 = vset.pattern.permute.xlu0 0
    %1347 = vperm.xlu0 %1346, %v1344
    %v1348 = vpop.permute.xlu0 %1347
    %v1350 = vmul.f32 %v1246, %v1348
    %v1351 = vmul.f32 %v1247, %v1348
    %v1352 = vmul.f32 %v1248, %v1348
    %v1353 = vmul.f32 %v1249, %v1348
    %v1354 = vadd.f32 %v1339, %v1350
    %v1355 = vadd.f32 %v1340, %v1351
    %v1356 = vadd.f32 %v1341, %v1352
    %v1357 = vadd.f32 %v1342, %v1353
    %v1358 = vadd.f32 %v1313, %v1354
    %v1359 = vadd.f32 %v1314, %v1355
    %v1360 = vadd.f32 %v1315, %v1356
    %v1361 = vadd.f32 %v1316, %v1357
    %s1362 = scalar_lea.vmem %s9, 16
    %v1363 = vld [vmem:[%s1362] sm:$0xff]
    %1365 = vset.pattern.permute.xlu0 0
    %1366 = vperm.xlu0 %1365, %v1363
    %v1367 = vpop.permute.xlu0 %1366
    %v1369 = vmul.f32 %v1230, %v1367
    %v1370 = vmul.f32 %v1231, %v1367
    %v1371 = vmul.f32 %v1232, %v1367
    %v1372 = vmul.f32 %v1233, %v1367
    %s1373 = scalar_lea.vmem %s9, 40
    %v1374 = vld [vmem:[%s1373] sm:$0xff]
    %1376 = vset.pattern.permute.xlu0 0
    %1377 = vperm.xlu0 %1376, %v1374
    %v1378 = vpop.permute.xlu0 %1377
    %v1380 = vmul.f32 %v1214, %v1378
    %v1381 = vmul.f32 %v1215, %v1378
    %v1382 = vmul.f32 %v1216, %v1378
    %v1383 = vmul.f32 %v1217, %v1378
    %v1384 = vadd.f32 %v1369, %v1380
    %v1385 = vadd.f32 %v1370, %v1381
    %v1386 = vadd.f32 %v1371, %v1382
    %v1387 = vadd.f32 %v1372, %v1383
    %s1388 = scalar_lea.vmem %s9, 64
    %v1389 = vld [vmem:[%s1388] sm:$0xff]
    %1391 = vset.pattern.permute.xlu0 0
    %1392 = vperm.xlu0 %1391, %v1389
    %v1393 = vpop.permute.xlu0 %1392
    %v1395 = vmul.f32 %v1246, %v1393
    %v1396 = vmul.f32 %v1247, %v1393
    %v1397 = vmul.f32 %v1248, %v1393
    %v1398 = vmul.f32 %v1249, %v1393
    %v1399 = vadd.f32 %v1384, %v1395
    %v1400 = vadd.f32 %v1385, %v1396
    %v1401 = vadd.f32 %v1386, %v1397
    %v1402 = vadd.f32 %v1387, %v1398
    %1403 = vrot.lane.b32.xlu0 %v1399, 127
    %v1404 = vpop.permute.xlu0 %1403
    %1405 = vrot.lane.b32.xlu0 %v1400, 127
    %v1406 = vpop.permute.xlu0 %1405
    %1407 = vrot.lane.b32.xlu0 %v1401, 127
    %v1408 = vpop.permute.xlu0 %1407
    %1409 = vrot.lane.b32.xlu0 %v1402, 127
    %v1410 = vpop.permute.xlu0 %1409
    %v1411 = vsel %vm967, %v1408, %v1410
    %v1412 = vsel %vm967, %v1406, %v1408
    %v1413 = vsel %vm967, %v1404, %v1406
    %v1414 = vsel %vm967, %v1410, %v1404
    %v1415 = vmul.f32 %v980, %v1413
    %v1416 = vmul.f32 %v984, %v1412
    %v1417 = vmul.f32 %v988, %v1411
    %v1418 = vmul.f32 %v992, %v1414
    %v1419 = vadd.f32 %v1358, %v1415
    %v1420 = vadd.f32 %v1359, %v1416
    %v1421 = vadd.f32 %v1360, %v1417
    %v1422 = vadd.f32 %v1361, %v1418
    %v1423 = vrot.slane %v1009, 4
    %v1424 = vadd.f32 %v1009, %v1423
    %v1425 = vrot.slane %v1424, 2
    %v1426 = vadd.f32 %v1424, %v1425
    %v1427 = vrot.slane %v1426, 1
    %v1428 = vadd.f32 %v1426, %v1427
    %v1429 = vrot.slane %v1010, 4
    %v1430 = vadd.f32 %v1010, %v1429
    %v1431 = vrot.slane %v1430, 2
    %v1432 = vadd.f32 %v1430, %v1431
    %v1433 = vrot.slane %v1432, 1
    %v1434 = vadd.f32 %v1432, %v1433
    %v1435 = vrot.slane %v1011, 4
    %v1436 = vadd.f32 %v1011, %v1435
    %v1437 = vrot.slane %v1436, 2
    %v1438 = vadd.f32 %v1436, %v1437
    %v1439 = vrot.slane %v1438, 1
    %v1440 = vadd.f32 %v1438, %v1439
    %v1441 = vrot.slane %v1012, 4
    %v1442 = vadd.f32 %v1012, %v1441
    %v1443 = vrot.slane %v1442, 2
    %v1444 = vadd.f32 %v1442, %v1443
    %v1445 = vrot.slane %v1444, 1
    %v1446 = vadd.f32 %v1444, %v1445
    %v1447 = vmul.f32 %v1428, 0.125
    %v1448 = vmul.f32 %v1434, 0.125
    %v1449 = vmul.f32 %v1440, 0.125
    %v1450 = vmul.f32 %v1446, 0.125
    %v1451 = vrot.slane %v1009, 4
    %v1452 = vmax.f32 %v1009, %v1451
    %v1453 = vrot.slane %v1452, 2
    %v1454 = vmax.f32 %v1452, %v1453
    %v1455 = vrot.slane %v1454, 1
    %v1456 = vmax.f32 %v1454, %v1455
    %v1457 = vrot.slane %v1010, 4
    %v1458 = vmax.f32 %v1010, %v1457
    %v1459 = vrot.slane %v1458, 2
    %v1460 = vmax.f32 %v1458, %v1459
    %v1461 = vrot.slane %v1460, 1
    %v1462 = vmax.f32 %v1460, %v1461
    %v1463 = vrot.slane %v1011, 4
    %v1464 = vmax.f32 %v1011, %v1463
    %v1465 = vrot.slane %v1464, 2
    %v1466 = vmax.f32 %v1464, %v1465
    %v1467 = vrot.slane %v1466, 1
    %v1468 = vmax.f32 %v1466, %v1467
    %v1469 = vrot.slane %v1012, 4
    %v1470 = vmax.f32 %v1012, %v1469
    %v1471 = vrot.slane %v1470, 2
    %v1472 = vmax.f32 %v1470, %v1471
    %v1473 = vrot.slane %v1472, 1
    %v1474 = vmax.f32 %v1472, %v1473
    %v1475 = vrot.slane %v1214, 4
    %v1476 = vadd.f32 %v1214, %v1475
    %v1477 = vrot.slane %v1476, 2
    %v1478 = vadd.f32 %v1476, %v1477
    %v1479 = vrot.slane %v1478, 1
    %v1480 = vadd.f32 %v1478, %v1479
    %v1481 = vrot.slane %v1215, 4
    %v1482 = vadd.f32 %v1215, %v1481
    %v1483 = vrot.slane %v1482, 2
    %v1484 = vadd.f32 %v1482, %v1483
    %v1485 = vrot.slane %v1484, 1
    %v1486 = vadd.f32 %v1484, %v1485
    %v1487 = vrot.slane %v1216, 4
    %v1488 = vadd.f32 %v1216, %v1487
    %v1489 = vrot.slane %v1488, 2
    %v1490 = vadd.f32 %v1488, %v1489
    %v1491 = vrot.slane %v1490, 1
    %v1492 = vadd.f32 %v1490, %v1491
    %v1493 = vrot.slane %v1217, 4
    %v1494 = vadd.f32 %v1217, %v1493
    %v1495 = vrot.slane %v1494, 2
    %v1496 = vadd.f32 %v1494, %v1495
    %v1497 = vrot.slane %v1496, 1
    %v1498 = vadd.f32 %v1496, %v1497
    %v1499 = vmul.f32 %v1480, 0.125
    %v1500 = vmul.f32 %v1486, 0.125
    %v1501 = vmul.f32 %v1492, 0.125
    %v1502 = vmul.f32 %v1498, 0.125
    %v1503 = vrot.slane %v1214, 4
    %v1504 = vmax.f32 %v1214, %v1503
    %v1505 = vrot.slane %v1504, 2
    %v1506 = vmax.f32 %v1504, %v1505
    %v1507 = vrot.slane %v1506, 1
    %v1508 = vmax.f32 %v1506, %v1507
    %v1509 = vrot.slane %v1215, 4
    %v1510 = vmax.f32 %v1215, %v1509
    %v1511 = vrot.slane %v1510, 2
    %v1512 = vmax.f32 %v1510, %v1511
    %v1513 = vrot.slane %v1512, 1
    %v1514 = vmax.f32 %v1512, %v1513
    %v1515 = vrot.slane %v1216, 4
    %v1516 = vmax.f32 %v1216, %v1515
    %v1517 = vrot.slane %v1516, 2
    %v1518 = vmax.f32 %v1516, %v1517
    %v1519 = vrot.slane %v1518, 1
    %v1520 = vmax.f32 %v1518, %v1519
    %v1521 = vrot.slane %v1217, 4
    %v1522 = vmax.f32 %v1217, %v1521
    %v1523 = vrot.slane %v1522, 2
    %v1524 = vmax.f32 %v1522, %v1523
    %v1525 = vrot.slane %v1524, 1
    %v1526 = vmax.f32 %v1524, %v1525
    %v1527 = vrot.slane %v1419, 4
    %v1528 = vadd.f32 %v1419, %v1527
    %v1529 = vrot.slane %v1528, 2
    %v1530 = vadd.f32 %v1528, %v1529
    %v1531 = vrot.slane %v1530, 1
    %v1532 = vadd.f32 %v1530, %v1531
    %v1533 = vrot.slane %v1420, 4
    %v1534 = vadd.f32 %v1420, %v1533
    %v1535 = vrot.slane %v1534, 2
    %v1536 = vadd.f32 %v1534, %v1535
    %v1537 = vrot.slane %v1536, 1
    %v1538 = vadd.f32 %v1536, %v1537
    %v1539 = vrot.slane %v1421, 4
    %v1540 = vadd.f32 %v1421, %v1539
    %v1541 = vrot.slane %v1540, 2
    %v1542 = vadd.f32 %v1540, %v1541
    %v1543 = vrot.slane %v1542, 1
    %v1544 = vadd.f32 %v1542, %v1543
    %v1545 = vrot.slane %v1422, 4
    %v1546 = vadd.f32 %v1422, %v1545
    %v1547 = vrot.slane %v1546, 2
    %v1548 = vadd.f32 %v1546, %v1547
    %v1549 = vrot.slane %v1548, 1
    %v1550 = vadd.f32 %v1548, %v1549
    %v1551 = vmul.f32 %v1532, 0.125
    %v1552 = vmul.f32 %v1538, 0.125
    %v1553 = vmul.f32 %v1544, 0.125
    %v1554 = vmul.f32 %v1550, 0.125
    %v1555 = vrot.slane %v1419, 4
    %v1556 = vmax.f32 %v1419, %v1555
    %v1557 = vrot.slane %v1556, 2
    %v1558 = vmax.f32 %v1556, %v1557
    %v1559 = vrot.slane %v1558, 1
    %v1560 = vmax.f32 %v1558, %v1559
    %v1561 = vrot.slane %v1420, 4
    %v1562 = vmax.f32 %v1420, %v1561
    %v1563 = vrot.slane %v1562, 2
    %v1564 = vmax.f32 %v1562, %v1563
    %v1565 = vrot.slane %v1564, 1
    %v1566 = vmax.f32 %v1564, %v1565
    %v1567 = vrot.slane %v1421, 4
    %v1568 = vmax.f32 %v1421, %v1567
    %v1569 = vrot.slane %v1568, 2
    %v1570 = vmax.f32 %v1568, %v1569
    %v1571 = vrot.slane %v1570, 1
    %v1572 = vmax.f32 %v1570, %v1571
    %v1573 = vrot.slane %v1422, 4
    %v1574 = vmax.f32 %v1422, %v1573
    %v1575 = vrot.slane %v1574, 2
    %v1576 = vmax.f32 %v1574, %v1575
    %v1577 = vrot.slane %v1576, 1
    %v1578 = vmax.f32 %v1576, %v1577
    %vm1579 = vcmask 1040384
    %v1580 = vsel %vm1579, %v1447, %v1456
    %v1581 = vsel %vm1579, %v1448, %v1462
    %v1582 = vsel %vm1579, %v1449, %v1468
    %v1583 = vsel %vm1579, %v1450, %v1474
    %vm1584 = vcmask 1041408
    %v1585 = vsel %vm1584, %v1580, %v1499
    %v1586 = vsel %vm1584, %v1581, %v1500
    %v1587 = vsel %vm1584, %v1582, %v1501
    %v1588 = vsel %vm1584, %v1583, %v1502
    %vm1589 = vcmask 1042432
    %v1590 = vsel %vm1589, %v1585, %v1508
    %v1591 = vsel %vm1589, %v1586, %v1514
    %v1592 = vsel %vm1589, %v1587, %v1520
    %v1593 = vsel %vm1589, %v1588, %v1526
    %vm1594 = vcmask 1043456
    %v1595 = vsel %vm1594, %v1590, %v1551
    %v1596 = vsel %vm1594, %v1591, %v1552
    %v1597 = vsel %vm1594, %v1592, %v1553
    %v1598 = vsel %vm1594, %v1593, %v1554
    %vm1599 = vcmask 1044480
    %v1600 = vsel %vm1599, %v1595, %v1560
    %v1601 = vsel %vm1599, %v1596, %v1566
    %v1602 = vsel %vm1599, %v1597, %v1572
    %v1603 = vsel %vm1599, %v1598, %v1578
    %vm1604 = vcmask 1045504
    %v1605 = vsel %vm1604, %v1600, 0.0
    %v1606 = vsel %vm1604, %v1601, 0.0
    %v1607 = vsel %vm1604, %v1602, 0.0
    %v1608 = vsel %vm1604, %v1603, 0.0
    %v1609 = vld [vmem:[%s1] ss:$8 sm:$0xf]
    %1610 = vrot.lane.b32.xlu0 %v1605, 48
    %v1611 = vpop.permute.xlu0 %1610
    %1612 = vrot.lane.b32.xlu0 %v1606, 48
    %v1613 = vpop.permute.xlu0 %1612
    %1614 = vrot.lane.b32.xlu0 %v1607, 48
    %v1615 = vpop.permute.xlu0 %1614
    %1616 = vrot.lane.b32.xlu0 %v1608, 48
    %v1617 = vpop.permute.xlu0 %1616
    %vm1618 = vcmp.lt.s32.totalorder %v81, 48
    %v1619 = vsel %vm1618, %v1615, %v1617
    %v1620 = vsel %vm1618, %v1613, %v1615
    %v1621 = vsel %vm1618, %v1611, %v1613
    %v1622 = vsel %vm1618, %v1617, %v1611
    %v1624 = vlaneseq
    %v1625 = vshrl.u32 %v1624, 7
    %v1626 = vsub.s32 0, %v1625
    %v1627 = vrot.slane %v1609, %v1626
    %v1628 = vlaneseq
    %v1629 = vshrl.u32 %v1628, 7
    %v1630 = vsub.s32 1, %v1629
    %v1631 = vrot.slane %v1609, %v1630
    %v1632 = vlaneseq
    %v1633 = vshrl.u32 %v1632, 7
    %v1634 = vsub.s32 2, %v1633
    %v1635 = vrot.slane %v1609, %v1634
    %v1636 = vlaneseq
    %v1637 = vshrl.u32 %v1636, 7
    %v1638 = vsub.s32 3, %v1637
    %v1639 = vrot.slane %v1609, %v1638
    %v1644 = vmul.f32 %v1627, %v1622
    %v1645 = vmul.f32 %v1631, %v1621
    %v1646 = vmul.f32 %v1635, %v1620
    %v1647 = vmul.f32 %v1639, %v1619
    %v1648 = vpack.c.bf16 %v1644, %v1644
    %v1649 = vpack.c.bf16 %v1645, %v1645
    %v1650 = vpack.c.bf16 %v1646, %v1646
    %v1651 = vpack.c.bf16 %v1647, %v1647
    %v1652 = vld [vmem:[%s5] sm:$0xf]
    %v1653 = vld [vmem:[%s5 + $0x4] sm:$0xf]
    %v1654 = vld [vmem:[%s5 + $0x8] sm:$0xf]
    %v1655 = vld [vmem:[%s5 + $0xc] sm:$0xf]
    %v1656 = vld [vmem:[%s5 + $0x10] sm:$0xf]
    %v1657 = vld [vmem:[%s5 + $0x14] sm:$0xf]
    %v1658 = vld [vmem:[%s5 + $0x18] sm:$0xf]
    %s1659 = scalar_lea.vmem %s1, 1
    %v1660 = vld [vmem:[%s1659] ss:$8 sm:$0xf]
    %1661 = vrot.lane.b32.xlu0 %v1605, 32
    %v1662 = vpop.permute.xlu0 %1661
    %1663 = vrot.lane.b32.xlu0 %v1606, 32
    %v1664 = vpop.permute.xlu0 %1663
    %1665 = vrot.lane.b32.xlu0 %v1607, 32
    %v1666 = vpop.permute.xlu0 %1665
    %1667 = vrot.lane.b32.xlu0 %v1608, 32
    %v1668 = vpop.permute.xlu0 %1667
    %vm1669 = vcmp.lt.s32.totalorder %v81, 32
    %v1670 = vsel %vm1669, %v1666, %v1668
    %v1671 = vsel %vm1669, %v1664, %v1666
    %v1672 = vsel %vm1669, %v1662, %v1664
    %v1673 = vsel %vm1669, %v1668, %v1662
    %v1675 = vlaneseq
    %v1676 = vshrl.u32 %v1675, 7
    %v1677 = vsub.s32 0, %v1676
    %v1678 = vrot.slane %v1660, %v1677
    %v1679 = vlaneseq
    %v1680 = vshrl.u32 %v1679, 7
    %v1681 = vsub.s32 1, %v1680
    %v1682 = vrot.slane %v1660, %v1681
    %v1683 = vlaneseq
    %v1684 = vshrl.u32 %v1683, 7
    %v1685 = vsub.s32 2, %v1684
    %v1686 = vrot.slane %v1660, %v1685
    %v1687 = vlaneseq
    %v1688 = vshrl.u32 %v1687, 7
    %v1689 = vsub.s32 3, %v1688
    %v1690 = vrot.slane %v1660, %v1689
    %v1695 = vmul.f32 %v1678, %v1673
    %v1696 = vmul.f32 %v1682, %v1672
    %v1697 = vmul.f32 %v1686, %v1671
    %v1698 = vmul.f32 %v1690, %v1670
    %v1699 = vpack.c.bf16 %v1695, %v1695
    %v1700 = vpack.c.bf16 %v1696, %v1696
    %v1701 = vpack.c.bf16 %v1697, %v1697
    %v1702 = vpack.c.bf16 %v1698, %v1698
    %s1703 = scalar_lea.vmem %s5, 28
    %v1704 = vld [vmem:[%s1703] sm:$0xf]
    %v1705 = vld [vmem:[%s1703 + $0x4] sm:$0xf]
    %v1706 = vld [vmem:[%s1703 + $0x8] sm:$0xf]
    %v1707 = vld [vmem:[%s1703 + $0xc] sm:$0xf]
    %v1708 = vld [vmem:[%s1703 + $0x10] sm:$0xf]
    %v1709 = vld [vmem:[%s1703 + $0x14] sm:$0xf]
    %v1710 = vld [vmem:[%s1703 + $0x18] sm:$0xf]
    %v1718 = vunpack.c.l.b16 %v1704
    %v1719 = vunpack.c.l.b16 %v1705
    %v1720 = vunpack.c.l.b16 %v1706
    %v1721 = vunpack.c.l.b16 %v1707
    %v1722 = vunpack.c.l.b16 %v1708
    %v1723 = vunpack.c.l.b16 %v1709
    %v1724 = vunpack.c.l.b16 %v1710
    %v1725 = vpack.c.b16 %v1719, %v1718
    %v1726 = vpack.c.b16 %v1721, %v1720
    %v1727 = vpack.c.b16 %v1723, %v1722
    %v1728 = vpack.c.b16 %v1724, %v1724
    %vm1729 = vcmask 64512
    %v1731 = vsel %vm1729, %v1725, 0
    %v1734 = vsel %vm1729, %v1726, 0
    %v1737 = vsel %vm1729, %v1727, 0
    %v1740 = vsel %vm1729, %v1728, 0
    %v1743 = vsel %vm1594, %v1699, 0
    %v1746 = vsel %vm1594, %v1700, 0
    %v1749 = vsel %vm1594, %v1701, 0
    %v1752 = vsel %vm1594, %v1702, 0
    %1754 = vmatprep.subr.bf16.mxu0 %v1746
    %1755 = vmatpush1.bf16.msra.mxu0 %v1743
    %1756 = vmatprep.subr.bf16.mxu0 0
    %1757 = vmatpush1.bf16.msra.mxu0 0
    %1758 = vmatprep.subr.bf16.mxu0 0
    %1759 = vmatpush1.bf16.msra.mxu0 0
    %1760 = vmatprep.subr.bf16.mxu0 0
    %1761 = vmatpush1.bf16.msra.mxu0 0
    %1762 = vmatprep.subr.bf16.mxu0 0
    %1763 = vmatpush1.bf16.msra.mxu0 0
    %1764 = vmatprep.subr.bf16.mxu0 0
    %1765 = vmatpush1.bf16.msra.mxu0 0
    %1766 = vmatprep.subr.bf16.mxu0 0
    %1767 = vmatpush1.bf16.msra.mxu0 0
    %1768 = vmatprep.subr.bf16.mxu0 0
    %1769 = vmatpush1.bf16.msra.mxu0 0
    %1770 = vmatprep.subr.bf16.mxu0 0
    %1771 = vmatpush1.bf16.msra.mxu0 0
    %1772 = vmatprep.subr.bf16.mxu0 0
    %1773 = vmatpush1.bf16.msra.mxu0 0
    %1774 = vmatprep.subr.bf16.mxu0 0
    %1775 = vmatpush1.bf16.msra.mxu0 0
    %1776 = vmatprep.subr.bf16.mxu0 0
    %1777 = vmatpush1.bf16.msra.mxu0 0
    %1778 = vmatprep.subr.bf16.mxu0 0
    %1779 = vmatpush1.bf16.msra.mxu0 0
    %1780 = vmatprep.subr.bf16.mxu0 0
    %1781 = vmatpush1.bf16.msra.mxu0 0
    %1782 = vmatprep.subr.bf16.mxu0 0
    %1783 = vmatpush1.bf16.msra.mxu0 0
    %1784 = vmatprep.subr.bf16.mxu0 0
    %1785 = vmatpush1.bf16.msra.mxu0 0
    %1786 = vmatprep.mubr.bf16.mxu0 0
    %1787 = vmatmul.mubr.bf16.gmra.mrb[0].mxu0 %v1731
    %v1788 = vpop.f32.mrb[0].mxu0
    %v1789 = vadd.f32 0.0, %v1788
    %v1790 = vpop.f32.mrb[0].mxu0
    %v1791 = vadd.f32 0.0, %v1790
    %v1792 = vpop.f32.mrb[0].mxu0
    %v1793 = vadd.f32 0.0, %v1792
    %v1794 = vpop.f32.mrb[0].mxu0
    %v1795 = vadd.f32 0.0, %v1794
    %1796 = vmatprep.mubr.bf16.mxu0 0
    %1797 = vmatmul.mubr.bf16.gmra.mrb[0].mxu0 %v1734
    %v1798 = vpop.f32.mrb[0].mxu0
    %v1799 = vadd.f32 0.0, %v1798
    %v1800 = vpop.f32.mrb[0].mxu0
    %v1801 = vadd.f32 0.0, %v1800
    %v1802 = vpop.f32.mrb[0].mxu0
    %v1803 = vadd.f32 0.0, %v1802
    %v1804 = vpop.f32.mrb[0].mxu0
    %v1805 = vadd.f32 0.0, %v1804
    %1806 = vmatprep.mubr.bf16.mxu0 0
    %1807 = vmatmul.mubr.bf16.gmra.mrb[0].mxu0 %v1737
    %v1808 = vpop.f32.mrb[0].mxu0
    %v1809 = vadd.f32 0.0, %v1808
    %v1810 = vpop.f32.mrb[0].mxu0
    %v1811 = vadd.f32 0.0, %v1810
    %v1812 = vpop.f32.mrb[0].mxu0
    %v1813 = vadd.f32 0.0, %v1812
    %v1814 = vpop.f32.mrb[0].mxu0
    %v1815 = vadd.f32 0.0, %v1814
    %1816 = vmatprep.mubr.bf16.mxu0 0
    %1817 = vmatmul.mubr.bf16.gmra.mrb[0].mxu0 %v1740
    %v1818 = vpop.f32.mrb[0].mxu0
    %v1819 = vadd.f32 0.0, %v1818
    %v1820 = vpop.f32.mrb[0].mxu0
    %v1821 = vadd.f32 0.0, %v1820
    %v1822 = vpop.f32.mrb[0].mxu0
    %v1823 = vpop.f32.mrb[0].mxu0
    %1824 = vdwg.mxu0
    %1825 = vmatprep.subr.bf16.mxu0 %v1752
    %1826 = vmatpush1.bf16.msra.mxu0 %v1749
    %1827 = vmatprep.subr.bf16.mxu0 0
    %1828 = vmatpush1.bf16.msra.mxu0 0
    %1829 = vmatprep.subr.bf16.mxu0 0
    %1830 = vmatpush1.bf16.msra.mxu0 0
    %1831 = vmatprep.subr.bf16.mxu0 0
    %1832 = vmatpush1.bf16.msra.mxu0 0
    %1833 = vmatprep.subr.bf16.mxu0 0
    %1834 = vmatpush1.bf16.msra.mxu0 0
    %1835 = vmatprep.subr.bf16.mxu0 0
    %1836 = vmatpush1.bf16.msra.mxu0 0
    %1837 = vmatprep.subr.bf16.mxu0 0
    %1838 = vmatpush1.bf16.msra.mxu0 0
    %1839 = vmatprep.subr.bf16.mxu0 0
    %1840 = vmatpush1.bf16.msra.mxu0 0
    %1841 = vmatprep.subr.bf16.mxu0 0
    %1842 = vmatpush1.bf16.msra.mxu0 0
    %1843 = vmatprep.subr.bf16.mxu0 0
    %1844 = vmatpush1.bf16.msra.mxu0 0
    %1845 = vmatprep.subr.bf16.mxu0 0
    %1846 = vmatpush1.bf16.msra.mxu0 0
    %1847 = vmatprep.subr.bf16.mxu0 0
    %1848 = vmatpush1.bf16.msra.mxu0 0
    %1849 = vmatprep.subr.bf16.mxu0 0
    %1850 = vmatpush1.bf16.msra.mxu0 0
    %1851 = vmatprep.subr.bf16.mxu0 0
    %1852 = vmatpush1.bf16.msra.mxu0 0
    %1853 = vmatprep.subr.bf16.mxu0 0
    %1854 = vmatpush1.bf16.msra.mxu0 0
    %1855 = vmatprep.subr.bf16.mxu0 0
    %1856 = vmatpush1.bf16.msra.mxu0 0
    %1857 = vmatprep.mubr.bf16.mxu0 0
    %1858 = vmatmul.mubr.bf16.gmra.mrb[0].mxu0 %v1731
    %v1859 = vpop.f32.mrb[0].mxu0
    %v1860 = vadd.f32 0.0, %v1859
    %v1861 = vpop.f32.mrb[0].mxu0
    %v1862 = vadd.f32 0.0, %v1861
    %v1863 = vpop.f32.mrb[0].mxu0
    %v1864 = vadd.f32 0.0, %v1863
    %v1865 = vpop.f32.mrb[0].mxu0
    %v1866 = vadd.f32 0.0, %v1865
    %1867 = vmatprep.mubr.bf16.mxu0 0
    %1868 = vmatmul.mubr.bf16.gmra.mrb[0].mxu0 %v1734
    %v1869 = vpop.f32.mrb[0].mxu0
    %v1870 = vadd.f32 0.0, %v1869
    %v1871 = vpop.f32.mrb[0].mxu0
    %v1872 = vadd.f32 0.0, %v1871
    %v1873 = vpop.f32.mrb[0].mxu0
    %v1874 = vadd.f32 0.0, %v1873
    %v1875 = vpop.f32.mrb[0].mxu0
    %v1876 = vadd.f32 0.0, %v1875
    %1877 = vmatprep.mubr.bf16.mxu0 0
    %1878 = vmatmul.mubr.bf16.gmra.mrb[0].mxu0 %v1737
    %v1879 = vpop.f32.mrb[0].mxu0
    %v1880 = vadd.f32 0.0, %v1879
    %v1881 = vpop.f32.mrb[0].mxu0
    %v1882 = vadd.f32 0.0, %v1881
    %v1883 = vpop.f32.mrb[0].mxu0
    %v1884 = vadd.f32 0.0, %v1883
    %v1885 = vpop.f32.mrb[0].mxu0
    %v1886 = vadd.f32 0.0, %v1885
    %1887 = vmatprep.mubr.bf16.mxu0 0
    %1888 = vmatmul.mubr.bf16.gmra.mrb[0].mxu0 %v1740
    %v1889 = vpop.f32.mrb[0].mxu0
    %v1890 = vadd.f32 0.0, %v1889
    %v1891 = vpop.f32.mrb[0].mxu0
    %v1892 = vadd.f32 0.0, %v1891
    %v1893 = vpop.f32.mrb[0].mxu0
    %v1894 = vpop.f32.mrb[0].mxu0
    %1895 = vdwg.mxu0
    %v1903 = vunpack.c.l.b16 %v1652
    %v1904 = vunpack.c.l.b16 %v1653
    %v1905 = vunpack.c.l.b16 %v1654
    %v1906 = vunpack.c.l.b16 %v1655
    %v1907 = vunpack.c.l.b16 %v1656
    %v1908 = vunpack.c.l.b16 %v1657
    %v1909 = vunpack.c.l.b16 %v1658
    %v1910 = vpack.c.b16 %v1904, %v1903
    %v1911 = vpack.c.b16 %v1906, %v1905
    %v1912 = vpack.c.b16 %v1908, %v1907
    %v1913 = vpack.c.b16 %v1909, %v1909
    %v1915 = vsel %vm1729, %v1910, 0
    %v1918 = vsel %vm1729, %v1911, 0
    %v1921 = vsel %vm1729, %v1912, 0
    %v1924 = vsel %vm1729, %v1913, 0
    %v1927 = vsel %vm1594, %v1648, 0
    %v1930 = vsel %vm1594, %v1649, 0
    %v1933 = vsel %vm1594, %v1650, 0
    %v1936 = vsel %vm1594, %v1651, 0
    %1938 = vmatprep.subr.bf16.mxu0 %v1930
    %1939 = vmatpush1.bf16.msra.mxu0 %v1927
    %1940 = vmatprep.subr.bf16.mxu0 0
    %1941 = vmatpush1.bf16.msra.mxu0 0
    %1942 = vmatprep.subr.bf16.mxu0 0
    %1943 = vmatpush1.bf16.msra.mxu0 0
    %1944 = vmatprep.subr.bf16.mxu0 0
    %1945 = vmatpush1.bf16.msra.mxu0 0
    %1946 = vmatprep.subr.bf16.mxu0 0
    %1947 = vmatpush1.bf16.msra.mxu0 0
    %1948 = vmatprep.subr.bf16.mxu0 0
    %1949 = vmatpush1.bf16.msra.mxu0 0
    %1950 = vmatprep.subr.bf16.mxu0 0
    %1951 = vmatpush1.bf16.msra.mxu0 0
    %1952 = vmatprep.subr.bf16.mxu0 0
    %1953 = vmatpush1.bf16.msra.mxu0 0
    %1954 = vmatprep.subr.bf16.mxu0 0
    %1955 = vmatpush1.bf16.msra.mxu0 0
    %1956 = vmatprep.subr.bf16.mxu0 0
    %1957 = vmatpush1.bf16.msra.mxu0 0
    %1958 = vmatprep.subr.bf16.mxu0 0
    %1959 = vmatpush1.bf16.msra.mxu0 0
    %1960 = vmatprep.subr.bf16.mxu0 0
    %1961 = vmatpush1.bf16.msra.mxu0 0
    %1962 = vmatprep.subr.bf16.mxu0 0
    %1963 = vmatpush1.bf16.msra.mxu0 0
    %1964 = vmatprep.subr.bf16.mxu0 0
    %1965 = vmatpush1.bf16.msra.mxu0 0
    %1966 = vmatprep.subr.bf16.mxu0 0
    %1967 = vmatpush1.bf16.msra.mxu0 0
    %1968 = vmatprep.subr.bf16.mxu0 0
    %1969 = vmatpush1.bf16.msra.mxu0 0
    %1970 = vmatprep.mubr.bf16.mxu0 0
    %1971 = vmatmul.mubr.bf16.gmra.mrb[0].mxu0 %v1915
    %v1972 = vpop.f32.mrb[0].mxu0
    %v1973 = vadd.f32 %v1789, %v1972
    %v1974 = vpop.f32.mrb[0].mxu0
    %v1975 = vadd.f32 %v1791, %v1974
    %v1976 = vpop.f32.mrb[0].mxu0
    %v1977 = vadd.f32 %v1793, %v1976
    %v1978 = vpop.f32.mrb[0].mxu0
    %v1979 = vadd.f32 %v1795, %v1978
    %1980 = vmatprep.mubr.bf16.mxu0 0
    %1981 = vmatmul.mubr.bf16.gmra.mrb[0].mxu0 %v1918
    %v1982 = vpop.f32.mrb[0].mxu0
    %v1983 = vadd.f32 %v1799, %v1982
    %v1984 = vpop.f32.mrb[0].mxu0
    %v1985 = vadd.f32 %v1801, %v1984
    %v1986 = vpop.f32.mrb[0].mxu0
    %v1987 = vadd.f32 %v1803, %v1986
    %v1988 = vpop.f32.mrb[0].mxu0
    %v1989 = vadd.f32 %v1805, %v1988
    %1990 = vmatprep.mubr.bf16.mxu0 0
    %1991 = vmatmul.mubr.bf16.gmra.mrb[0].mxu0 %v1921
    %v1992 = vpop.f32.mrb[0].mxu0
    %v1993 = vadd.f32 %v1809, %v1992
    %v1994 = vpop.f32.mrb[0].mxu0
    %v1995 = vadd.f32 %v1811, %v1994
    %v1996 = vpop.f32.mrb[0].mxu0
    %v1997 = vadd.f32 %v1813, %v1996
    %v1998 = vpop.f32.mrb[0].mxu0
    %v1999 = vadd.f32 %v1815, %v1998
    %2000 = vmatprep.mubr.bf16.mxu0 0
    %2001 = vmatmul.mubr.bf16.gmra.mrb[0].mxu0 %v1924
    %v2002 = vpop.f32.mrb[0].mxu0
    %v2003 = vadd.f32 %v1819, %v2002
    %v2004 = vpop.f32.mrb[0].mxu0
    %v2005 = vadd.f32 %v1821, %v2004
    %v2006 = vpop.f32.mrb[0].mxu0
    %v2007 = vpop.f32.mrb[0].mxu0
    %2008 = vdwg.mxu0
    %2009 = vmatprep.subr.bf16.mxu0 %v1936
    %2010 = vmatpush1.bf16.msra.mxu0 %v1933
    %2011 = vmatprep.subr.bf16.mxu0 0
    %2012 = vmatpush1.bf16.msra.mxu0 0
    %2013 = vmatprep.subr.bf16.mxu0 0
    %2014 = vmatpush1.bf16.msra.mxu0 0
    %2015 = vmatprep.subr.bf16.mxu0 0
    %2016 = vmatpush1.bf16.msra.mxu0 0
    %2017 = vmatprep.subr.bf16.mxu0 0
    %2018 = vmatpush1.bf16.msra.mxu0 0
    %2019 = vmatprep.subr.bf16.mxu0 0
    %2020 = vmatpush1.bf16.msra.mxu0 0
    %2021 = vmatprep.subr.bf16.mxu0 0
    %2022 = vmatpush1.bf16.msra.mxu0 0
    %2023 = vmatprep.subr.bf16.mxu0 0
    %2024 = vmatpush1.bf16.msra.mxu0 0
    %2025 = vmatprep.subr.bf16.mxu0 0
    %2026 = vmatpush1.bf16.msra.mxu0 0
    %2027 = vmatprep.subr.bf16.mxu0 0
    %2028 = vmatpush1.bf16.msra.mxu0 0
    %2029 = vmatprep.subr.bf16.mxu0 0
    %2030 = vmatpush1.bf16.msra.mxu0 0
    %2031 = vmatprep.subr.bf16.mxu0 0
    %2032 = vmatpush1.bf16.msra.mxu0 0
    %2033 = vmatprep.subr.bf16.mxu0 0
    %2034 = vmatpush1.bf16.msra.mxu0 0
    %2035 = vmatprep.subr.bf16.mxu0 0
    %2036 = vmatpush1.bf16.msra.mxu0 0
    %2037 = vmatprep.subr.bf16.mxu0 0
    %2038 = vmatpush1.bf16.msra.mxu0 0
    %2039 = vmatprep.subr.bf16.mxu0 0
    %2040 = vmatpush1.bf16.msra.mxu0 0
    %2041 = vmatprep.mubr.bf16.mxu0 0
    %2042 = vmatmul.mubr.bf16.gmra.mrb[0].mxu0 %v1915
    %v2043 = vpop.f32.mrb[0].mxu0
    %v2044 = vadd.f32 %v1860, %v2043
    %v2045 = vpop.f32.mrb[0].mxu0
    %v2046 = vadd.f32 %v1862, %v2045
    %v2047 = vpop.f32.mrb[0].mxu0
    %v2048 = vadd.f32 %v1864, %v2047
    %v2049 = vpop.f32.mrb[0].mxu0
    %v2050 = vadd.f32 %v1866, %v2049
    %2051 = vmatprep.mubr.bf16.mxu0 0
    %2052 = vmatmul.mubr.bf16.gmra.mrb[0].mxu0 %v1918
    %v2053 = vpop.f32.mrb[0].mxu0
    %v2054 = vadd.f32 %v1870, %v2053
    %v2055 = vpop.f32.mrb[0].mxu0
    %v2056 = vadd.f32 %v1872, %v2055
    %v2057 = vpop.f32.mrb[0].mxu0
    %v2058 = vadd.f32 %v1874, %v2057
    %v2059 = vpop.f32.mrb[0].mxu0
    %v2060 = vadd.f32 %v1876, %v2059
    %2061 = vmatprep.mubr.bf16.mxu0 0
    %2062 = vmatmul.mubr.bf16.gmra.mrb[0].mxu0 %v1921
    %v2063 = vpop.f32.mrb[0].mxu0
    %v2064 = vadd.f32 %v1880, %v2063
    %v2065 = vpop.f32.mrb[0].mxu0
    %v2066 = vadd.f32 %v1882, %v2065
    %v2067 = vpop.f32.mrb[0].mxu0
    %v2068 = vadd.f32 %v1884, %v2067
    %v2069 = vpop.f32.mrb[0].mxu0
    %v2070 = vadd.f32 %v1886, %v2069
    %2071 = vmatprep.mubr.bf16.mxu0 0
    %2072 = vmatmul.mubr.bf16.gmra.mrb[0].mxu0 %v1924
    %v2073 = vpop.f32.mrb[0].mxu0
    %v2074 = vadd.f32 %v1890, %v2073
    %v2075 = vpop.f32.mrb[0].mxu0
    %v2076 = vadd.f32 %v1892, %v2075
    %v2077 = vpop.f32.mrb[0].mxu0
    %v2078 = vpop.f32.mrb[0].mxu0
    %2079 = vdwg.mxu0
    %2080 = vrot.lane.b32.xlu0 %v1605, 16
    %v2081 = vpop.permute.xlu0 %2080
    %2082 = vrot.lane.b32.xlu0 %v1606, 16
    %v2083 = vpop.permute.xlu0 %2082
    %2084 = vrot.lane.b32.xlu0 %v1607, 16
    %v2085 = vpop.permute.xlu0 %2084
    %2086 = vrot.lane.b32.xlu0 %v1608, 16
    %v2087 = vpop.permute.xlu0 %2086
    %v2088 = vsel %vm82, %v2085, %v2087
    %v2089 = vsel %vm82, %v2083, %v2085
    %v2090 = vsel %vm82, %v2081, %v2083
    %v2091 = vsel %vm82, %v2087, %v2081
    %v2092 = vmul.f32 %v95, %v2091
    %v2093 = vmul.f32 %v99, %v2090
    %v2094 = vmul.f32 %v103, %v2089
    %v2095 = vmul.f32 %v107, %v2088
    %v2096 = vpack.c.bf16 %v2092, %v2092
    %v2097 = vpack.c.bf16 %v2093, %v2093
    %v2098 = vpack.c.bf16 %v2094, %v2094
    %v2099 = vpack.c.bf16 %v2095, %v2095
    %s2100 = scalar_lea.vmem %s5, 56
    %v2101 = vld [vmem:[%s2100] sm:$0xf]
    %v2102 = vld [vmem:[%s2100 + $0x4] sm:$0xf]
    %v2103 = vld [vmem:[%s2100 + $0x8] sm:$0xf]
    %v2104 = vld [vmem:[%s2100 + $0xc] sm:$0xf]
    %v2105 = vld [vmem:[%s2100 + $0x10] sm:$0xf]
    %v2106 = vld [vmem:[%s2100 + $0x14] sm:$0xf]
    %v2107 = vld [vmem:[%s2100 + $0x18] sm:$0xf]
    %v2115 = vunpack.c.l.b16 %v2101
    %v2116 = vunpack.c.l.b16 %v2102
    %v2117 = vunpack.c.l.b16 %v2103
    %v2118 = vunpack.c.l.b16 %v2104
    %v2119 = vunpack.c.l.b16 %v2105
    %v2120 = vunpack.c.l.b16 %v2106
    %v2121 = vunpack.c.l.b16 %v2107
    %v2122 = vpack.c.b16 %v2116, %v2115
    %v2123 = vpack.c.b16 %v2118, %v2117
    %v2124 = vpack.c.b16 %v2120, %v2119
    %v2125 = vpack.c.b16 %v2121, %v2121
    %v2127 = vsel %vm1729, %v2122, 0
    %v2130 = vsel %vm1729, %v2123, 0
    %v2133 = vsel %vm1729, %v2124, 0
    %v2136 = vsel %vm1729, %v2125, 0
    %v2139 = vsel %vm1594, %v2096, 0
    %v2142 = vsel %vm1594, %v2097, 0
    %v2145 = vsel %vm1594, %v2098, 0
    %v2148 = vsel %vm1594, %v2099, 0
    %2150 = vmatprep.subr.bf16.mxu0 %v2142
    %2151 = vmatpush1.bf16.msra.mxu0 %v2139
    %2152 = vmatprep.subr.bf16.mxu0 0
    %2153 = vmatpush1.bf16.msra.mxu0 0
    %2154 = vmatprep.subr.bf16.mxu0 0
    %2155 = vmatpush1.bf16.msra.mxu0 0
    %2156 = vmatprep.subr.bf16.mxu0 0
    %2157 = vmatpush1.bf16.msra.mxu0 0
    %2158 = vmatprep.subr.bf16.mxu0 0
    %2159 = vmatpush1.bf16.msra.mxu0 0
    %2160 = vmatprep.subr.bf16.mxu0 0
    %2161 = vmatpush1.bf16.msra.mxu0 0
    %2162 = vmatprep.subr.bf16.mxu0 0
    %2163 = vmatpush1.bf16.msra.mxu0 0
    %2164 = vmatprep.subr.bf16.mxu0 0
    %2165 = vmatpush1.bf16.msra.mxu0 0
    %2166 = vmatprep.subr.bf16.mxu0 0
    %2167 = vmatpush1.bf16.msra.mxu0 0
    %2168 = vmatprep.subr.bf16.mxu0 0
    %2169 = vmatpush1.bf16.msra.mxu0 0
    %2170 = vmatprep.subr.bf16.mxu0 0
    %2171 = vmatpush1.bf16.msra.mxu0 0
    %2172 = vmatprep.subr.bf16.mxu0 0
    %2173 = vmatpush1.bf16.msra.mxu0 0
    %2174 = vmatprep.subr.bf16.mxu0 0
    %2175 = vmatpush1.bf16.msra.mxu0 0
    %2176 = vmatprep.subr.bf16.mxu0 0
    %2177 = vmatpush1.bf16.msra.mxu0 0
    %2178 = vmatprep.subr.bf16.mxu0 0
    %2179 = vmatpush1.bf16.msra.mxu0 0
    %2180 = vmatprep.subr.bf16.mxu0 0
    %2181 = vmatpush1.bf16.msra.mxu0 0
    %2182 = vmatprep.mubr.bf16.mxu0 0
    %2183 = vmatmul.mubr.bf16.gmra.mrb[0].mxu0 %v2127
    %v2184 = vpop.f32.mrb[0].mxu0
    %v2185 = vadd.f32 0.0, %v2184
    %v2186 = vpop.f32.mrb[0].mxu0
    %v2187 = vadd.f32 0.0, %v2186
    %v2188 = vpop.f32.mrb[0].mxu0
    %v2189 = vadd.f32 0.0, %v2188
    %v2190 = vpop.f32.mrb[0].mxu0
    %v2191 = vadd.f32 0.0, %v2190
    %2192 = vmatprep.mubr.bf16.mxu0 0
    %2193 = vmatmul.mubr.bf16.gmra.mrb[0].mxu0 %v2130
    %v2194 = vpop.f32.mrb[0].mxu0
    %v2195 = vadd.f32 0.0, %v2194
    %v2196 = vpop.f32.mrb[0].mxu0
    %v2197 = vadd.f32 0.0, %v2196
    %v2198 = vpop.f32.mrb[0].mxu0
    %v2199 = vadd.f32 0.0, %v2198
    %v2200 = vpop.f32.mrb[0].mxu0
    %v2201 = vadd.f32 0.0, %v2200
    %2202 = vmatprep.mubr.bf16.mxu0 0
    %2203 = vmatmul.mubr.bf16.gmra.mrb[0].mxu0 %v2133
    %v2204 = vpop.f32.mrb[0].mxu0
    %v2205 = vadd.f32 0.0, %v2204
    %v2206 = vpop.f32.mrb[0].mxu0
    %v2207 = vadd.f32 0.0, %v2206
    %v2208 = vpop.f32.mrb[0].mxu0
    %v2209 = vadd.f32 0.0, %v2208
    %v2210 = vpop.f32.mrb[0].mxu0
    %v2211 = vadd.f32 0.0, %v2210
    %2212 = vmatprep.mubr.bf16.mxu0 0
    %2213 = vmatmul.mubr.bf16.gmra.mrb[0].mxu0 %v2136
    %v2214 = vpop.f32.mrb[0].mxu0
    %v2215 = vadd.f32 0.0, %v2214
    %v2216 = vpop.f32.mrb[0].mxu0
    %v2217 = vadd.f32 0.0, %v2216
    %v2218 = vpop.f32.mrb[0].mxu0
    %v2219 = vpop.f32.mrb[0].mxu0
    %2220 = vdwg.mxu0
    %2221 = vmatprep.subr.bf16.mxu0 %v2148
    %2222 = vmatpush1.bf16.msra.mxu0 %v2145
    %2223 = vmatprep.subr.bf16.mxu0 0
    %2224 = vmatpush1.bf16.msra.mxu0 0
    %2225 = vmatprep.subr.bf16.mxu0 0
    %2226 = vmatpush1.bf16.msra.mxu0 0
    %2227 = vmatprep.subr.bf16.mxu0 0
    %2228 = vmatpush1.bf16.msra.mxu0 0
    %2229 = vmatprep.subr.bf16.mxu0 0
    %2230 = vmatpush1.bf16.msra.mxu0 0
    %2231 = vmatprep.subr.bf16.mxu0 0
    %2232 = vmatpush1.bf16.msra.mxu0 0
    %2233 = vmatprep.subr.bf16.mxu0 0
    %2234 = vmatpush1.bf16.msra.mxu0 0
    %2235 = vmatprep.subr.bf16.mxu0 0
    %2236 = vmatpush1.bf16.msra.mxu0 0
    %2237 = vmatprep.subr.bf16.mxu0 0
    %2238 = vmatpush1.bf16.msra.mxu0 0
    %2239 = vmatprep.subr.bf16.mxu0 0
    %2240 = vmatpush1.bf16.msra.mxu0 0
    %2241 = vmatprep.subr.bf16.mxu0 0
    %2242 = vmatpush1.bf16.msra.mxu0 0
    %2243 = vmatprep.subr.bf16.mxu0 0
    %2244 = vmatpush1.bf16.msra.mxu0 0
    %2245 = vmatprep.subr.bf16.mxu0 0
    %2246 = vmatpush1.bf16.msra.mxu0 0
    %2247 = vmatprep.subr.bf16.mxu0 0
    %2248 = vmatpush1.bf16.msra.mxu0 0
    %2249 = vmatprep.subr.bf16.mxu0 0
    %2250 = vmatpush1.bf16.msra.mxu0 0
    %2251 = vmatprep.subr.bf16.mxu0 0
    %2252 = vmatpush1.bf16.msra.mxu0 0
    %2253 = vmatprep.mubr.bf16.mxu0 0
    %2254 = vmatmul.mubr.bf16.gmra.mrb[0].mxu0 %v2127
    %v2255 = vpop.f32.mrb[0].mxu0
    %v2256 = vadd.f32 0.0, %v2255
    %v2257 = vpop.f32.mrb[0].mxu0
    %v2258 = vadd.f32 0.0, %v2257
    %v2259 = vpop.f32.mrb[0].mxu0
    %v2260 = vadd.f32 0.0, %v2259
    %v2261 = vpop.f32.mrb[0].mxu0
    %v2262 = vadd.f32 0.0, %v2261
    %2263 = vmatprep.mubr.bf16.mxu0 0
    %2264 = vmatmul.mubr.bf16.gmra.mrb[0].mxu0 %v2130
    %v2265 = vpop.f32.mrb[0].mxu0
    %v2266 = vadd.f32 0.0, %v2265
    %v2267 = vpop.f32.mrb[0].mxu0
    %v2268 = vadd.f32 0.0, %v2267
    %v2269 = vpop.f32.mrb[0].mxu0
    %v2270 = vadd.f32 0.0, %v2269
    %v2271 = vpop.f32.mrb[0].mxu0
    %v2272 = vadd.f32 0.0, %v2271
    %2273 = vmatprep.mubr.bf16.mxu0 0
    %2274 = vmatmul.mubr.bf16.gmra.mrb[0].mxu0 %v2133
    %v2275 = vpop.f32.mrb[0].mxu0
    %v2276 = vadd.f32 0.0, %v2275
    %v2277 = vpop.f32.mrb[0].mxu0
    %v2278 = vadd.f32 0.0, %v2277
    %v2279 = vpop.f32.mrb[0].mxu0
    %v2280 = vadd.f32 0.0, %v2279
    %v2281 = vpop.f32.mrb[0].mxu0
    %v2282 = vadd.f32 0.0, %v2281
    %2283 = vmatprep.mubr.bf16.mxu0 0
    %2284 = vmatmul.mubr.bf16.gmra.mrb[0].mxu0 %v2136
    %v2285 = vpop.f32.mrb[0].mxu0
    %v2286 = vadd.f32 0.0, %v2285
    %v2287 = vpop.f32.mrb[0].mxu0
    %v2288 = vadd.f32 0.0, %v2287
    %v2289 = vpop.f32.mrb[0].mxu0
    %v2290 = vpop.f32.mrb[0].mxu0
    %2291 = vdwg.mxu0
    %v2292 = vadd.f32 %v1973, %v2185
    %v2293 = vadd.f32 %v1975, %v2187
    %v2294 = vadd.f32 %v2044, %v2256
    %v2295 = vadd.f32 %v2046, %v2258
    %v2296 = vadd.f32 %v1977, %v2189
    %v2297 = vadd.f32 %v1979, %v2191
    %v2298 = vadd.f32 %v2048, %v2260
    %v2299 = vadd.f32 %v2050, %v2262
    %v2300 = vadd.f32 %v1983, %v2195
    %v2301 = vadd.f32 %v1985, %v2197
    %v2302 = vadd.f32 %v2054, %v2266
    %v2303 = vadd.f32 %v2056, %v2268
    %v2304 = vadd.f32 %v1987, %v2199
    %v2305 = vadd.f32 %v1989, %v2201
    %v2306 = vadd.f32 %v2058, %v2270
    %v2307 = vadd.f32 %v2060, %v2272
    %v2308 = vadd.f32 %v1993, %v2205
    %v2309 = vadd.f32 %v1995, %v2207
    %v2310 = vadd.f32 %v2064, %v2276
    %v2311 = vadd.f32 %v2066, %v2278
    %v2312 = vadd.f32 %v1997, %v2209
    %v2313 = vadd.f32 %v1999, %v2211
    %v2314 = vadd.f32 %v2068, %v2280
    %v2315 = vadd.f32 %v2070, %v2282
    %v2316 = vadd.f32 %v2003, %v2215
    %v2317 = vadd.f32 %v2005, %v2217
    %v2318 = vadd.f32 %v2074, %v2286
    %v2319 = vadd.f32 %v2076, %v2288
    %v2320 = vpack.c.bf16 %v1605, %v1605
    %v2321 = vpack.c.bf16 %v1606, %v1606
    %v2322 = vpack.c.bf16 %v1607, %v1607
    %v2323 = vpack.c.bf16 %v1608, %v1608
    %s2324 = scalar_lea.vmem %s5, 84
    %v2325 = vld [vmem:[%s2324] sm:$0xf]
    %v2326 = vld [vmem:[%s2324 + $0x4] sm:$0xf]
    %v2327 = vld [vmem:[%s2324 + $0x8] sm:$0xf]
    %v2328 = vld [vmem:[%s2324 + $0xc] sm:$0xf]
    %v2329 = vld [vmem:[%s2324 + $0x10] sm:$0xf]
    %v2330 = vld [vmem:[%s2324 + $0x14] sm:$0xf]
    %v2331 = vld [vmem:[%s2324 + $0x18] sm:$0xf]
    %v2339 = vunpack.c.l.b16 %v2325
    %v2340 = vunpack.c.l.b16 %v2326
    %v2341 = vunpack.c.l.b16 %v2327
    %v2342 = vunpack.c.l.b16 %v2328
    %v2343 = vunpack.c.l.b16 %v2329
    %v2344 = vunpack.c.l.b16 %v2330
    %v2345 = vunpack.c.l.b16 %v2331
    %v2346 = vpack.c.b16 %v2340, %v2339
    %v2347 = vpack.c.b16 %v2342, %v2341
    %v2348 = vpack.c.b16 %v2344, %v2343
    %v2349 = vpack.c.b16 %v2345, %v2345
    %v2351 = vsel %vm1729, %v2346, 0
    %v2354 = vsel %vm1729, %v2347, 0
    %v2357 = vsel %vm1729, %v2348, 0
    %v2360 = vsel %vm1729, %v2349, 0
    %v2363 = vsel %vm1594, %v2320, 0
    %v2366 = vsel %vm1594, %v2321, 0
    %v2369 = vsel %vm1594, %v2322, 0
    %v2372 = vsel %vm1594, %v2323, 0
    %2374 = vmatprep.subr.bf16.mxu0 %v2366
    %2375 = vmatpush1.bf16.msra.mxu0 %v2363
    %2376 = vmatprep.subr.bf16.mxu0 0
    %2377 = vmatpush1.bf16.msra.mxu0 0
    %2378 = vmatprep.subr.bf16.mxu0 0
    %2379 = vmatpush1.bf16.msra.mxu0 0
    %2380 = vmatprep.subr.bf16.mxu0 0
    %2381 = vmatpush1.bf16.msra.mxu0 0
    %2382 = vmatprep.subr.bf16.mxu0 0
    %2383 = vmatpush1.bf16.msra.mxu0 0
    %2384 = vmatprep.subr.bf16.mxu0 0
    %2385 = vmatpush1.bf16.msra.mxu0 0
    %2386 = vmatprep.subr.bf16.mxu0 0
    %2387 = vmatpush1.bf16.msra.mxu0 0
    %2388 = vmatprep.subr.bf16.mxu0 0
    %2389 = vmatpush1.bf16.msra.mxu0 0
    %2390 = vmatprep.subr.bf16.mxu0 0
    %2391 = vmatpush1.bf16.msra.mxu0 0
    %2392 = vmatprep.subr.bf16.mxu0 0
    %2393 = vmatpush1.bf16.msra.mxu0 0
    %2394 = vmatprep.subr.bf16.mxu0 0
    %2395 = vmatpush1.bf16.msra.mxu0 0
    %2396 = vmatprep.subr.bf16.mxu0 0
    %2397 = vmatpush1.bf16.msra.mxu0 0
    %2398 = vmatprep.subr.bf16.mxu0 0
    %2399 = vmatpush1.bf16.msra.mxu0 0
    %2400 = vmatprep.subr.bf16.mxu0 0
    %2401 = vmatpush1.bf16.msra.mxu0 0
    %2402 = vmatprep.subr.bf16.mxu0 0
    %2403 = vmatpush1.bf16.msra.mxu0 0
    %2404 = vmatprep.subr.bf16.mxu0 0
    %2405 = vmatpush1.bf16.msra.mxu0 0
    %2406 = vmatprep.mubr.bf16.mxu0 0
    %2407 = vmatmul.mubr.bf16.gmra.mrb[0].mxu0 %v2351
    %v2408 = vpop.f32.mrb[0].mxu0
    %v2409 = vadd.f32 0.0, %v2408
    %v2410 = vpop.f32.mrb[0].mxu0
    %v2411 = vadd.f32 0.0, %v2410
    %v2412 = vpop.f32.mrb[0].mxu0
    %v2413 = vadd.f32 0.0, %v2412
    %v2414 = vpop.f32.mrb[0].mxu0
    %v2415 = vadd.f32 0.0, %v2414
    %2416 = vmatprep.mubr.bf16.mxu0 0
    %2417 = vmatmul.mubr.bf16.gmra.mrb[0].mxu0 %v2354
    %v2418 = vpop.f32.mrb[0].mxu0
    %v2419 = vadd.f32 0.0, %v2418
    %v2420 = vpop.f32.mrb[0].mxu0
    %v2421 = vadd.f32 0.0, %v2420
    %v2422 = vpop.f32.mrb[0].mxu0
    %v2423 = vadd.f32 0.0, %v2422
    %v2424 = vpop.f32.mrb[0].mxu0
    %v2425 = vadd.f32 0.0, %v2424
    %2426 = vmatprep.mubr.bf16.mxu0 0
    %2427 = vmatmul.mubr.bf16.gmra.mrb[0].mxu0 %v2357
    %v2428 = vpop.f32.mrb[0].mxu0
    %v2429 = vadd.f32 0.0, %v2428
    %v2430 = vpop.f32.mrb[0].mxu0
    %v2431 = vadd.f32 0.0, %v2430
    %v2432 = vpop.f32.mrb[0].mxu0
    %v2433 = vadd.f32 0.0, %v2432
    %v2434 = vpop.f32.mrb[0].mxu0
    %v2435 = vadd.f32 0.0, %v2434
    %2436 = vmatprep.mubr.bf16.mxu0 0
    %2437 = vmatmul.mubr.bf16.gmra.mrb[0].mxu0 %v2360
    %v2438 = vpop.f32.mrb[0].mxu0
    %v2439 = vadd.f32 0.0, %v2438
    %v2440 = vpop.f32.mrb[0].mxu0
    %v2441 = vadd.f32 0.0, %v2440
    %v2442 = vpop.f32.mrb[0].mxu0
    %v2443 = vpop.f32.mrb[0].mxu0
    %2444 = vdwg.mxu0
    %2445 = vmatprep.subr.bf16.mxu0 %v2372
    %2446 = vmatpush1.bf16.msra.mxu0 %v2369
    %2447 = vmatprep.subr.bf16.mxu0 0
    %2448 = vmatpush1.bf16.msra.mxu0 0
    %2449 = vmatprep.subr.bf16.mxu0 0
    %2450 = vmatpush1.bf16.msra.mxu0 0
    %2451 = vmatprep.subr.bf16.mxu0 0
    %2452 = vmatpush1.bf16.msra.mxu0 0
    %2453 = vmatprep.subr.bf16.mxu0 0
    %2454 = vmatpush1.bf16.msra.mxu0 0
    %2455 = vmatprep.subr.bf16.mxu0 0
    %2456 = vmatpush1.bf16.msra.mxu0 0
    %2457 = vmatprep.subr.bf16.mxu0 0
    %2458 = vmatpush1.bf16.msra.mxu0 0
    %2459 = vmatprep.subr.bf16.mxu0 0
    %2460 = vmatpush1.bf16.msra.mxu0 0
    %2461 = vmatprep.subr.bf16.mxu0 0
    %2462 = vmatpush1.bf16.msra.mxu0 0
    %2463 = vmatprep.subr.bf16.mxu0 0
    %2464 = vmatpush1.bf16.msra.mxu0 0
    %2465 = vmatprep.subr.bf16.mxu0 0
    %2466 = vmatpush1.bf16.msra.mxu0 0
    %2467 = vmatprep.subr.bf16.mxu0 0
    %2468 = vmatpush1.bf16.msra.mxu0 0
    %2469 = vmatprep.subr.bf16.mxu0 0
    %2470 = vmatpush1.bf16.msra.mxu0 0
    %2471 = vmatprep.subr.bf16.mxu0 0
    %2472 = vmatpush1.bf16.msra.mxu0 0
    %2473 = vmatprep.subr.bf16.mxu0 0
    %2474 = vmatpush1.bf16.msra.mxu0 0
    %2475 = vmatprep.subr.bf16.mxu0 0
    %2476 = vmatpush1.bf16.msra.mxu0 0
    %2477 = vmatprep.mubr.bf16.mxu0 0
    %2478 = vmatmul.mubr.bf16.gmra.mrb[0].mxu0 %v2351
    %v2479 = vpop.f32.mrb[0].mxu0
    %v2480 = vadd.f32 0.0, %v2479
    %v2481 = vpop.f32.mrb[0].mxu0
    %v2482 = vadd.f32 0.0, %v2481
    %v2483 = vpop.f32.mrb[0].mxu0
    %v2484 = vadd.f32 0.0, %v2483
    %v2485 = vpop.f32.mrb[0].mxu0
    %v2486 = vadd.f32 0.0, %v2485
    %2487 = vmatprep.mubr.bf16.mxu0 0
    %2488 = vmatmul.mubr.bf16.gmra.mrb[0].mxu0 %v2354
    %v2489 = vpop.f32.mrb[0].mxu0
    %v2490 = vadd.f32 0.0, %v2489
    %v2491 = vpop.f32.mrb[0].mxu0
    %v2492 = vadd.f32 0.0, %v2491
    %v2493 = vpop.f32.mrb[0].mxu0
    %v2494 = vadd.f32 0.0, %v2493
    %v2495 = vpop.f32.mrb[0].mxu0
    %v2496 = vadd.f32 0.0, %v2495
    %2497 = vmatprep.mubr.bf16.mxu0 0
    %2498 = vmatmul.mubr.bf16.gmra.mrb[0].mxu0 %v2357
    %v2499 = vpop.f32.mrb[0].mxu0
    %v2500 = vadd.f32 0.0, %v2499
    %v2501 = vpop.f32.mrb[0].mxu0
    %v2502 = vadd.f32 0.0, %v2501
    %v2503 = vpop.f32.mrb[0].mxu0
    %v2504 = vadd.f32 0.0, %v2503
    %v2505 = vpop.f32.mrb[0].mxu0
    %v2506 = vadd.f32 0.0, %v2505
    %2507 = vmatprep.mubr.bf16.mxu0 0
    %2508 = vmatmul.mubr.bf16.gmra.mrb[0].mxu0 %v2360
    %v2509 = vpop.f32.mrb[0].mxu0
    %v2510 = vadd.f32 0.0, %v2509
    %v2511 = vpop.f32.mrb[0].mxu0
    %v2512 = vadd.f32 0.0, %v2511
    %v2513 = vpop.f32.mrb[0].mxu0
    %v2514 = vpop.f32.mrb[0].mxu0
    %2515 = vdwg.mxu0
    %v2516 = vadd.f32 %v2292, %v2409
    %v2517 = vadd.f32 %v2293, %v2411
    %v2518 = vadd.f32 %v2294, %v2480
    %v2519 = vadd.f32 %v2295, %v2482
    %v2520 = vadd.f32 %v2296, %v2413
    %v2521 = vadd.f32 %v2297, %v2415
    %v2522 = vadd.f32 %v2298, %v2484
    %v2523 = vadd.f32 %v2299, %v2486
    %v2524 = vadd.f32 %v2300, %v2419
    %v2525 = vadd.f32 %v2301, %v2421
    %v2526 = vadd.f32 %v2302, %v2490
    %v2527 = vadd.f32 %v2303, %v2492
    %v2528 = vadd.f32 %v2304, %v2423
    %v2529 = vadd.f32 %v2305, %v2425
    %v2530 = vadd.f32 %v2306, %v2494
    %v2531 = vadd.f32 %v2307, %v2496
    %v2532 = vadd.f32 %v2308, %v2429
    %v2533 = vadd.f32 %v2309, %v2431
    %v2534 = vadd.f32 %v2310, %v2500
    %v2535 = vadd.f32 %v2311, %v2502
    %v2536 = vadd.f32 %v2312, %v2433
    %v2537 = vadd.f32 %v2313, %v2435
    %v2538 = vadd.f32 %v2314, %v2504
    %v2539 = vadd.f32 %v2315, %v2506
    %v2540 = vadd.f32 %v2316, %v2439
    %v2541 = vadd.f32 %v2317, %v2441
    %v2542 = vadd.f32 %v2318, %v2510
    %v2543 = vadd.f32 %v2319, %v2512
    %2544 = vrot.lane.b32.xlu0 %v1605, 112
    %v2545 = vpop.permute.xlu0 %2544
    %2546 = vrot.lane.b32.xlu0 %v1606, 112
    %v2547 = vpop.permute.xlu0 %2546
    %2548 = vrot.lane.b32.xlu0 %v1607, 112
    %v2549 = vpop.permute.xlu0 %2548
    %2550 = vrot.lane.b32.xlu0 %v1608, 112
    %v2551 = vpop.permute.xlu0 %2550
    %v2552 = vsel %vm624, %v2549, %v2551
    %v2553 = vsel %vm624, %v2547, %v2549
    %v2554 = vsel %vm624, %v2545, %v2547
    %v2555 = vsel %vm624, %v2551, %v2545
    %v2556 = vmul.f32 %v637, %v2554
    %v2557 = vmul.f32 %v641, %v2553
    %v2558 = vmul.f32 %v645, %v2552
    %v2559 = vmul.f32 %v649, %v2555
    %v2560 = vpack.c.bf16 %v2556, %v2556
    %v2561 = vpack.c.bf16 %v2557, %v2557
    %v2562 = vpack.c.bf16 %v2558, %v2558
    %v2563 = vpack.c.bf16 %v2559, %v2559
    %s2564 = scalar_lea.vmem %s5, 112
    %v2565 = vld [vmem:[%s2564] sm:$0xf]
    %v2566 = vld [vmem:[%s2564 + $0x4] sm:$0xf]
    %v2567 = vld [vmem:[%s2564 + $0x8] sm:$0xf]
    %v2568 = vld [vmem:[%s2564 + $0xc] sm:$0xf]
    %v2569 = vld [vmem:[%s2564 + $0x10] sm:$0xf]
    %v2570 = vld [vmem:[%s2564 + $0x14] sm:$0xf]
    %v2571 = vld [vmem:[%s2564 + $0x18] sm:$0xf]
    %v2579 = vunpack.c.l.b16 %v2565
    %v2580 = vunpack.c.l.b16 %v2566
    %v2581 = vunpack.c.l.b16 %v2567
    %v2582 = vunpack.c.l.b16 %v2568
    %v2583 = vunpack.c.l.b16 %v2569
    %v2584 = vunpack.c.l.b16 %v2570
    %v2585 = vunpack.c.l.b16 %v2571
    %v2586 = vpack.c.b16 %v2580, %v2579
    %v2587 = vpack.c.b16 %v2582, %v2581
    %v2588 = vpack.c.b16 %v2584, %v2583
    %v2589 = vpack.c.b16 %v2585, %v2585
    %v2591 = vsel %vm1729, %v2586, 0
    %v2594 = vsel %vm1729, %v2587, 0
    %v2597 = vsel %vm1729, %v2588, 0
    %v2600 = vsel %vm1729, %v2589, 0
    %v2603 = vsel %vm1594, %v2560, 0
    %v2606 = vsel %vm1594, %v2561, 0
    %v2609 = vsel %vm1594, %v2562, 0
    %v2612 = vsel %vm1594, %v2563, 0
    %2614 = vmatprep.subr.bf16.mxu0 %v2606
    %2615 = vmatpush1.bf16.msra.mxu0 %v2603
    %2616 = vmatprep.subr.bf16.mxu0 0
    %2617 = vmatpush1.bf16.msra.mxu0 0
    %2618 = vmatprep.subr.bf16.mxu0 0
    %2619 = vmatpush1.bf16.msra.mxu0 0
    %2620 = vmatprep.subr.bf16.mxu0 0
    %2621 = vmatpush1.bf16.msra.mxu0 0
    %2622 = vmatprep.subr.bf16.mxu0 0
    %2623 = vmatpush1.bf16.msra.mxu0 0
    %2624 = vmatprep.subr.bf16.mxu0 0
    %2625 = vmatpush1.bf16.msra.mxu0 0
    %2626 = vmatprep.subr.bf16.mxu0 0
    %2627 = vmatpush1.bf16.msra.mxu0 0
    %2628 = vmatprep.subr.bf16.mxu0 0
    %2629 = vmatpush1.bf16.msra.mxu0 0
    %2630 = vmatprep.subr.bf16.mxu0 0
    %2631 = vmatpush1.bf16.msra.mxu0 0
    %2632 = vmatprep.subr.bf16.mxu0 0
    %2633 = vmatpush1.bf16.msra.mxu0 0
    %2634 = vmatprep.subr.bf16.mxu0 0
    %2635 = vmatpush1.bf16.msra.mxu0 0
    %2636 = vmatprep.subr.bf16.mxu0 0
    %2637 = vmatpush1.bf16.msra.mxu0 0
    %2638 = vmatprep.subr.bf16.mxu0 0
    %2639 = vmatpush1.bf16.msra.mxu0 0
    %2640 = vmatprep.subr.bf16.mxu0 0
    %2641 = vmatpush1.bf16.msra.mxu0 0
    %2642 = vmatprep.subr.bf16.mxu0 0
    %2643 = vmatpush1.bf16.msra.mxu0 0
    %2644 = vmatprep.subr.bf16.mxu0 0
    %2645 = vmatpush1.bf16.msra.mxu0 0
    %2646 = vmatprep.mubr.bf16.mxu0 0
    %2647 = vmatmul.mubr.bf16.gmra.mrb[0].mxu0 %v2591
    %v2648 = vpop.f32.mrb[0].mxu0
    %v2649 = vadd.f32 0.0, %v2648
    %v2650 = vpop.f32.mrb[0].mxu0
    %v2651 = vadd.f32 0.0, %v2650
    %v2652 = vpop.f32.mrb[0].mxu0
    %v2653 = vadd.f32 0.0, %v2652
    %v2654 = vpop.f32.mrb[0].mxu0
    %v2655 = vadd.f32 0.0, %v2654
    %2656 = vmatprep.mubr.bf16.mxu0 0
    %2657 = vmatmul.mubr.bf16.gmra.mrb[0].mxu0 %v2594
    %v2658 = vpop.f32.mrb[0].mxu0
    %v2659 = vadd.f32 0.0, %v2658
    %v2660 = vpop.f32.mrb[0].mxu0
    %v2661 = vadd.f32 0.0, %v2660
    %v2662 = vpop.f32.mrb[0].mxu0
    %v2663 = vadd.f32 0.0, %v2662
    %v2664 = vpop.f32.mrb[0].mxu0
    %v2665 = vadd.f32 0.0, %v2664
    %2666 = vmatprep.mubr.bf16.mxu0 0
    %2667 = vmatmul.mubr.bf16.gmra.mrb[0].mxu0 %v2597
    %v2668 = vpop.f32.mrb[0].mxu0
    %v2669 = vadd.f32 0.0, %v2668
    %v2670 = vpop.f32.mrb[0].mxu0
    %v2671 = vadd.f32 0.0, %v2670
    %v2672 = vpop.f32.mrb[0].mxu0
    %v2673 = vadd.f32 0.0, %v2672
    %v2674 = vpop.f32.mrb[0].mxu0
    %v2675 = vadd.f32 0.0, %v2674
    %2676 = vmatprep.mubr.bf16.mxu0 0
    %2677 = vmatmul.mubr.bf16.gmra.mrb[0].mxu0 %v2600
    %v2678 = vpop.f32.mrb[0].mxu0
    %v2679 = vadd.f32 0.0, %v2678
    %v2680 = vpop.f32.mrb[0].mxu0
    %v2681 = vadd.f32 0.0, %v2680
    %v2682 = vpop.f32.mrb[0].mxu0
    %v2683 = vpop.f32.mrb[0].mxu0
    %2684 = vdwg.mxu0
    %2685 = vmatprep.subr.bf16.mxu0 %v2612
    %2686 = vmatpush1.bf16.msra.mxu0 %v2609
    %2687 = vmatprep.subr.bf16.mxu0 0
    %2688 = vmatpush1.bf16.msra.mxu0 0
    %2689 = vmatprep.subr.bf16.mxu0 0
    %2690 = vmatpush1.bf16.msra.mxu0 0
    %2691 = vmatprep.subr.bf16.mxu0 0
    %2692 = vmatpush1.bf16.msra.mxu0 0
    %2693 = vmatprep.subr.bf16.mxu0 0
    %2694 = vmatpush1.bf16.msra.mxu0 0
    %2695 = vmatprep.subr.bf16.mxu0 0
    %2696 = vmatpush1.bf16.msra.mxu0 0
    %2697 = vmatprep.subr.bf16.mxu0 0
    %2698 = vmatpush1.bf16.msra.mxu0 0
    %2699 = vmatprep.subr.bf16.mxu0 0
    %2700 = vmatpush1.bf16.msra.mxu0 0
    %2701 = vmatprep.subr.bf16.mxu0 0
    %2702 = vmatpush1.bf16.msra.mxu0 0
    %2703 = vmatprep.subr.bf16.mxu0 0
    %2704 = vmatpush1.bf16.msra.mxu0 0
    %2705 = vmatprep.subr.bf16.mxu0 0
    %2706 = vmatpush1.bf16.msra.mxu0 0
    %2707 = vmatprep.subr.bf16.mxu0 0
    %2708 = vmatpush1.bf16.msra.mxu0 0
    %2709 = vmatprep.subr.bf16.mxu0 0
    %2710 = vmatpush1.bf16.msra.mxu0 0
    %2711 = vmatprep.subr.bf16.mxu0 0
    %2712 = vmatpush1.bf16.msra.mxu0 0
    %2713 = vmatprep.subr.bf16.mxu0 0
    %2714 = vmatpush1.bf16.msra.mxu0 0
    %2715 = vmatprep.subr.bf16.mxu0 0
    %2716 = vmatpush1.bf16.msra.mxu0 0
    %2717 = vmatprep.mubr.bf16.mxu0 0
    %2718 = vmatmul.mubr.bf16.gmra.mrb[0].mxu0 %v2591
    %v2719 = vpop.f32.mrb[0].mxu0
    %v2720 = vadd.f32 0.0, %v2719
    %v2721 = vpop.f32.mrb[0].mxu0
    %v2722 = vadd.f32 0.0, %v2721
    %v2723 = vpop.f32.mrb[0].mxu0
    %v2724 = vadd.f32 0.0, %v2723
    %v2725 = vpop.f32.mrb[0].mxu0
    %v2726 = vadd.f32 0.0, %v2725
    %2727 = vmatprep.mubr.bf16.mxu0 0
    %2728 = vmatmul.mubr.bf16.gmra.mrb[0].mxu0 %v2594
    %v2729 = vpop.f32.mrb[0].mxu0
    %v2730 = vadd.f32 0.0, %v2729
    %v2731 = vpop.f32.mrb[0].mxu0
    %v2732 = vadd.f32 0.0, %v2731
    %v2733 = vpop.f32.mrb[0].mxu0
    %v2734 = vadd.f32 0.0, %v2733
    %v2735 = vpop.f32.mrb[0].mxu0
    %v2736 = vadd.f32 0.0, %v2735
    %2737 = vmatprep.mubr.bf16.mxu0 0
    %2738 = vmatmul.mubr.bf16.gmra.mrb[0].mxu0 %v2597
    %v2739 = vpop.f32.mrb[0].mxu0
    %v2740 = vadd.f32 0.0, %v2739
    %v2741 = vpop.f32.mrb[0].mxu0
    %v2742 = vadd.f32 0.0, %v2741
    %v2743 = vpop.f32.mrb[0].mxu0
    %v2744 = vadd.f32 0.0, %v2743
    %v2745 = vpop.f32.mrb[0].mxu0
    %v2746 = vadd.f32 0.0, %v2745
    %2747 = vmatprep.mubr.bf16.mxu0 0
    %2748 = vmatmul.mubr.bf16.gmra.mrb[0].mxu0 %v2600
    %v2749 = vpop.f32.mrb[0].mxu0
    %v2750 = vadd.f32 0.0, %v2749
    %v2751 = vpop.f32.mrb[0].mxu0
    %v2752 = vadd.f32 0.0, %v2751
    %v2753 = vpop.f32.mrb[0].mxu0
    %v2754 = vpop.f32.mrb[0].mxu0
    %2755 = vdwg.mxu0
    %v2756 = vadd.f32 %v2516, %v2649
    %v2757 = vadd.f32 %v2517, %v2651
    %v2758 = vadd.f32 %v2518, %v2720
    %v2759 = vadd.f32 %v2519, %v2722
    %v2760 = vadd.f32 %v2520, %v2653
    %v2761 = vadd.f32 %v2521, %v2655
    %v2762 = vadd.f32 %v2522, %v2724
    %v2763 = vadd.f32 %v2523, %v2726
    %v2764 = vadd.f32 %v2524, %v2659
    %v2765 = vadd.f32 %v2525, %v2661
    %v2766 = vadd.f32 %v2526, %v2730
    %v2767 = vadd.f32 %v2527, %v2732
    %v2768 = vadd.f32 %v2528, %v2663
    %v2769 = vadd.f32 %v2529, %v2665
    %v2770 = vadd.f32 %v2530, %v2734
    %v2771 = vadd.f32 %v2531, %v2736
    %v2772 = vadd.f32 %v2532, %v2669
    %v2773 = vadd.f32 %v2533, %v2671
    %v2774 = vadd.f32 %v2534, %v2740
    %v2775 = vadd.f32 %v2535, %v2742
    %v2776 = vadd.f32 %v2536, %v2673
    %v2777 = vadd.f32 %v2537, %v2675
    %v2778 = vadd.f32 %v2538, %v2744
    %v2779 = vadd.f32 %v2539, %v2746
    %v2780 = vadd.f32 %v2540, %v2679
    %v2781 = vadd.f32 %v2541, %v2681
    %v2782 = vadd.f32 %v2542, %v2750
    %v2783 = vadd.f32 %v2543, %v2752
    %s2784 = scalar_lea.vmem %s1, 5
    %v2785 = vld [vmem:[%s2784] ss:$8 sm:$0xf]
    %2786 = vrot.lane.b32.xlu0 %v1605, 96
    %v2787 = vpop.permute.xlu0 %2786
    %2788 = vrot.lane.b32.xlu0 %v1606, 96
    %v2789 = vpop.permute.xlu0 %2788
    %2790 = vrot.lane.b32.xlu0 %v1607, 96
    %v2791 = vpop.permute.xlu0 %2790
    %2792 = vrot.lane.b32.xlu0 %v1608, 96
    %v2793 = vpop.permute.xlu0 %2792
    %vm2794 = vcmp.lt.s32.totalorder %v81, 96
    %v2795 = vsel %vm2794, %v2791, %v2793
    %v2796 = vsel %vm2794, %v2789, %v2791
    %v2797 = vsel %vm2794, %v2787, %v2789
    %v2798 = vsel %vm2794, %v2793, %v2787
    %v2800 = vlaneseq
    %v2801 = vshrl.u32 %v2800, 7
    %v2802 = vsub.s32 0, %v2801
    %v2803 = vrot.slane %v2785, %v2802
    %v2804 = vlaneseq
    %v2805 = vshrl.u32 %v2804, 7
    %v2806 = vsub.s32 1, %v2805
    %v2807 = vrot.slane %v2785, %v2806
    %v2808 = vlaneseq
    %v2809 = vshrl.u32 %v2808, 7
    %v2810 = vsub.s32 2, %v2809
    %v2811 = vrot.slane %v2785, %v2810
    %v2812 = vlaneseq
    %v2813 = vshrl.u32 %v2812, 7
    %v2814 = vsub.s32 3, %v2813
    %v2815 = vrot.slane %v2785, %v2814
    %v2820 = vmul.f32 %v2803, %v2797
    %v2821 = vmul.f32 %v2807, %v2796
    %v2822 = vmul.f32 %v2811, %v2795
    %v2823 = vmul.f32 %v2815, %v2798
    %v2824 = vpack.c.bf16 %v2820, %v2820
    %v2825 = vpack.c.bf16 %v2821, %v2821
    %v2826 = vpack.c.bf16 %v2822, %v2822
    %v2827 = vpack.c.bf16 %v2823, %v2823
    %s2828 = scalar_lea.vmem %s5, 140
    %v2829 = vld [vmem:[%s2828] sm:$0xf]
    %v2830 = vld [vmem:[%s2828 + $0x4] sm:$0xf]
    %v2831 = vld [vmem:[%s2828 + $0x8] sm:$0xf]
    %v2832 = vld [vmem:[%s2828 + $0xc] sm:$0xf]
    %v2833 = vld [vmem:[%s2828 + $0x10] sm:$0xf]
    %v2834 = vld [vmem:[%s2828 + $0x14] sm:$0xf]
    %v2835 = vld [vmem:[%s2828 + $0x18] sm:$0xf]
    %v2843 = vunpack.c.l.b16 %v2829
    %v2844 = vunpack.c.l.b16 %v2830
    %v2845 = vunpack.c.l.b16 %v2831
    %v2846 = vunpack.c.l.b16 %v2832
    %v2847 = vunpack.c.l.b16 %v2833
    %v2848 = vunpack.c.l.b16 %v2834
    %v2849 = vunpack.c.l.b16 %v2835
    %v2850 = vpack.c.b16 %v2844, %v2843
    %v2851 = vpack.c.b16 %v2846, %v2845
    %v2852 = vpack.c.b16 %v2848, %v2847
    %v2853 = vpack.c.b16 %v2849, %v2849
    %v2855 = vsel %vm1729, %v2850, 0
    %v2858 = vsel %vm1729, %v2851, 0
    %v2861 = vsel %vm1729, %v2852, 0
    %v2864 = vsel %vm1729, %v2853, 0
    %v2867 = vsel %vm1594, %v2824, 0
    %v2870 = vsel %vm1594, %v2825, 0
    %v2873 = vsel %vm1594, %v2826, 0
    %v2876 = vsel %vm1594, %v2827, 0
    %2878 = vmatprep.subr.bf16.mxu0 %v2870
    %2879 = vmatpush1.bf16.msra.mxu0 %v2867
    %2880 = vmatprep.subr.bf16.mxu0 0
    %2881 = vmatpush1.bf16.msra.mxu0 0
    %2882 = vmatprep.subr.bf16.mxu0 0
    %2883 = vmatpush1.bf16.msra.mxu0 0
    %2884 = vmatprep.subr.bf16.mxu0 0
    %2885 = vmatpush1.bf16.msra.mxu0 0
    %2886 = vmatprep.subr.bf16.mxu0 0
    %2887 = vmatpush1.bf16.msra.mxu0 0
    %2888 = vmatprep.subr.bf16.mxu0 0
    %2889 = vmatpush1.bf16.msra.mxu0 0
    %2890 = vmatprep.subr.bf16.mxu0 0
    %2891 = vmatpush1.bf16.msra.mxu0 0
    %2892 = vmatprep.subr.bf16.mxu0 0
    %2893 = vmatpush1.bf16.msra.mxu0 0
    %2894 = vmatprep.subr.bf16.mxu0 0
    %2895 = vmatpush1.bf16.msra.mxu0 0
    %2896 = vmatprep.subr.bf16.mxu0 0
    %2897 = vmatpush1.bf16.msra.mxu0 0
    %2898 = vmatprep.subr.bf16.mxu0 0
    %2899 = vmatpush1.bf16.msra.mxu0 0
    %2900 = vmatprep.subr.bf16.mxu0 0
    %2901 = vmatpush1.bf16.msra.mxu0 0
    %2902 = vmatprep.subr.bf16.mxu0 0
    %2903 = vmatpush1.bf16.msra.mxu0 0
    %2904 = vmatprep.subr.bf16.mxu0 0
    %2905 = vmatpush1.bf16.msra.mxu0 0
    %2906 = vmatprep.subr.bf16.mxu0 0
    %2907 = vmatpush1.bf16.msra.mxu0 0
    %2908 = vmatprep.subr.bf16.mxu0 0
    %2909 = vmatpush1.bf16.msra.mxu0 0
    %2910 = vmatprep.mubr.bf16.mxu0 0
    %2911 = vmatmul.mubr.bf16.gmra.mrb[0].mxu0 %v2855
    %v2912 = vpop.f32.mrb[0].mxu0
    %v2913 = vadd.f32 0.0, %v2912
    %v2914 = vpop.f32.mrb[0].mxu0
    %v2915 = vadd.f32 0.0, %v2914
    %v2916 = vpop.f32.mrb[0].mxu0
    %v2917 = vadd.f32 0.0, %v2916
    %v2918 = vpop.f32.mrb[0].mxu0
    %v2919 = vadd.f32 0.0, %v2918
    %2920 = vmatprep.mubr.bf16.mxu0 0
    %2921 = vmatmul.mubr.bf16.gmra.mrb[0].mxu0 %v2858
    %v2922 = vpop.f32.mrb[0].mxu0
    %v2923 = vadd.f32 0.0, %v2922
    %v2924 = vpop.f32.mrb[0].mxu0
    %v2925 = vadd.f32 0.0, %v2924
    %v2926 = vpop.f32.mrb[0].mxu0
    %v2927 = vadd.f32 0.0, %v2926
    %v2928 = vpop.f32.mrb[0].mxu0
    %v2929 = vadd.f32 0.0, %v2928
    %2930 = vmatprep.mubr.bf16.mxu0 0
    %2931 = vmatmul.mubr.bf16.gmra.mrb[0].mxu0 %v2861
    %v2932 = vpop.f32.mrb[0].mxu0
    %v2933 = vadd.f32 0.0, %v2932
    %v2934 = vpop.f32.mrb[0].mxu0
    %v2935 = vadd.f32 0.0, %v2934
    %v2936 = vpop.f32.mrb[0].mxu0
    %v2937 = vadd.f32 0.0, %v2936
    %v2938 = vpop.f32.mrb[0].mxu0
    %v2939 = vadd.f32 0.0, %v2938
    %2940 = vmatprep.mubr.bf16.mxu0 0
    %2941 = vmatmul.mubr.bf16.gmra.mrb[0].mxu0 %v2864
    %v2942 = vpop.f32.mrb[0].mxu0
    %v2943 = vadd.f32 0.0, %v2942
    %v2944 = vpop.f32.mrb[0].mxu0
    %v2945 = vadd.f32 0.0, %v2944
    %v2946 = vpop.f32.mrb[0].mxu0
    %v2947 = vpop.f32.mrb[0].mxu0
    %2948 = vdwg.mxu0
    %2949 = vmatprep.subr.bf16.mxu0 %v2876
    %2950 = vmatpush1.bf16.msra.mxu0 %v2873
    %2951 = vmatprep.subr.bf16.mxu0 0
    %2952 = vmatpush1.bf16.msra.mxu0 0
    %2953 = vmatprep.subr.bf16.mxu0 0
    %2954 = vmatpush1.bf16.msra.mxu0 0
    %2955 = vmatprep.subr.bf16.mxu0 0
    %2956 = vmatpush1.bf16.msra.mxu0 0
    %2957 = vmatprep.subr.bf16.mxu0 0
    %2958 = vmatpush1.bf16.msra.mxu0 0
    %2959 = vmatprep.subr.bf16.mxu0 0
    %2960 = vmatpush1.bf16.msra.mxu0 0
    %2961 = vmatprep.subr.bf16.mxu0 0
    %2962 = vmatpush1.bf16.msra.mxu0 0
    %2963 = vmatprep.subr.bf16.mxu0 0
    %2964 = vmatpush1.bf16.msra.mxu0 0
    %2965 = vmatprep.subr.bf16.mxu0 0
    %2966 = vmatpush1.bf16.msra.mxu0 0
    %2967 = vmatprep.subr.bf16.mxu0 0
    %2968 = vmatpush1.bf16.msra.mxu0 0
    %2969 = vmatprep.subr.bf16.mxu0 0
    %2970 = vmatpush1.bf16.msra.mxu0 0
    %2971 = vmatprep.subr.bf16.mxu0 0
    %2972 = vmatpush1.bf16.msra.mxu0 0
    %2973 = vmatprep.subr.bf16.mxu0 0
    %2974 = vmatpush1.bf16.msra.mxu0 0
    %2975 = vmatprep.subr.bf16.mxu0 0
    %2976 = vmatpush1.bf16.msra.mxu0 0
    %2977 = vmatprep.subr.bf16.mxu0 0
    %2978 = vmatpush1.bf16.msra.mxu0 0
    %2979 = vmatprep.subr.bf16.mxu0 0
    %2980 = vmatpush1.bf16.msra.mxu0 0
    %2981 = vmatprep.mubr.bf16.mxu0 0
    %2982 = vmatmul.mubr.bf16.gmra.mrb[0].mxu0 %v2855
    %v2983 = vpop.f32.mrb[0].mxu0
    %v2984 = vadd.f32 0.0, %v2983
    %v2985 = vpop.f32.mrb[0].mxu0
    %v2986 = vadd.f32 0.0, %v2985
    %v2987 = vpop.f32.mrb[0].mxu0
    %v2988 = vadd.f32 0.0, %v2987
    %v2989 = vpop.f32.mrb[0].mxu0
    %v2990 = vadd.f32 0.0, %v2989
    %2991 = vmatprep.mubr.bf16.mxu0 0
    %2992 = vmatmul.mubr.bf16.gmra.mrb[0].mxu0 %v2858
    %v2993 = vpop.f32.mrb[0].mxu0
    %v2994 = vadd.f32 0.0, %v2993
    %v2995 = vpop.f32.mrb[0].mxu0
    %v2996 = vadd.f32 0.0, %v2995
    %v2997 = vpop.f32.mrb[0].mxu0
    %v2998 = vadd.f32 0.0, %v2997
    %v2999 = vpop.f32.mrb[0].mxu0
    %v3000 = vadd.f32 0.0, %v2999
    %3001 = vmatprep.mubr.bf16.mxu0 0
    %3002 = vmatmul.mubr.bf16.gmra.mrb[0].mxu0 %v2861
    %v3003 = vpop.f32.mrb[0].mxu0
    %v3004 = vadd.f32 0.0, %v3003
    %v3005 = vpop.f32.mrb[0].mxu0
    %v3006 = vadd.f32 0.0, %v3005
    %v3007 = vpop.f32.mrb[0].mxu0
    %v3008 = vadd.f32 0.0, %v3007
    %v3009 = vpop.f32.mrb[0].mxu0
    %v3010 = vadd.f32 0.0, %v3009
    %3011 = vmatprep.mubr.bf16.mxu0 0
    %3012 = vmatmul.mubr.bf16.gmra.mrb[0].mxu0 %v2864
    %v3013 = vpop.f32.mrb[0].mxu0
    %v3014 = vadd.f32 0.0, %v3013
    %v3015 = vpop.f32.mrb[0].mxu0
    %v3016 = vadd.f32 0.0, %v3015
    %v3017 = vpop.f32.mrb[0].mxu0
    %v3018 = vpop.f32.mrb[0].mxu0
    %3019 = vdwg.mxu0
    %v3020 = vadd.f32 %v2756, %v2913
    %v3021 = vadd.f32 %v2757, %v2915
    %v3022 = vadd.f32 %v2758, %v2984
    %v3023 = vadd.f32 %v2759, %v2986
    %v3024 = vadd.f32 %v2760, %v2917
    %v3025 = vadd.f32 %v2761, %v2919
    %v3026 = vadd.f32 %v2762, %v2988
    %v3027 = vadd.f32 %v2763, %v2990
    %v3028 = vadd.f32 %v2764, %v2923
    %v3029 = vadd.f32 %v2765, %v2925
    %v3030 = vadd.f32 %v2766, %v2994
    %v3031 = vadd.f32 %v2767, %v2996
    %v3032 = vadd.f32 %v2768, %v2927
    %v3033 = vadd.f32 %v2769, %v2929
    %v3034 = vadd.f32 %v2770, %v2998
    %v3035 = vadd.f32 %v2771, %v3000
    %v3036 = vadd.f32 %v2772, %v2933
    %v3037 = vadd.f32 %v2773, %v2935
    %v3038 = vadd.f32 %v2774, %v3004
    %v3039 = vadd.f32 %v2775, %v3006
    %v3040 = vadd.f32 %v2776, %v2937
    %v3041 = vadd.f32 %v2777, %v2939
    %v3042 = vadd.f32 %v2778, %v3008
    %v3043 = vadd.f32 %v2779, %v3010
    %v3044 = vadd.f32 %v2780, %v2943
    %v3045 = vadd.f32 %v2781, %v2945
    %v3046 = vadd.f32 %v2782, %v3014
    %v3047 = vadd.f32 %v2783, %v3016
    %s3048 = scalar_lea.vmem %s1, 6
    %v3049 = vld [vmem:[%s3048] ss:$8 sm:$0xf]
    %3050 = vrot.lane.b32.xlu0 %v1605, 80
    %v3051 = vpop.permute.xlu0 %3050
    %3052 = vrot.lane.b32.xlu0 %v1606, 80
    %v3053 = vpop.permute.xlu0 %3052
    %3054 = vrot.lane.b32.xlu0 %v1607, 80
    %v3055 = vpop.permute.xlu0 %3054
    %3056 = vrot.lane.b32.xlu0 %v1608, 80
    %v3057 = vpop.permute.xlu0 %3056
    %vm3058 = vcmp.lt.s32.totalorder %v81, 80
    %v3059 = vsel %vm3058, %v3055, %v3057
    %v3060 = vsel %vm3058, %v3053, %v3055
    %v3061 = vsel %vm3058, %v3051, %v3053
    %v3062 = vsel %vm3058, %v3057, %v3051
    %v3064 = vlaneseq
    %v3065 = vshrl.u32 %v3064, 7
    %v3066 = vsub.s32 0, %v3065
    %v3067 = vrot.slane %v3049, %v3066
    %v3068 = vlaneseq
    %v3069 = vshrl.u32 %v3068, 7
    %v3070 = vsub.s32 1, %v3069
    %v3071 = vrot.slane %v3049, %v3070
    %v3072 = vlaneseq
    %v3073 = vshrl.u32 %v3072, 7
    %v3074 = vsub.s32 2, %v3073
    %v3075 = vrot.slane %v3049, %v3074
    %v3076 = vlaneseq
    %v3077 = vshrl.u32 %v3076, 7
    %v3078 = vsub.s32 3, %v3077
    %v3079 = vrot.slane %v3049, %v3078
    %v3084 = vmul.f32 %v3067, %v3061
    %v3085 = vmul.f32 %v3071, %v3060
    %v3086 = vmul.f32 %v3075, %v3059
    %v3087 = vmul.f32 %v3079, %v3062
    %v3088 = vpack.c.bf16 %v3084, %v3084
    %v3089 = vpack.c.bf16 %v3085, %v3085
    %v3090 = vpack.c.bf16 %v3086, %v3086
    %v3091 = vpack.c.bf16 %v3087, %v3087
    %s3092 = scalar_lea.vmem %s5, 168
    %v3093 = vld [vmem:[%s3092] sm:$0xf]
    %v3094 = vld [vmem:[%s3092 + $0x4] sm:$0xf]
    %v3095 = vld [vmem:[%s3092 + $0x8] sm:$0xf]
    %v3096 = vld [vmem:[%s3092 + $0xc] sm:$0xf]
    %v3097 = vld [vmem:[%s3092 + $0x10] sm:$0xf]
    %v3098 = vld [vmem:[%s3092 + $0x14] sm:$0xf]
    %v3099 = vld [vmem:[%s3092 + $0x18] sm:$0xf]
    %v3107 = vunpack.c.l.b16 %v3093
    %v3108 = vunpack.c.l.b16 %v3094
    %v3109 = vunpack.c.l.b16 %v3095
    %v3110 = vunpack.c.l.b16 %v3096
    %v3111 = vunpack.c.l.b16 %v3097
    %v3112 = vunpack.c.l.b16 %v3098
    %v3113 = vunpack.c.l.b16 %v3099
    %v3114 = vpack.c.b16 %v3108, %v3107
    %v3115 = vpack.c.b16 %v3110, %v3109
    %v3116 = vpack.c.b16 %v3112, %v3111
    %v3117 = vpack.c.b16 %v3113, %v3113
    %v3119 = vsel %vm1729, %v3114, 0
    %v3122 = vsel %vm1729, %v3115, 0
    %v3125 = vsel %vm1729, %v3116, 0
    %v3128 = vsel %vm1729, %v3117, 0
    %v3131 = vsel %vm1594, %v3088, 0
    %v3134 = vsel %vm1594, %v3089, 0
    %v3137 = vsel %vm1594, %v3090, 0
    %v3140 = vsel %vm1594, %v3091, 0
    %3142 = vmatprep.subr.bf16.mxu0 %v3134
    %3143 = vmatpush1.bf16.msra.mxu0 %v3131
    %3144 = vmatprep.subr.bf16.mxu0 0
    %3145 = vmatpush1.bf16.msra.mxu0 0
    %3146 = vmatprep.subr.bf16.mxu0 0
    %3147 = vmatpush1.bf16.msra.mxu0 0
    %3148 = vmatprep.subr.bf16.mxu0 0
    %3149 = vmatpush1.bf16.msra.mxu0 0
    %3150 = vmatprep.subr.bf16.mxu0 0
    %3151 = vmatpush1.bf16.msra.mxu0 0
    %3152 = vmatprep.subr.bf16.mxu0 0
    %3153 = vmatpush1.bf16.msra.mxu0 0
    %3154 = vmatprep.subr.bf16.mxu0 0
    %3155 = vmatpush1.bf16.msra.mxu0 0
    %3156 = vmatprep.subr.bf16.mxu0 0
    %3157 = vmatpush1.bf16.msra.mxu0 0
    %3158 = vmatprep.subr.bf16.mxu0 0
    %3159 = vmatpush1.bf16.msra.mxu0 0
    %3160 = vmatprep.subr.bf16.mxu0 0
    %3161 = vmatpush1.bf16.msra.mxu0 0
    %3162 = vmatprep.subr.bf16.mxu0 0
    %3163 = vmatpush1.bf16.msra.mxu0 0
    %3164 = vmatprep.subr.bf16.mxu0 0
    %3165 = vmatpush1.bf16.msra.mxu0 0
    %3166 = vmatprep.subr.bf16.mxu0 0
    %3167 = vmatpush1.bf16.msra.mxu0 0
    %3168 = vmatprep.subr.bf16.mxu0 0
    %3169 = vmatpush1.bf16.msra.mxu0 0
    %3170 = vmatprep.subr.bf16.mxu0 0
    %3171 = vmatpush1.bf16.msra.mxu0 0
    %3172 = vmatprep.subr.bf16.mxu0 0
    %3173 = vmatpush1.bf16.msra.mxu0 0
    %3174 = vmatprep.mubr.bf16.mxu0 0
    %3175 = vmatmul.mubr.bf16.gmra.mrb[0].mxu0 %v3119
    %v3176 = vpop.f32.mrb[0].mxu0
    %v3177 = vadd.f32 0.0, %v3176
    %v3178 = vpop.f32.mrb[0].mxu0
    %v3179 = vadd.f32 0.0, %v3178
    %v3180 = vpop.f32.mrb[0].mxu0
    %v3181 = vadd.f32 0.0, %v3180
    %v3182 = vpop.f32.mrb[0].mxu0
    %v3183 = vadd.f32 0.0, %v3182
    %3184 = vmatprep.mubr.bf16.mxu0 0
    %3185 = vmatmul.mubr.bf16.gmra.mrb[0].mxu0 %v3122
    %v3186 = vpop.f32.mrb[0].mxu0
    %v3187 = vadd.f32 0.0, %v3186
    %v3188 = vpop.f32.mrb[0].mxu0
    %v3189 = vadd.f32 0.0, %v3188
    %v3190 = vpop.f32.mrb[0].mxu0
    %v3191 = vadd.f32 0.0, %v3190
    %v3192 = vpop.f32.mrb[0].mxu0
    %v3193 = vadd.f32 0.0, %v3192
    %3194 = vmatprep.mubr.bf16.mxu0 0
    %3195 = vmatmul.mubr.bf16.gmra.mrb[0].mxu0 %v3125
    %v3196 = vpop.f32.mrb[0].mxu0
    %v3197 = vadd.f32 0.0, %v3196
    %v3198 = vpop.f32.mrb[0].mxu0
    %v3199 = vadd.f32 0.0, %v3198
    %v3200 = vpop.f32.mrb[0].mxu0
    %v3201 = vadd.f32 0.0, %v3200
    %v3202 = vpop.f32.mrb[0].mxu0
    %v3203 = vadd.f32 0.0, %v3202
    %3204 = vmatprep.mubr.bf16.mxu0 0
    %3205 = vmatmul.mubr.bf16.gmra.mrb[0].mxu0 %v3128
    %v3206 = vpop.f32.mrb[0].mxu0
    %v3207 = vadd.f32 0.0, %v3206
    %v3208 = vpop.f32.mrb[0].mxu0
    %v3209 = vadd.f32 0.0, %v3208
    %v3210 = vpop.f32.mrb[0].mxu0
    %v3211 = vpop.f32.mrb[0].mxu0
    %3212 = vdwg.mxu0
    %3213 = vmatprep.subr.bf16.mxu0 %v3140
    %3214 = vmatpush1.bf16.msra.mxu0 %v3137
    %3215 = vmatprep.subr.bf16.mxu0 0
    %3216 = vmatpush1.bf16.msra.mxu0 0
    %3217 = vmatprep.subr.bf16.mxu0 0
    %3218 = vmatpush1.bf16.msra.mxu0 0
    %3219 = vmatprep.subr.bf16.mxu0 0
    %3220 = vmatpush1.bf16.msra.mxu0 0
    %3221 = vmatprep.subr.bf16.mxu0 0
    %3222 = vmatpush1.bf16.msra.mxu0 0
    %3223 = vmatprep.subr.bf16.mxu0 0
    %3224 = vmatpush1.bf16.msra.mxu0 0
    %3225 = vmatprep.subr.bf16.mxu0 0
    %3226 = vmatpush1.bf16.msra.mxu0 0
    %3227 = vmatprep.subr.bf16.mxu0 0
    %3228 = vmatpush1.bf16.msra.mxu0 0
    %3229 = vmatprep.subr.bf16.mxu0 0
    %3230 = vmatpush1.bf16.msra.mxu0 0
    %3231 = vmatprep.subr.bf16.mxu0 0
    %3232 = vmatpush1.bf16.msra.mxu0 0
    %3233 = vmatprep.subr.bf16.mxu0 0
    %3234 = vmatpush1.bf16.msra.mxu0 0
    %3235 = vmatprep.subr.bf16.mxu0 0
    %3236 = vmatpush1.bf16.msra.mxu0 0
    %3237 = vmatprep.subr.bf16.mxu0 0
    %3238 = vmatpush1.bf16.msra.mxu0 0
    %3239 = vmatprep.subr.bf16.mxu0 0
    %3240 = vmatpush1.bf16.msra.mxu0 0
    %3241 = vmatprep.subr.bf16.mxu0 0
    %3242 = vmatpush1.bf16.msra.mxu0 0
    %3243 = vmatprep.subr.bf16.mxu0 0
    %3244 = vmatpush1.bf16.msra.mxu0 0
    %3245 = vmatprep.mubr.bf16.mxu0 0
    %3246 = vmatmul.mubr.bf16.gmra.mrb[0].mxu0 %v3119
    %v3247 = vpop.f32.mrb[0].mxu0
    %v3248 = vadd.f32 0.0, %v3247
    %v3249 = vpop.f32.mrb[0].mxu0
    %v3250 = vadd.f32 0.0, %v3249
    %v3251 = vpop.f32.mrb[0].mxu0
    %v3252 = vadd.f32 0.0, %v3251
    %v3253 = vpop.f32.mrb[0].mxu0
    %v3254 = vadd.f32 0.0, %v3253
    %3255 = vmatprep.mubr.bf16.mxu0 0
    %3256 = vmatmul.mubr.bf16.gmra.mrb[0].mxu0 %v3122
    %v3257 = vpop.f32.mrb[0].mxu0
    %v3258 = vadd.f32 0.0, %v3257
    %v3259 = vpop.f32.mrb[0].mxu0
    %v3260 = vadd.f32 0.0, %v3259
    %v3261 = vpop.f32.mrb[0].mxu0
    %v3262 = vadd.f32 0.0, %v3261
    %v3263 = vpop.f32.mrb[0].mxu0
    %v3264 = vadd.f32 0.0, %v3263
    %3265 = vmatprep.mubr.bf16.mxu0 0
    %3266 = vmatmul.mubr.bf16.gmra.mrb[0].mxu0 %v3125
    %v3267 = vpop.f32.mrb[0].mxu0
    %v3268 = vadd.f32 0.0, %v3267
    %v3269 = vpop.f32.mrb[0].mxu0
    %v3270 = vadd.f32 0.0, %v3269
    %v3271 = vpop.f32.mrb[0].mxu0
    %v3272 = vadd.f32 0.0, %v3271
    %v3273 = vpop.f32.mrb[0].mxu0
    %v3274 = vadd.f32 0.0, %v3273
    %3275 = vmatprep.mubr.bf16.mxu0 0
    %3276 = vmatmul.mubr.bf16.gmra.mrb[0].mxu0 %v3128
    %v3277 = vpop.f32.mrb[0].mxu0
    %v3278 = vadd.f32 0.0, %v3277
    %v3279 = vpop.f32.mrb[0].mxu0
    %v3280 = vadd.f32 0.0, %v3279
    %v3281 = vpop.f32.mrb[0].mxu0
    %v3282 = vpop.f32.mrb[0].mxu0
    %3283 = vdwg.mxu0
    %v3284 = vadd.f32 %v3020, %v3177
    %v3285 = vadd.f32 %v3021, %v3179
    %v3286 = vadd.f32 %v3022, %v3248
    %v3287 = vadd.f32 %v3023, %v3250
    %v3288 = vadd.f32 %v3024, %v3181
    %v3289 = vadd.f32 %v3025, %v3183
    %v3290 = vadd.f32 %v3026, %v3252
    %v3291 = vadd.f32 %v3027, %v3254
    %v3292 = vadd.f32 %v3028, %v3187
    %v3293 = vadd.f32 %v3029, %v3189
    %v3294 = vadd.f32 %v3030, %v3258
    %v3295 = vadd.f32 %v3031, %v3260
    %v3296 = vadd.f32 %v3032, %v3191
    %v3297 = vadd.f32 %v3033, %v3193
    %v3298 = vadd.f32 %v3034, %v3262
    %v3299 = vadd.f32 %v3035, %v3264
    %v3300 = vadd.f32 %v3036, %v3197
    %v3301 = vadd.f32 %v3037, %v3199
    %v3302 = vadd.f32 %v3038, %v3268
    %v3303 = vadd.f32 %v3039, %v3270
    %v3304 = vadd.f32 %v3040, %v3201
    %v3305 = vadd.f32 %v3041, %v3203
    %v3306 = vadd.f32 %v3042, %v3272
    %v3307 = vadd.f32 %v3043, %v3274
    %v3308 = vadd.f32 %v3044, %v3207
    %v3309 = vadd.f32 %v3045, %v3209
    %v3310 = vadd.f32 %v3046, %v3278
    %v3311 = vadd.f32 %v3047, %v3280
    %v3312 = vld [vmem:[%s6] sm:$0xff]
    %3314 = vset.pattern.permute.xlu0 0
    %3315 = vperm.xlu0 %3314, %v3312
    %v3316 = vpop.permute.xlu0 %3315
    %v3318 = vadd.f32 %v3316, %v3296
    %v3319 = vadd.f32 %v3316, %v3297
    %v3320 = vadd.f32 %v3316, %v3298
    %v3321 = vadd.f32 %v3316, %v3299
    %v3322 = vld [vmem:[%s2] ss:$8 sm:$0xf]
    %3323 = vrot.lane.b32.xlu0 %v3284, 3
    %v3324 = vpop.permute.xlu0 %3323
    %3325 = vrot.lane.b32.xlu0 %v3285, 3
    %v3326 = vpop.permute.xlu0 %3325
    %3327 = vrot.lane.b32.xlu0 %v3286, 3
    %v3328 = vpop.permute.xlu0 %3327
    %3329 = vrot.lane.b32.xlu0 %v3287, 3
    %v3330 = vpop.permute.xlu0 %3329
    %vm3331 = vcmp.lt.s32.totalorder %v81, 3
    %v3332 = vsel %vm3331, %v3328, %v3330
    %v3333 = vsel %vm3331, %v3326, %v3328
    %v3334 = vsel %vm3331, %v3324, %v3326
    %v3335 = vsel %vm3331, %v3330, %v3324
    %v3337 = vlaneseq
    %v3338 = vshrl.u32 %v3337, 7
    %v3339 = vsub.s32 0, %v3338
    %v3340 = vrot.slane %v3322, %v3339
    %v3341 = vlaneseq
    %v3342 = vshrl.u32 %v3341, 7
    %v3343 = vsub.s32 1, %v3342
    %v3344 = vrot.slane %v3322, %v3343
    %v3345 = vlaneseq
    %v3346 = vshrl.u32 %v3345, 7
    %v3347 = vsub.s32 2, %v3346
    %v3348 = vrot.slane %v3322, %v3347
    %v3349 = vlaneseq
    %v3350 = vshrl.u32 %v3349, 7
    %v3351 = vsub.s32 3, %v3350
    %v3352 = vrot.slane %v3322, %v3351
    %v3357 = vmul.f32 %v3340, %v3335
    %v3358 = vmul.f32 %v3344, %v3334
    %v3359 = vmul.f32 %v3348, %v3333
    %v3360 = vmul.f32 %v3352, %v3332
    %v3361 = vadd.f32 %v3318, %v3357
    %v3362 = vadd.f32 %v3319, %v3358
    %v3363 = vadd.f32 %v3320, %v3359
    %v3364 = vadd.f32 %v3321, %v3360
    %s3365 = scalar_lea.vmem %s2, 1
    %v3366 = vld [vmem:[%s3365] ss:$8 sm:$0xf]
    %3367 = vrot.lane.b32.xlu0 %v3288, 2
    %v3368 = vpop.permute.xlu0 %3367
    %3369 = vrot.lane.b32.xlu0 %v3289, 2
    %v3370 = vpop.permute.xlu0 %3369
    %3371 = vrot.lane.b32.xlu0 %v3290, 2
    %v3372 = vpop.permute.xlu0 %3371
    %3373 = vrot.lane.b32.xlu0 %v3291, 2
    %v3374 = vpop.permute.xlu0 %3373
    %vm3375 = vcmp.lt.s32.totalorder %v81, 2
    %v3376 = vsel %vm3375, %v3372, %v3374
    %v3377 = vsel %vm3375, %v3370, %v3372
    %v3378 = vsel %vm3375, %v3368, %v3370
    %v3379 = vsel %vm3375, %v3374, %v3368
    %v3381 = vlaneseq
    %v3382 = vshrl.u32 %v3381, 7
    %v3383 = vsub.s32 0, %v3382
    %v3384 = vrot.slane %v3366, %v3383
    %v3385 = vlaneseq
    %v3386 = vshrl.u32 %v3385, 7
    %v3387 = vsub.s32 1, %v3386
    %v3388 = vrot.slane %v3366, %v3387
    %v3389 = vlaneseq
    %v3390 = vshrl.u32 %v3389, 7
    %v3391 = vsub.s32 2, %v3390
    %v3392 = vrot.slane %v3366, %v3391
    %v3393 = vlaneseq
    %v3394 = vshrl.u32 %v3393, 7
    %v3395 = vsub.s32 3, %v3394
    %v3396 = vrot.slane %v3366, %v3395
    %v3401 = vmul.f32 %v3384, %v3379
    %v3402 = vmul.f32 %v3388, %v3378
    %v3403 = vmul.f32 %v3392, %v3377
    %v3404 = vmul.f32 %v3396, %v3376
    %v3405 = vadd.f32 %v3361, %v3401
    %v3406 = vadd.f32 %v3362, %v3402
    %v3407 = vadd.f32 %v3363, %v3403
    %v3408 = vadd.f32 %v3364, %v3404
    %3409 = vrot.lane.b32.xlu0 %v3292, 1
    %v3410 = vpop.permute.xlu0 %3409
    %3411 = vrot.lane.b32.xlu0 %v3293, 1
    %v3412 = vpop.permute.xlu0 %3411
    %3413 = vrot.lane.b32.xlu0 %v3294, 1
    %v3414 = vpop.permute.xlu0 %3413
    %3415 = vrot.lane.b32.xlu0 %v3295, 1
    %v3416 = vpop.permute.xlu0 %3415
    %v3417 = vsel %vm903, %v3414, %v3416
    %v3418 = vsel %vm903, %v3412, %v3414
    %v3419 = vsel %vm903, %v3410, %v3412
    %v3420 = vsel %vm903, %v3416, %v3410
    %v3421 = vmul.f32 %v916, %v3420
    %v3422 = vmul.f32 %v920, %v3419
    %v3423 = vmul.f32 %v924, %v3418
    %v3424 = vmul.f32 %v928, %v3417
    %v3425 = vadd.f32 %v3405, %v3421
    %v3426 = vadd.f32 %v3406, %v3422
    %v3427 = vadd.f32 %v3407, %v3423
    %v3428 = vadd.f32 %v3408, %v3424
    %3429 = vrot.lane.b32.xlu0 %v3300, 127
    %v3430 = vpop.permute.xlu0 %3429
    %3431 = vrot.lane.b32.xlu0 %v3301, 127
    %v3432 = vpop.permute.xlu0 %3431
    %3433 = vrot.lane.b32.xlu0 %v3302, 127
    %v3434 = vpop.permute.xlu0 %3433
    %3435 = vrot.lane.b32.xlu0 %v3303, 127
    %v3436 = vpop.permute.xlu0 %3435
    %v3437 = vsel %vm967, %v3434, %v3436
    %v3438 = vsel %vm967, %v3432, %v3434
    %v3439 = vsel %vm967, %v3430, %v3432
    %v3440 = vsel %vm967, %v3436, %v3430
    %v3441 = vmul.f32 %v980, %v3439
    %v3442 = vmul.f32 %v984, %v3438
    %v3443 = vmul.f32 %v988, %v3437
    %v3444 = vmul.f32 %v992, %v3440
    %v3445 = vadd.f32 %v3425, %v3441
    %v3446 = vadd.f32 %v3426, %v3442
    %v3447 = vadd.f32 %v3427, %v3443
    %v3448 = vadd.f32 %v3428, %v3444
    %s3449 = scalar_lea.vmem %s2, 5
    %v3450 = vld [vmem:[%s3449] ss:$8 sm:$0xf]
    %3451 = vrot.lane.b32.xlu0 %v3304, 126
    %v3452 = vpop.permute.xlu0 %3451
    %3453 = vrot.lane.b32.xlu0 %v3305, 126
    %v3454 = vpop.permute.xlu0 %3453
    %3455 = vrot.lane.b32.xlu0 %v3306, 126
    %v3456 = vpop.permute.xlu0 %3455
    %3457 = vrot.lane.b32.xlu0 %v3307, 126
    %v3458 = vpop.permute.xlu0 %3457
    %vm3459 = vcmp.lt.s32.totalorder %v81, 126
    %v3460 = vsel %vm3459, %v3456, %v3458
    %v3461 = vsel %vm3459, %v3454, %v3456
    %v3462 = vsel %vm3459, %v3452, %v3454
    %v3463 = vsel %vm3459, %v3458, %v3452
    %v3465 = vlaneseq
    %v3466 = vshrl.u32 %v3465, 7
    %v3467 = vsub.s32 0, %v3466
    %v3468 = vrot.slane %v3450, %v3467
    %v3469 = vlaneseq
    %v3470 = vshrl.u32 %v3469, 7
    %v3471 = vsub.s32 1, %v3470
    %v3472 = vrot.slane %v3450, %v3471
    %v3473 = vlaneseq
    %v3474 = vshrl.u32 %v3473, 7
    %v3475 = vsub.s32 2, %v3474
    %v3476 = vrot.slane %v3450, %v3475
    %v3477 = vlaneseq
    %v3478 = vshrl.u32 %v3477, 7
    %v3479 = vsub.s32 3, %v3478
    %v3480 = vrot.slane %v3450, %v3479
    %v3485 = vmul.f32 %v3468, %v3462
    %v3486 = vmul.f32 %v3472, %v3461
    %v3487 = vmul.f32 %v3476, %v3460
    %v3488 = vmul.f32 %v3480, %v3463
    %v3489 = vadd.f32 %v3445, %v3485
    %v3490 = vadd.f32 %v3446, %v3486
    %v3491 = vadd.f32 %v3447, %v3487
    %v3492 = vadd.f32 %v3448, %v3488
    %s3493 = scalar_lea.vmem %s2, 6
    %v3494 = vld [vmem:[%s3493] ss:$8 sm:$0xf]
    %3495 = vrot.lane.b32.xlu0 %v3308, 125
    %v3496 = vpop.permute.xlu0 %3495
    %3497 = vrot.lane.b32.xlu0 %v3309, 125
    %v3498 = vpop.permute.xlu0 %3497
    %3499 = vrot.lane.b32.xlu0 %v3310, 125
    %v3500 = vpop.permute.xlu0 %3499
    %3501 = vrot.lane.b32.xlu0 %v3311, 125
    %v3502 = vpop.permute.xlu0 %3501
    %vm3503 = vcmp.lt.s32.totalorder %v81, 125
    %v3504 = vsel %vm3503, %v3500, %v3502
    %v3505 = vsel %vm3503, %v3498, %v3500
    %v3506 = vsel %vm3503, %v3496, %v3498
    %v3507 = vsel %vm3503, %v3502, %v3496
    %v3509 = vlaneseq
    %v3510 = vshrl.u32 %v3509, 7
    %v3511 = vsub.s32 0, %v3510
    %v3512 = vrot.slane %v3494, %v3511
    %v3513 = vlaneseq
    %v3514 = vshrl.u32 %v3513, 7
    %v3515 = vsub.s32 1, %v3514
    %v3516 = vrot.slane %v3494, %v3515
    %v3517 = vlaneseq
    %v3518 = vshrl.u32 %v3517, 7
    %v3519 = vsub.s32 2, %v3518
    %v3520 = vrot.slane %v3494, %v3519
    %v3521 = vlaneseq
    %v3522 = vshrl.u32 %v3521, 7
    %v3523 = vsub.s32 3, %v3522
    %v3524 = vrot.slane %v3494, %v3523
    %v3529 = vmul.f32 %v3512, %v3506
    %v3530 = vmul.f32 %v3516, %v3505
    %v3531 = vmul.f32 %v3520, %v3504
    %v3532 = vmul.f32 %v3524, %v3507
    %v3533 = vadd.f32 %v3489, %v3529
    %v3534 = vadd.f32 %v3490, %v3530
    %v3535 = vadd.f32 %v3491, %v3531
    %v3536 = vadd.f32 %v3492, %v3532
    %v3537 = vsub.f32 0.0, %v3533
    %v3538 = vsub.f32 0.0, %v3534
    %v3539 = vsub.f32 0.0, %v3535
    %v3540 = vsub.f32 0.0, %v3536
    %v3541 = vmul.f32 %v3537, 1.442695
    %v3542 = vpow.pop %v3541
    %v3543 = vmul.f32 %v3538, 1.442695
    %v3544 = vpow.pop %v3543
    %v3545 = vmul.f32 %v3539, 1.442695
    %v3546 = vpow.pop %v3545
    %v3547 = vmul.f32 %v3540, 1.442695
    %v3548 = vpow.pop %v3547
    %v3549 = vadd.f32 %v3542, 1.0
    %v3550 = vadd.f32 %v3544, 1.0
    %v3551 = vadd.f32 %v3546, 1.0
    %v3552 = vadd.f32 %v3548, 1.0
    %v3553 = vrcp.pop %v3549
    %v3554 = vrcp.pop %v3550
    %v3555 = vrcp.pop %v3551
    %v3556 = vrcp.pop %v3552
    %v3557 = vlaneseq
    %v3558 = vshrl.u32 %v3557, 7
    %v3559 = vsub.s32 0, %v3558
    %v3560 = vrot.slane %v3553, %v3559
    %v3561 = vlaneseq
    %v3562 = vshrl.u32 %v3561, 7
    %v3563 = vsub.s32 0, %v3562
    %v3564 = vrot.slane %v3554, %v3563
    %v3565 = vlaneseq
    %v3566 = vshrl.u32 %v3565, 7
    %v3567 = vsub.s32 0, %v3566
    %v3568 = vrot.slane %v3555, %v3567
    %v3569 = vlaneseq
    %v3570 = vshrl.u32 %v3569, 7
    %v3571 = vsub.s32 0, %v3570
    %v3572 = vrot.slane %v3556, %v3571
    %v3573 = vmul.f32 %v1009, %v3560
    %v3574 = vmul.f32 %v1010, %v3564
    %v3575 = vmul.f32 %v1011, %v3568
    %v3576 = vmul.f32 %v1012, %v3572
    %v3577 = vlaneseq
    %v3578 = vshrl.u32 %v3577, 7
    %v3579 = vsub.s32 1, %v3578
    %v3580 = vrot.slane %v3553, %v3579
    %v3581 = vlaneseq
    %v3582 = vshrl.u32 %v3581, 7
    %v3583 = vsub.s32 1, %v3582
    %v3584 = vrot.slane %v3554, %v3583
    %v3585 = vlaneseq
    %v3586 = vshrl.u32 %v3585, 7
    %v3587 = vsub.s32 1, %v3586
    %v3588 = vrot.slane %v3555, %v3587
    %v3589 = vlaneseq
    %v3590 = vshrl.u32 %v3589, 7
    %v3591 = vsub.s32 1, %v3590
    %v3592 = vrot.slane %v3556, %v3591
    %v3593 = vmul.f32 %v1214, %v3580
    %v3594 = vmul.f32 %v1215, %v3584
    %v3595 = vmul.f32 %v1216, %v3588
    %v3596 = vmul.f32 %v1217, %v3592
    %v3597 = vadd.f32 %v3573, %v3593
    %v3598 = vadd.f32 %v3574, %v3594
    %v3599 = vadd.f32 %v3575, %v3595
    %v3600 = vadd.f32 %v3576, %v3596
    %v3601 = vlaneseq
    %v3602 = vshrl.u32 %v3601, 7
    %v3603 = vsub.s32 2, %v3602
    %v3604 = vrot.slane %v3553, %v3603
    %v3605 = vlaneseq
    %v3606 = vshrl.u32 %v3605, 7
    %v3607 = vsub.s32 2, %v3606
    %v3608 = vrot.slane %v3554, %v3607
    %v3609 = vlaneseq
    %v3610 = vshrl.u32 %v3609, 7
    %v3611 = vsub.s32 2, %v3610
    %v3612 = vrot.slane %v3555, %v3611
    %v3613 = vlaneseq
    %v3614 = vshrl.u32 %v3613, 7
    %v3615 = vsub.s32 2, %v3614
    %v3616 = vrot.slane %v3556, %v3615
    %v3617 = vmul.f32 %v1419, %v3604
    %v3618 = vmul.f32 %v1420, %v3608
    %v3619 = vmul.f32 %v1421, %v3612
    %v3620 = vmul.f32 %v1422, %v3616
    %v3621 = vadd.f32 %v3597, %v3617
    %v3622 = vadd.f32 %v3598, %v3618
    %v3623 = vadd.f32 %v3599, %v3619
    %v3624 = vadd.f32 %v3600, %v3620
    %v3625 = vsub.f32 0.0, %v1005
    %v3626 = vsub.f32 0.0, %v1006
    %v3627 = vsub.f32 0.0, %v1007
    %v3628 = vsub.f32 0.0, %v1008
    %v3629 = vsub.f32 0.0, %v3621
    %v3630 = vsub.f32 0.0, %v3622
    %v3631 = vsub.f32 0.0, %v3623
    %v3632 = vsub.f32 0.0, %v3624
    %v3633 = vmul.f32 %v3625, 1.442695
    %v3634 = vpow.pop %v3633
    %v3635 = vmul.f32 %v3626, 1.442695
    %v3636 = vpow.pop %v3635
    %v3637 = vmul.f32 %v3627, 1.442695
    %v3638 = vpow.pop %v3637
    %v3639 = vmul.f32 %v3628, 1.442695
    %v3640 = vpow.pop %v3639
    %v3641 = vmul.f32 %v3629, 1.442695
    %v3642 = vpow.pop %v3641
    %v3643 = vmul.f32 %v3630, 1.442695
    %v3644 = vpow.pop %v3643
    %v3645 = vmul.f32 %v3631, 1.442695
    %v3646 = vpow.pop %v3645
    %v3647 = vmul.f32 %v3632, 1.442695
    %v3648 = vpow.pop %v3647
    %v3649 = vadd.f32 %v3634, 1.0
    %v3650 = vadd.f32 %v3636, 1.0
    %v3651 = vadd.f32 %v3638, 1.0
    %v3652 = vadd.f32 %v3640, 1.0
    %v3653 = vadd.f32 %v3642, 1.0
    %v3654 = vadd.f32 %v3644, 1.0
    %v3655 = vadd.f32 %v3646, 1.0
    %v3656 = vadd.f32 %v3648, 1.0
    %v3657 = vrcp.pop %v3649
    %v3658 = vrcp.pop %v3650
    %v3659 = vrcp.pop %v3651
    %v3660 = vrcp.pop %v3652
    %v3661 = vrcp.pop %v3653
    %v3662 = vrcp.pop %v3654
    %v3663 = vrcp.pop %v3655
    %v3664 = vrcp.pop %v3656
    %v3665 = vmul.f32 %v1005, %v3657
    %v3666 = vmul.f32 %v1006, %v3658
    %v3667 = vmul.f32 %v1007, %v3659
    %v3668 = vmul.f32 %v1008, %v3660
    %v3669 = vmul.f32 %v3621, %v3661
    %v3670 = vmul.f32 %v3622, %v3662
    %v3671 = vmul.f32 %v3623, %v3663
    %v3672 = vmul.f32 %v3624, %v3664
    %v3673 = vmul.f32 %v877, %v3665
    %v3674 = vmul.f32 %v878, %v3666
    %v3675 = vmul.f32 %v879, %v3667
    %v3676 = vmul.f32 %v880, %v3668
    %v3677 = vmul.f32 %v881, %v3669
    %v3678 = vmul.f32 %v882, %v3670
    %v3679 = vmul.f32 %v883, %v3671
    %v3680 = vmul.f32 %v884, %v3672
    %v3681 = vld [vmem:[%s11] sm:$0xf]
    %v3682 = vld [vmem:[%s11 + $0x4] sm:$0xf]
    %v3683 = vpack.c.bf16 %v3677, %v3673
    %v3684 = vpack.c.bf16 %v3678, %v3674
    %v3685 = vpack.c.bf16 %v3679, %v3675
    %v3686 = vpack.c.bf16 %v3680, %v3676
    %v3689 = vunpack.c.l.b16 %v3681
    %v3690 = vunpack.c.l.b16 %v3682
    %v3691 = vpack.c.b16 %v3690, %v3689
    %v3693 = vsel %vm152, %v3691, 0
    %3695 = vmatprep.subr.bf16.mxu0 %v3684
    %3696 = vmatpush1.bf16.msra.mxu0 %v3683
    %3697 = vmatprep.subr.bf16.mxu0 0
    %3698 = vmatpush1.bf16.msra.mxu0 0
    %3699 = vmatprep.subr.bf16.mxu0 0
    %3700 = vmatpush1.bf16.msra.mxu0 0
    %3701 = vmatprep.subr.bf16.mxu0 0
    %3702 = vmatpush1.bf16.msra.mxu0 0
    %3703 = vmatprep.subr.bf16.mxu0 0
    %3704 = vmatpush1.bf16.msra.mxu0 0
    %3705 = vmatprep.subr.bf16.mxu0 0
    %3706 = vmatpush1.bf16.msra.mxu0 0
    %3707 = vmatprep.subr.bf16.mxu0 0
    %3708 = vmatpush1.bf16.msra.mxu0 0
    %3709 = vmatprep.subr.bf16.mxu0 0
    %3710 = vmatpush1.bf16.msra.mxu0 0
    %3711 = vmatprep.subr.bf16.mxu0 0
    %3712 = vmatpush1.bf16.msra.mxu0 0
    %3713 = vmatprep.subr.bf16.mxu0 0
    %3714 = vmatpush1.bf16.msra.mxu0 0
    %3715 = vmatprep.subr.bf16.mxu0 0
    %3716 = vmatpush1.bf16.msra.mxu0 0
    %3717 = vmatprep.subr.bf16.mxu0 0
    %3718 = vmatpush1.bf16.msra.mxu0 0
    %3719 = vmatprep.subr.bf16.mxu0 0
    %3720 = vmatpush1.bf16.msra.mxu0 0
    %3721 = vmatprep.subr.bf16.mxu0 0
    %3722 = vmatpush1.bf16.msra.mxu0 0
    %3723 = vmatprep.subr.bf16.mxu0 0
    %3724 = vmatpush1.bf16.msra.mxu0 0
    %3725 = vmatprep.subr.bf16.mxu0 0
    %3726 = vmatpush1.bf16.msra.mxu0 0
    %3727 = vmatprep.mubr.bf16.mxu0 0
    %3728 = vmatmul.mubr.bf16.gmra.mrb[0].mxu0 %v3693
    %v3729 = vpop.f32.mrb[0].mxu0
    %v3730 = vadd.f32 0.0, %v3729
    %v3731 = vpop.f32.mrb[0].mxu0
    %v3732 = vadd.f32 0.0, %v3731
    %v3733 = vpop.f32.mrb[0].mxu0
    %v3734 = vadd.f32 0.0, %v3733
    %v3735 = vpop.f32.mrb[0].mxu0
    %v3736 = vadd.f32 0.0, %v3735
    %3737 = vdwg.mxu0
    %3738 = vmatprep.subr.bf16.mxu0 %v3686
    %3739 = vmatpush1.bf16.msra.mxu0 %v3685
    %3740 = vmatprep.subr.bf16.mxu0 0
    %3741 = vmatpush1.bf16.msra.mxu0 0
    %3742 = vmatprep.subr.bf16.mxu0 0
    %3743 = vmatpush1.bf16.msra.mxu0 0
    %3744 = vmatprep.subr.bf16.mxu0 0
    %3745 = vmatpush1.bf16.msra.mxu0 0
    %3746 = vmatprep.subr.bf16.mxu0 0
    %3747 = vmatpush1.bf16.msra.mxu0 0
    %3748 = vmatprep.subr.bf16.mxu0 0
    %3749 = vmatpush1.bf16.msra.mxu0 0
    %3750 = vmatprep.subr.bf16.mxu0 0
    %3751 = vmatpush1.bf16.msra.mxu0 0
    %3752 = vmatprep.subr.bf16.mxu0 0
    %3753 = vmatpush1.bf16.msra.mxu0 0
    %3754 = vmatprep.subr.bf16.mxu0 0
    %3755 = vmatpush1.bf16.msra.mxu0 0
    %3756 = vmatprep.subr.bf16.mxu0 0
    %3757 = vmatpush1.bf16.msra.mxu0 0
    %3758 = vmatprep.subr.bf16.mxu0 0
    %3759 = vmatpush1.bf16.msra.mxu0 0
    %3760 = vmatprep.subr.bf16.mxu0 0
    %3761 = vmatpush1.bf16.msra.mxu0 0
    %3762 = vmatprep.subr.bf16.mxu0 0
    %3763 = vmatpush1.bf16.msra.mxu0 0
    %3764 = vmatprep.subr.bf16.mxu0 0
    %3765 = vmatpush1.bf16.msra.mxu0 0
    %3766 = vmatprep.subr.bf16.mxu0 0
    %3767 = vmatpush1.bf16.msra.mxu0 0
    %3768 = vmatprep.subr.bf16.mxu0 0
    %3769 = vmatpush1.bf16.msra.mxu0 0
    %3770 = vmatprep.mubr.bf16.mxu0 0
    %3771 = vmatmul.mubr.bf16.gmra.mrb[0].mxu0 %v3693
    %v3772 = vpop.f32.mrb[0].mxu0
    %v3773 = vadd.f32 0.0, %v3772
    %v3774 = vpop.f32.mrb[0].mxu0
    %v3775 = vadd.f32 0.0, %v3774
    %v3776 = vpop.f32.mrb[0].mxu0
    %v3777 = vadd.f32 0.0, %v3776
    %v3778 = vpop.f32.mrb[0].mxu0
    %v3779 = vadd.f32 0.0, %v3778
    %3780 = vdwg.mxu0
    %v3781 = vadd.f32 %v46, %v3730
    %v3782 = vadd.f32 %v47, %v3732
    %v3783 = vadd.f32 %v48, %v3773
    %v3784 = vadd.f32 %v49, %v3775
    %v3785 = vadd.f32 %v50, %v3734
    %v3786 = vadd.f32 %v51, %v3736
    %v3787 = vadd.f32 %v52, %v3777
    %v3788 = vadd.f32 %v53, %v3779
    %v3789 = vld [vmem:[%s12] sm:$0xff]
    %v3790 = vld [vmem:[%s12 + $0x8] sm:$0xff]
    %3792 = vset.pattern.permute.xlu0 0
    %3793 = vperm.xlu0 %3792, %v3789
    %v3794 = vpop.permute.xlu0 %3793
    %3797 = vset.pattern.permute.xlu0 0
    %3798 = vperm.xlu0 %3797, %v3790
    %v3799 = vpop.permute.xlu0 %3798
    %v3801 = vadd.f32 %v3781, %v3794
    %v3802 = vadd.f32 %v3782, %v3794
    %v3803 = vadd.f32 %v3783, %v3794
    %v3804 = vadd.f32 %v3784, %v3794
    %v3805 = vadd.f32 %v3785, %v3799
    %v3806 = vadd.f32 %v3786, %v3799
    %v3807 = vadd.f32 %v3787, %v3799
    %v3808 = vadd.f32 %v3788, %v3799
    %3809 = vst [vmem:[#allocation2] sm:$0xff] %v3801
    %3810 = vst [vmem:[#allocation2 + $0x8] sm:$0xff] %v3802
    %3811 = vst [vmem:[#allocation2 + $0x10] sm:$0xff] %v3803
    %3812 = vst [vmem:[#allocation2 + $0x18] sm:$0xff] %v3804
    %3813 = vst [vmem:[#allocation2 + $0x20] sm:$0xff] %v3805
    %3814 = vst [vmem:[#allocation2 + $0x28] sm:$0xff] %v3806
    %3815 = vst [vmem:[#allocation2 + $0x30] sm:$0xff] %v3807
    %3816 = vst [vmem:[#allocation2 + $0x38] sm:$0xff] %v3808
    // Predicated region
    $region54: #{tpu_custom_call.1} parent=1 // pred_check
      _
    $region55: #{tpu_custom_call.1} parent=1 // pred_check_branch
      %3818 = sbr.rel (0) target = $region57
    $region56: #{tpu_custom_call.1} parent=1 // pred_region
      %s3820 = ssub.s32 1024, 1024
      %3821 = vsyncadd [#allocation3], %s3820
      %s3822 = sshll.u32 [#allocation2], 4
      %s3823 = int_to_ptr.vmem [resolvable:$true] %s3822
      %3828 = dma.vmem_to_hbm [thread:$0]  %s3823, 1024, %s13, [#allocation3], 512, 512, 32
    $region57: #{tpu_custom_call.1} parent=1 // pred_fallthru
      _
    // Predicated region
    $region58: #{tpu_custom_call.1} parent=1 // pred_check
      _
    $region59: #{tpu_custom_call.1} parent=1 // pred_check_branch
      %3830 = sbr.rel (0) target = $region61
    $region60: #{tpu_custom_call.1} parent=1 // pred_region
      %3831 = dma.done [#allocation3], 1024
    $region61: #{tpu_custom_call.1} parent=1 // pred_fallthru
      _
    %3832 = vsyncpa [#allocation3], 1

</llo_original>
